<compile_context>
chip_gen: v7x
topology: tpu7x:2x2x1
jax: 0.10.0
libtpu: 0.0.40
codegen_flags: <defaults>
</compile_context>

<pallas_src>
import numpy as np
import jax
import jax.numpy as jnp
from jax import lax
from jax.experimental import pallas as pl
from jax.experimental.pallas import tpu as pltpu


# ----------------------------------------------------------------------------
# Static layout bookkeeping (pure python/numpy, trace-time constants)
# ----------------------------------------------------------------------------

def _sigma(n):
    """Pixel order of an n x n grid: the four parity classes (h%2, w%2) are contiguous
    blocks, each ordered by _sigma(n//2) of the quotient pixel.  With this order the
    2x2/stride-2 space-to-depth between conv layers is a static row-block -> column-block
    copy inside the kernel (no gathers)."""
    if n == 1:
        return [(0, 0)]
    sub = _sigma(n // 2)
    out = []
    for a in (0, 1):
        for b in (0, 1):
            out.extend((2 * qh + a, 2 * qw + b) for (qh, qw) in sub)
    return out


_PERM16 = np.array([h * 16 + w for (h, w) in _sigma(16)], dtype=np.int32)   # (256,)
_IDX8 = np.array([h * 8 + w for (h, w) in _sigma(8)], dtype=np.int32)       # (64,)
_OUT_PAD = 128   # lane-padded width of the (mu | logvar) output row


# ----------------------------------------------------------------------------
# Pallas kernel: whole encoder for one sample per grid step
# ----------------------------------------------------------------------------

def _encoder_kernel(p1_ref, w1_ref, s1_ref, w2_ref, s2_ref, w3_ref, s3_ref,
                    w4_ref, s4_ref, wfc_ref, msk_ref, sel_ref, bfc_ref, out_ref):
    def conv(x_bf16, w_ref, s_ref):
        y = jnp.dot(x_bf16, w_ref[...], preferred_element_type=jnp.float32)
        y = y + s_ref[...]                      # conv bias + BN shift (scale folded in W)
        y = jnp.maximum(y, 0.2 * y)             # LeakyReLU(0.2)
        return y.astype(jnp.bfloat16)

    # conv1: 8 sibling conv1 pixels packed along K via a block-diagonal weight.
    # Rows are (a2-block major, sigma16(r) within); each output row is a packed
    # "double conv2 patch" (the two b2 siblings of one conv3-quotient pixel).
    p2 = conv(p1_ref[0], w1_ref, s1_ref)                                    # (512, 256)

    # conv2: 2 conv2 pixels per row (block-diagonal weight with 2 copies of w2).
    c2 = conv(p2, w2_ref, s2_ref)                                           # (512, 64)

    # space-to-depth: the two a2 row-blocks become column blocks of the conv3 patches.
    p3 = jnp.concatenate([c2[0:256, :], c2[256:512, :]], axis=1)            # (256, 128)
    c3 = conv(p3, w3_ref, s3_ref)                                           # (256, 64)

    # sigma16 -> sigma8: four parity row-blocks become the conv4 patch column blocks.
    p4 = jnp.concatenate([c3[64 * j:64 * (j + 1), :] for j in range(4)], axis=1)  # (64, 256)
    o4 = conv(p4, w4_ref, s4_ref)                                           # (64, 64)

    # fc_mu / fc_var (fused, no reshape of the NCHW flatten):
    # regroup the 64 conv4 pixels into an (8, 512) slab (8 row-groups -> lane blocks),
    # one bf16 dot against the per-row-block fc weight, extract the block diagonal with
    # a precomputed mask, row-sum FIRST, then a tiny bf16 selector dot.
    b8 = jnp.concatenate([o4[8 * m:8 * (m + 1), :] for m in range(8)], axis=1)  # (8, 512)
    g8 = jnp.dot(b8, wfc_ref[...], preferred_element_type=jnp.float32)      # (8, 8*2L)
    u = jnp.sum(g8 * msk_ref[...], axis=0, keepdims=True).astype(jnp.bfloat16)  # (1, 8*2L)
    res = jnp.dot(u, sel_ref[...], preferred_element_type=jnp.float32) + bfc_ref[...]
    out_ref[0] = res.astype(out_ref.dtype)                                  # (1, 128)


def _const_spec(a):
    zeros = (0,) * a.ndim
    return pl.BlockSpec(a.shape, lambda i, z=zeros: z)


def _encoder_pallas(p1, consts):
    n, rows, kp = p1.shape
    in_specs = [pl.BlockSpec((1, rows, kp), lambda i: (i, 0, 0))]
    in_specs += [_const_spec(a) for a in consts]
    return pl.pallas_call(
        _encoder_kernel,
        out_shape=jax.ShapeDtypeStruct((n, 1, _OUT_PAD), jnp.float32),
        grid=(n,),
        in_specs=in_specs,
        out_specs=pl.BlockSpec((1, 1, _OUT_PAD), lambda i: (i, 0, 0)),
        compiler_params=pltpu.CompilerParams(
            dimension_semantics=("parallel",),
            vmem_limit_bytes=16 * 1024 * 1024,
        ),
    )(p1, *consts)


# ----------------------------------------------------------------------------
# Parameter folding / layout plumbing (trace time)
# ----------------------------------------------------------------------------

def _fold_conv(p, eps=1e-5):
    """Conv2d(k=2,s=2) + eval-mode BN -> (f32 matmul weight with BN scale folded, f32 shift).
    Weight rows are ordered (kh, kw, ci)."""
    w, b = p["w"], p["b"]
    cout, cin = w.shape[0], w.shape[1]
    wm = jnp.transpose(w, (2, 3, 1, 0)).reshape(4 * cin, cout)
    scale = p["gamma"] / jnp.sqrt(p["var"] + eps)
    shift = p["beta"] + (b - p["mean"]) * scale
    return wm * scale[None, :], shift.reshape(1, cout).astype(jnp.float32)


def _prepare_constants(params):
    (w1m, s1), (w2m, s2), (w3m, s3), (w4m, s4) = [_fold_conv(p) for p in params["convs"]]
    cin = params["convs"][0]["w"].shape[1]

    # conv1: 8 copies of w1 on the block diagonal; K padded to a lane-dense 128 multiple.
    k1 = 32 * cin
    kp = ((max(k1, 128) + 127) // 128) * 128
    w1bd = jnp.kron(jnp.eye(8, dtype=w1m.dtype), w1m)                 # (32*cin, 256)
    w1bd = jnp.pad(w1bd, ((0, kp - k1), (0, 0))).astype(jnp.bfloat16)
    s1t = jnp.tile(s1, (1, 8))                                        # (1, 256)

    # conv2: 2 copies of w2 on the block diagonal.
    w2bd = jnp.kron(jnp.eye(2, dtype=w2m.dtype), w2m).astype(jnp.bfloat16)   # (256, 64)
    s2t = jnp.tile(s2, (1, 2))                                        # (1, 64)

    w3b = w3m.astype(jnp.bfloat16)                                    # (128, 64)
    w4b = w4m.astype(jnp.bfloat16)                                    # (256, 64)

    # fc_mu|fc_var reordered to the kernel's (8, 512) conv4 slab layout.
    latent = params["fc_mu_w"].shape[0]
    two_l = 2 * latent
    assert two_l <= _OUT_PAD, "latent_dim too large for the fixed output padding"
    wcat = jnp.concatenate([params["fc_mu_w"], params["fc_var_w"]], axis=0)   # (2L, 4096)
    wc3 = wcat.reshape(two_l, 64, 64)                                 # [l, c, hw]
    wp = wc3[:, :, jnp.asarray(_IDX8)]                                # [l, c, p] sigma8 pixels
    wp = wp.reshape(two_l, 64, 8, 8)                                  # [l, c, m, rr]
    wfc = jnp.transpose(wp, (2, 1, 3, 0)).reshape(8 * 64, 8 * two_l)  # [(m,c), (rr,l)]
    wfc = wfc.astype(jnp.bfloat16)                                    # (512, 8*2L)

    msk = np.kron(np.eye(8, dtype=np.float32), np.ones((1, two_l), np.float32))  # (8, 8*2L)
    sel = np.zeros((8 * two_l, _OUT_PAD), np.float32)
    sel[np.arange(8 * two_l), np.tile(np.arange(two_l), 8)] = 1.0     # (8*2L, 128)
    bfc = jnp.zeros((1, _OUT_PAD), jnp.float32)
    bfc = bfc.at[0, :two_l].set(jnp.concatenate([params["fc_mu_b"], params["fc_var_b"]]))

    consts = (w1bd, s1t, w2bd, s2t, w3b, s3, w4b, s4,
              wfc, jnp.asarray(msk), jnp.asarray(sel, dtype=jnp.bfloat16), bfc)
    return consts, kp, two_l


def _pack_input(x_nchw, kp):
    """Build the packed conv1 patch matrix (n, 512, kp) in the kernel's row/column order
    using only rank<=8 reshape/transposes plus one tiny 512-row take."""
    n, cin, hh, ww = x_nchw.shape
    assert hh == 128 and ww == 128, "x.view(-1, 4096) in the reference implies 128x128 input"
    x = jnp.transpose(x_nchw, (0, 2, 3, 1)).astype(jnp.bfloat16)      # NHWC, bf16
    # h = 8*r_h + 4*a2 + 2*a1 + kh ; w = 8*r_w + 4*b2 + 2*b1 + kw
    x = x.reshape(n, 16, 8, 16, 8, cin)                               # (n, r_h, hh, r_w, ww, ci)
    x = jnp.transpose(x, (0, 1, 3, 2, 4, 5)).reshape(n, 256, 8, 8, cin)
    x = x.reshape(n, 256, 2, 4, 8, cin)                               # (n, r, a2, h4, ww, ci)
    x = jnp.transpose(x, (0, 2, 1, 3, 4, 5)).reshape(n, 512, 4, 8, cin)   # rows = a2*256 + r
    x = x.reshape(n, 512, 4, 2, 4, cin)                               # (n, row, h4, b2, w4, ci)
    x = x.reshape(n, 512, 2, 2, 2, 2, 2, cin)                         # (n, row, a1, kh, b2, b1, kw, ci)
    x = jnp.transpose(x, (0, 1, 4, 2, 5, 3, 6, 7))                    # (n, row, b2, a1, b1, kh, kw, ci)
    xp = x.reshape(n, 512, 32 * cin)
    perm = np.concatenate([_PERM16, 256 + _PERM16]).astype(np.int32)  # sigma16 within a2 blocks
    xp = jnp.take(xp, jnp.asarray(perm), axis=1)
    return jnp.pad(xp, ((0, 0), (0, 0), (0, kp - 32 * cin)))


def init_params(key, in_channels, latent_dim):
    chans = [in_channels, 32, 32, 64, 64]
    params = {"convs": []}
    for li in range(4):
        cin, cout = chans[li], chans[li + 1]
        key, kw, kb = jax.random.split(key, 3)
        bound = 1.0 / jnp.sqrt(cin * 4.0)
        params["convs"].append(dict(
            w=jax.random.uniform(kw, (cout, cin, 2, 2), jnp.float32, -bound, bound),
            b=jax.random.uniform(kb, (cout,), jnp.float32, -bound, bound),
            gamma=jnp.ones((cout,), jnp.float32),
            beta=jnp.zeros((cout,), jnp.float32),
            mean=jnp.zeros((cout,), jnp.float32),
            var=jnp.ones((cout,), jnp.float32),
        ))
    bound = 1.0 / jnp.sqrt(4096.0)
    key, k1, k2, k3, k4 = jax.random.split(key, 5)
    params["fc_mu_w"] = jax.random.uniform(k1, (latent_dim, 4096), jnp.float32, -bound, bound)
    params["fc_mu_b"] = jax.random.uniform(k2, (latent_dim,), jnp.float32, -bound, bound)
    params["fc_var_w"] = jax.random.uniform(k3, (latent_dim, 4096), jnp.float32, -bound, bound)
    params["fc_var_b"] = jax.random.uniform(k4, (latent_dim,), jnp.float32, -bound, bound)
    return params


@jax.jit
def encoder_forward(params, x_nchw):
    latent = params["fc_mu_w"].shape[0]
    consts, kp, two_l = _prepare_constants(params)
    p1 = _pack_input(x_nchw, kp)
    out = _encoder_pallas(p1, consts)[:, 0, :]
    return out[:, :latent], out[:, latent:two_l]


# ----------------------------------------------------------------------------
# Independent pure-JAX reference (same bf16-quantized weights/activations)
# ----------------------------------------------------------------------------

def reference_forward(params, x_nchw):
    n = x_nchw.shape[0]
    latent = params["fc_mu_w"].shape[0]
    x = jnp.transpose(x_nchw, (0, 2, 3, 1)).astype(jnp.bfloat16).astype(jnp.float32)
    for p in params["convs"]:
        w_fold, shift = _fold_conv(p)
        cout, cin = p["w"].shape[0], p["w"].shape[1]
        w_hwio = w_fold.astype(jnp.bfloat16).astype(jnp.float32).reshape(2, 2, cin, cout)
        x = lax.conv_general_dilated(x, w_hwio, (2, 2), "VALID",
                                     dimension_numbers=("NHWC", "HWIO", "NHWC"))
        x = x + shift.reshape(1, 1, 1, cout)
        x = jnp.where(x > 0, x, 0.2 * x)
        x = x.astype(jnp.bfloat16).astype(jnp.float32)
    flat = jnp.transpose(x, (0, 3, 1, 2)).reshape(n, 4096)            # PyTorch NCHW flatten
    wcat = jnp.concatenate([params["fc_mu_w"], params["fc_var_w"]], 0).astype(jnp.bfloat16)
    bcat = jnp.concatenate([params["fc_mu_b"], params["fc_var_b"]])
    out = flat @ wcat.astype(jnp.float32).T + bcat[None, :]
    return out[:, :latent], out[:, latent:]


# ----------------------------------------------------------------------------
# main
# ----------------------------------------------------------------------------

if __name__ == "__main__":
    key = jax.random.PRNGKey(0)
    in_channels, latent_dim = 3, 32
    N, H, W = 2, 128, 128            # final (64, 8, 8) -> 4096 flatten implies 128x128

    key, kparam, kx = jax.random.split(key, 3)
    params = init_params(kparam, in_channels, latent_dim)
    x = jax.random.normal(kx, (N, in_channels, H, W), jnp.float32)

    mu, logvar = encoder_forward(params, x)
    jax.block_until_ready((mu, logvar))

    mu_ref, logvar_ref = reference_forward(params, x)
    assert mu.shape == (N, latent_dim) and logvar.shape == (N, latent_dim)
    assert bool(jnp.all(jnp.isfinite(mu))) and bool(jnp.all(jnp.isfinite(logvar)))
    err = max(float(jnp.max(jnp.abs(mu - mu_ref))),
              float(jnp.max(jnp.abs(logvar - logvar_ref))))
    assert err < 3e-2, f"mismatch vs reference: {err}"
    print("KERNEL_OK")
</pallas_src>

<mosaic_0001>
module attributes {stable_mosaic.version = 11 : i64} {
  func.func @_encoder_kernel(%arg0: i32, %arg1: memref<1x512x128xbf16, #tpu.memory_space<vmem>>, %arg2: memref<128x256xbf16, #tpu.memory_space<vmem>>, %arg3: memref<1x256xf32, #tpu.memory_space<vmem>>, %arg4: memref<256x64xbf16, #tpu.memory_space<vmem>>, %arg5: memref<1x64xf32, #tpu.memory_space<vmem>>, %arg6: memref<128x64xbf16, #tpu.memory_space<vmem>>, %arg7: memref<1x64xf32, #tpu.memory_space<vmem>>, %arg8: memref<256x64xbf16, #tpu.memory_space<vmem>>, %arg9: memref<1x64xf32, #tpu.memory_space<vmem>>, %arg10: memref<512x512xbf16, #tpu.memory_space<vmem>>, %arg11: memref<8x512xf32, #tpu.memory_space<vmem>>, %arg12: memref<512x128xbf16, #tpu.memory_space<vmem>>, %arg13: memref<1x128xf32, #tpu.memory_space<vmem>>, %arg14: memref<1x1x128xf32, #tpu.memory_space<vmem>>) attributes {dimension_semantics = [#tpu.dimension_semantics<parallel>], iteration_bounds = array<i64: 2>, scalar_prefetch = 0 : i64, scratch_operands = 0 : i64, tpu.core_type = #tpu.core_type<tc>, window_params = [{transform_indices = @transform_0, window_bounds = array<i64: 1, 512, 128>}, {pipeline_mode = #tpu.pipeline_mode<synchronous>, transform_indices = @transform_1, window_bounds = array<i64: 128, 256>}, {pipeline_mode = #tpu.pipeline_mode<synchronous>, transform_indices = @transform_2, window_bounds = array<i64: 1, 256>}, {pipeline_mode = #tpu.pipeline_mode<synchronous>, transform_indices = @transform_3, window_bounds = array<i64: 256, 64>}, {pipeline_mode = #tpu.pipeline_mode<synchronous>, transform_indices = @transform_4, window_bounds = array<i64: 1, 64>}, {pipeline_mode = #tpu.pipeline_mode<synchronous>, transform_indices = @transform_5, window_bounds = array<i64: 128, 64>}, {pipeline_mode = #tpu.pipeline_mode<synchronous>, transform_indices = @transform_6, window_bounds = array<i64: 1, 64>}, {pipeline_mode = #tpu.pipeline_mode<synchronous>, transform_indices = @transform_7, window_bounds = array<i64: 256, 64>}, {pipeline_mode = #tpu.pipeline_mode<synchronous>, transform_indices = @transform_8, window_bounds = array<i64: 1, 64>}, {pipeline_mode = #tpu.pipeline_mode<synchronous>, transform_indices = @transform_9, window_bounds = array<i64: 512, 512>}, {pipeline_mode = #tpu.pipeline_mode<synchronous>, transform_indices = @transform_10, window_bounds = array<i64: 8, 512>}, {pipeline_mode = #tpu.pipeline_mode<synchronous>, transform_indices = @transform_11, window_bounds = array<i64: 512, 128>}, {pipeline_mode = #tpu.pipeline_mode<synchronous>, transform_indices = @transform_12, window_bounds = array<i64: 1, 128>}, {transform_indices = @transform_13, window_bounds = array<i64: 1, 1, 128>}]} {
    %c0 = arith.constant 0 : index
    %c0_0 = arith.constant 0 : index
    %c0_1 = arith.constant 0 : index
    %0 = vector.load %arg1[%c0, %c0_0, %c0_1] : memref<1x512x128xbf16, #tpu.memory_space<vmem>>, vector<1x512x128xbf16>
    %1 = vector.shape_cast %0 : vector<1x512x128xbf16> to vector<512x128xbf16>
    %c0_2 = arith.constant 0 : index
    %c0_3 = arith.constant 0 : index
    %2 = vector.load %arg2[%c0_2, %c0_3] : memref<128x256xbf16, #tpu.memory_space<vmem>>, vector<128x256xbf16>
    %cst = arith.constant dense<0.000000e+00> : vector<512x256xf32>
    %3 = tpu.matmul %1, %2, %cst {dimension_numbers = #tpu.dot_dimension_numbers<[1], [0], [0], [1], [0, 0, 1, 1], [], []>} : vector<512x128xbf16>, vector<128x256xbf16>, vector<512x256xf32> -> vector<512x256xf32>
    %c0_4 = arith.constant 0 : index
    %c0_5 = arith.constant 0 : index
    %4 = vector.load %arg3[%c0_4, %c0_5] : memref<1x256xf32, #tpu.memory_space<vmem>>, vector<1x256xf32>
    %5 = vector.broadcast %4 : vector<1x256xf32> to vector<512x256xf32>
    %6 = arith.addf %3, %5 : vector<512x256xf32>
    %cst_6 = arith.constant 2.000000e-01 : f32
    %7 = vector.broadcast %cst_6 : f32 to vector<512x256xf32>
    %8 = arith.mulf %7, %6 : vector<512x256xf32>
    %9 = arith.maximumf %6, %8 : vector<512x256xf32>
    %10 = arith.truncf %9 : vector<512x256xf32> to vector<512x256xbf16>
    %c0_7 = arith.constant 0 : index
    %c0_8 = arith.constant 0 : index
    %11 = vector.load %arg4[%c0_7, %c0_8] : memref<256x64xbf16, #tpu.memory_space<vmem>>, vector<256x64xbf16>
    %cst_9 = arith.constant dense<0.000000e+00> : vector<512x64xf32>
    %12 = tpu.matmul %10, %11, %cst_9 {dimension_numbers = #tpu.dot_dimension_numbers<[1], [0], [0], [1], [0, 0, 1, 1], [], []>} : vector<512x256xbf16>, vector<256x64xbf16>, vector<512x64xf32> -> vector<512x64xf32>
    %c0_10 = arith.constant 0 : index
    %c0_11 = arith.constant 0 : index
    %13 = vector.load %arg5[%c0_10, %c0_11] : memref<1x64xf32, #tpu.memory_space<vmem>>, vector<1x64xf32>
    %14 = vector.broadcast %13 : vector<1x64xf32> to vector<512x64xf32>
    %15 = arith.addf %12, %14 : vector<512x64xf32>
    %cst_12 = arith.constant 2.000000e-01 : f32
    %16 = vector.broadcast %cst_12 : f32 to vector<512x64xf32>
    %17 = arith.mulf %16, %15 : vector<512x64xf32>
    %18 = arith.maximumf %15, %17 : vector<512x64xf32>
    %19 = arith.truncf %18 : vector<512x64xf32> to vector<512x64xbf16>
    %20 = vector.extract_strided_slice %19 {offsets = [0, 0], sizes = [256, 64], strides = [1, 1]} : vector<512x64xbf16> to vector<256x64xbf16>
    %21 = vector.extract_strided_slice %19 {offsets = [256, 0], sizes = [256, 64], strides = [1, 1]} : vector<512x64xbf16> to vector<256x64xbf16>
    %22 = tpu.concatenate %20, %21 in 1 : vector<256x64xbf16>, vector<256x64xbf16> -> vector<256x128xbf16>
    %c0_13 = arith.constant 0 : index
    %c0_14 = arith.constant 0 : index
    %23 = vector.load %arg6[%c0_13, %c0_14] : memref<128x64xbf16, #tpu.memory_space<vmem>>, vector<128x64xbf16>
    %cst_15 = arith.constant dense<0.000000e+00> : vector<256x64xf32>
    %24 = tpu.matmul %22, %23, %cst_15 {dimension_numbers = #tpu.dot_dimension_numbers<[1], [0], [0], [1], [0, 0, 1, 1], [], []>} : vector<256x128xbf16>, vector<128x64xbf16>, vector<256x64xf32> -> vector<256x64xf32>
    %c0_16 = arith.constant 0 : index
    %c0_17 = arith.constant 0 : index
    %25 = vector.load %arg7[%c0_16, %c0_17] : memref<1x64xf32, #tpu.memory_space<vmem>>, vector<1x64xf32>
    %26 = vector.broadcast %25 : vector<1x64xf32> to vector<256x64xf32>
    %27 = arith.addf %24, %26 : vector<256x64xf32>
    %cst_18 = arith.constant 2.000000e-01 : f32
    %28 = vector.broadcast %cst_18 : f32 to vector<256x64xf32>
    %29 = arith.mulf %28, %27 : vector<256x64xf32>
    %30 = arith.maximumf %27, %29 : vector<256x64xf32>
    %31 = arith.truncf %30 : vector<256x64xf32> to vector<256x64xbf16>
    %32 = vector.extract_strided_slice %31 {offsets = [0, 0], sizes = [64, 64], strides = [1, 1]} : vector<256x64xbf16> to vector<64x64xbf16>
    %33 = vector.extract_strided_slice %31 {offsets = [64, 0], sizes = [64, 64], strides = [1, 1]} : vector<256x64xbf16> to vector<64x64xbf16>
    %34 = vector.extract_strided_slice %31 {offsets = [128, 0], sizes = [64, 64], strides = [1, 1]} : vector<256x64xbf16> to vector<64x64xbf16>
    %35 = vector.extract_strided_slice %31 {offsets = [192, 0], sizes = [64, 64], strides = [1, 1]} : vector<256x64xbf16> to vector<64x64xbf16>
    %36 = tpu.concatenate %32, %33, %34, %35 in 1 : vector<64x64xbf16>, vector<64x64xbf16>, vector<64x64xbf16>, vector<64x64xbf16> -> vector<64x256xbf16>
    %c0_19 = arith.constant 0 : index
    %c0_20 = arith.constant 0 : index
    %37 = vector.load %arg8[%c0_19, %c0_20] : memref<256x64xbf16, #tpu.memory_space<vmem>>, vector<256x64xbf16>
    %cst_21 = arith.constant dense<0.000000e+00> : vector<64x64xf32>
    %38 = tpu.matmul %36, %37, %cst_21 {dimension_numbers = #tpu.dot_dimension_numbers<[1], [0], [0], [1], [0, 0, 1, 1], [], []>} : vector<64x256xbf16>, vector<256x64xbf16>, vector<64x64xf32> -> vector<64x64xf32>
    %c0_22 = arith.constant 0 : index
    %c0_23 = arith.constant 0 : index
    %39 = vector.load %arg9[%c0_22, %c0_23] : memref<1x64xf32, #tpu.memory_space<vmem>>, vector<1x64xf32>
    %40 = vector.broadcast %39 : vector<1x64xf32> to vector<64x64xf32>
    %41 = arith.addf %38, %40 : vector<64x64xf32>
    %cst_24 = arith.constant 2.000000e-01 : f32
    %42 = vector.broadcast %cst_24 : f32 to vector<64x64xf32>
    %43 = arith.mulf %42, %41 : vector<64x64xf32>
    %44 = arith.maximumf %41, %43 : vector<64x64xf32>
    %45 = arith.truncf %44 : vector<64x64xf32> to vector<64x64xbf16>
    %46 = vector.extract_strided_slice %45 {offsets = [0, 0], sizes = [8, 64], strides = [1, 1]} : vector<64x64xbf16> to vector<8x64xbf16>
    %47 = vector.extract_strided_slice %45 {offsets = [8, 0], sizes = [8, 64], strides = [1, 1]} : vector<64x64xbf16> to vector<8x64xbf16>
    %48 = vector.extract_strided_slice %45 {offsets = [16, 0], sizes = [8, 64], strides = [1, 1]} : vector<64x64xbf16> to vector<8x64xbf16>
    %49 = vector.extract_strided_slice %45 {offsets = [24, 0], sizes = [8, 64], strides = [1, 1]} : vector<64x64xbf16> to vector<8x64xbf16>
    %50 = vector.extract_strided_slice %45 {offsets = [32, 0], sizes = [8, 64], strides = [1, 1]} : vector<64x64xbf16> to vector<8x64xbf16>
    %51 = vector.extract_strided_slice %45 {offsets = [40, 0], sizes = [8, 64], strides = [1, 1]} : vector<64x64xbf16> to vector<8x64xbf16>
    %52 = vector.extract_strided_slice %45 {offsets = [48, 0], sizes = [8, 64], strides = [1, 1]} : vector<64x64xbf16> to vector<8x64xbf16>
    %53 = vector.extract_strided_slice %45 {offsets = [56, 0], sizes = [8, 64], strides = [1, 1]} : vector<64x64xbf16> to vector<8x64xbf16>
    %54 = tpu.concatenate %46, %47, %48, %49, %50, %51, %52, %53 in 1 : vector<8x64xbf16>, vector<8x64xbf16>, vector<8x64xbf16>, vector<8x64xbf16>, vector<8x64xbf16>, vector<8x64xbf16>, vector<8x64xbf16>, vector<8x64xbf16> -> vector<8x512xbf16>
    %c0_25 = arith.constant 0 : index
    %c0_26 = arith.constant 0 : index
    %55 = vector.load %arg10[%c0_25, %c0_26] : memref<512x512xbf16, #tpu.memory_space<vmem>>, vector<512x512xbf16>
    %cst_27 = arith.constant dense<0.000000e+00> : vector<8x512xf32>
    %56 = tpu.matmul %54, %55, %cst_27 {dimension_numbers = #tpu.dot_dimension_numbers<[1], [0], [0], [1], [0, 0, 1, 1], [], []>} : vector<8x512xbf16>, vector<512x512xbf16>, vector<8x512xf32> -> vector<8x512xf32>
    %c0_28 = arith.constant 0 : index
    %c0_29 = arith.constant 0 : index
    %57 = vector.load %arg11[%c0_28, %c0_29] : memref<8x512xf32, #tpu.memory_space<vmem>>, vector<8x512xf32>
    %58 = arith.mulf %56, %57 : vector<8x512xf32>
    %cst_30 = arith.constant dense<0.000000e+00> : vector<512xf32>
    %59 = vector.multi_reduction <add>, %58, %cst_30 [0] : vector<8x512xf32> to vector<512xf32>
    %60 = vector.shape_cast %59 : vector<512xf32> to vector<1x512xf32>
    %61 = arith.truncf %60 : vector<1x512xf32> to vector<1x512xbf16>
    %c0_31 = arith.constant 0 : index
    %c0_32 = arith.constant 0 : index
    %62 = vector.load %arg12[%c0_31, %c0_32] : memref<512x128xbf16, #tpu.memory_space<vmem>>, vector<512x128xbf16>
    %cst_33 = arith.constant dense<0.000000e+00> : vector<1x128xf32>
    %63 = tpu.matmul %61, %62, %cst_33 {dimension_numbers = #tpu.dot_dimension_numbers<[1], [0], [0], [1], [0, 0, 1, 1], [], []>} : vector<1x512xbf16>, vector<512x128xbf16>, vector<1x128xf32> -> vector<1x128xf32>
    %c0_34 = arith.constant 0 : index
    %c0_35 = arith.constant 0 : index
    %64 = vector.load %arg13[%c0_34, %c0_35] : memref<1x128xf32, #tpu.memory_space<vmem>>, vector<1x128xf32>
    %65 = arith.addf %63, %64 : vector<1x128xf32>
    %c0_36 = arith.constant 0 : index
    %c0_37 = arith.constant 0 : index
    %c0_38 = arith.constant 0 : index
    %66 = vector.load %arg14[%c0_36, %c0_37, %c0_38] : memref<1x1x128xf32, #tpu.memory_space<vmem>>, vector<1x1x128xf32>
    %67 = vector.shape_cast %66 : vector<1x1x128xf32> to vector<1x128xf32>
    %68 = vector.shape_cast %65 : vector<1x128xf32> to vector<1x1x128xf32>
    tpu.vector_store %arg14[%c0_36, %c0_37, %c0_38], %68 {strides = array<i32>} : memref<1x1x128xf32, #tpu.memory_space<vmem>>, vector<1x1x128xf32>,
    return
  }
  func.func @transform_0(%arg0: i32) -> (i32, i32, i32) {
    %c0_i32 = arith.constant 0 : i32
    %c0_i32_0 = arith.constant 0 : i32
    %c0_i32_1 = arith.constant 0 : i32
    return %arg0, %c0_i32, %c0_i32_0 : i32, i32, i32
  }
  func.func @transform_1(%arg0: i32) -> (i32, i32) {
    %c0_i32 = arith.constant 0 : i32
    %c0_i32_0 = arith.constant 0 : i32
    %c0_i32_1 = arith.constant 0 : i32
    return %c0_i32, %c0_i32_0 : i32, i32
  }
  func.func @transform_2(%arg0: i32) -> (i32, i32) {
    %c0_i32 = arith.constant 0 : i32
    %c0_i32_0 = arith.constant 0 : i32
    %c0_i32_1 = arith.constant 0 : i32
    return %c0_i32, %c0_i32_0 : i32, i32
  }
  func.func @transform_3(%arg0: i32) -> (i32, i32) {
    %c0_i32 = arith.constant 0 : i32
    %c0_i32_0 = arith.constant 0 : i32
    %c0_i32_1 = arith.constant 0 : i32
    return %c0_i32, %c0_i32_0 : i32, i32
  }
  func.func @transform_4(%arg0: i32) -> (i32, i32) {
    %c0_i32 = arith.constant 0 : i32
    %c0_i32_0 = arith.constant 0 : i32
    %c0_i32_1 = arith.constant 0 : i32
    return %c0_i32, %c0_i32_0 : i32, i32
  }
  func.func @transform_5(%arg0: i32) -> (i32, i32) {
    %c0_i32 = arith.constant 0 : i32
    %c0_i32_0 = arith.constant 0 : i32
    %c0_i32_1 = arith.constant 0 : i32
    return %c0_i32, %c0_i32_0 : i32, i32
  }
  func.func @transform_6(%arg0: i32) -> (i32, i32) {
    %c0_i32 = arith.constant 0 : i32
    %c0_i32_0 = arith.constant 0 : i32
    %c0_i32_1 = arith.constant 0 : i32
    return %c0_i32, %c0_i32_0 : i32, i32
  }
  func.func @transform_7(%arg0: i32) -> (i32, i32) {
    %c0_i32 = arith.constant 0 : i32
    %c0_i32_0 = arith.constant 0 : i32
    %c0_i32_1 = arith.constant 0 : i32
    return %c0_i32, %c0_i32_0 : i32, i32
  }
  func.func @transform_8(%arg0: i32) -> (i32, i32) {
    %c0_i32 = arith.constant 0 : i32
    %c0_i32_0 = arith.constant 0 : i32
    %c0_i32_1 = arith.constant 0 : i32
    return %c0_i32, %c0_i32_0 : i32, i32
  }
  func.func @transform_9(%arg0: i32) -> (i32, i32) {
    %c0_i32 = arith.constant 0 : i32
    %c0_i32_0 = arith.constant 0 : i32
    %c0_i32_1 = arith.constant 0 : i32
    return %c0_i32, %c0_i32_0 : i32, i32
  }
  func.func @transform_10(%arg0: i32) -> (i32, i32) {
    %c0_i32 = arith.constant 0 : i32
    %c0_i32_0 = arith.constant 0 : i32
    %c0_i32_1 = arith.constant 0 : i32
    return %c0_i32, %c0_i32_0 : i32, i32
  }
  func.func @transform_11(%arg0: i32) -> (i32, i32) {
    %c0_i32 = arith.constant 0 : i32
    %c0_i32_0 = arith.constant 0 : i32
    %c0_i32_1 = arith.constant 0 : i32
    return %c0_i32, %c0_i32_0 : i32, i32
  }
  func.func @transform_12(%arg0: i32) -> (i32, i32) {
    %c0_i32 = arith.constant 0 : i32
    %c0_i32_0 = arith.constant 0 : i32
    %c0_i32_1 = arith.constant 0 : i32
    return %c0_i32, %c0_i32_0 : i32, i32
  }
  func.func @transform_13(%arg0: i32) -> (i32, i32, i32) {
    %c0_i32 = arith.constant 0 : i32
    %c0_i32_0 = arith.constant 0 : i32
    %c0_i32_1 = arith.constant 0 : i32
    return %arg0, %c0_i32, %c0_i32_0 : i32, i32, i32
  }
}

</mosaic_0001>

<llo_original>
// kernel: encoder_forward.1
$region0: #{encoder_forward.1}
  #allocation0 [shape = 'u32[]', space=smem, size = 0x4, offset = 0x4, fixed_abs, tag = 'smem constant byte address 0x4 - core index']
  #allocation1 [shape = 'u32[144,128]{1,0:T(1,128)}', space=vmem, size = 0x12000, scoped, tag = 'internal scratch']
  %s0 = inlined_call_operand.vmem [shape: bf16[2,512,128], index: 0, kind: input, shape index: {}]
  %s1 = inlined_call_operand.vmem [shape: bf16[128,256], index: 1, kind: input, shape index: {}]
  %s2 = inlined_call_operand.vmem [shape: f32[1,256], index: 2, kind: input, shape index: {}]
  %s3 = inlined_call_operand.vmem [shape: bf16[256,64], index: 3, kind: input, shape index: {}]
  %s4 = inlined_call_operand.vmem [shape: f32[1,64], index: 4, kind: input, shape index: {}]
  %s5 = inlined_call_operand.vmem [shape: bf16[128,64], index: 5, kind: input, shape index: {}]
  %s6 = inlined_call_operand.vmem [shape: f32[1,64], index: 6, kind: input, shape index: {}]
  %s7 = inlined_call_operand.vmem [shape: bf16[256,64], index: 7, kind: input, shape index: {}]
  %s8 = inlined_call_operand.vmem [shape: f32[1,64], index: 8, kind: input, shape index: {}]
  %s9 = inlined_call_operand.vmem [shape: bf16[512,512], index: 9, kind: input, shape index: {}]
  %s10 = inlined_call_operand.vmem [shape: f32[8,512], index: 10, kind: input, shape index: {}]
  %s11 = inlined_call_operand.vmem [shape: bf16[512,128], index: 11, kind: input, shape index: {}]
  %s12 = inlined_call_operand.vmem [shape: f32[1,128], index: 12, kind: input, shape index: {}]
  %s13 = inlined_call_operand.vmem [shape: f32[2,1,128], index: 13, kind: output, shape index: {}]
  %s14 = sld [smem:[#allocation0]]
  $region85: #{encoder_forward.1} parent=0
    _
  %s16 = ssub.s32 1, %s14
  %s17 = scalar_select 0, %s16, %s14
  loop: start=0, step=1, limit=4
  $region2: #{encoder_forward.1} parent=0 // loop_pre_header
    _
  $region3: #{encoder_forward.1} parent=0 // loop_header
    %s19 = sphi 0, %s23
    %p20 = scmp.ge.s32.totalorder %s19, 4
    %s29 = sphi 0, %s31
    %s32 = sphi 0, %s29
    %s33 = sphi 0, %s32
    %s49 = sphi 0, %s33
    %s53 = sphi 0, %s53
    %s55 = sphi 0, %s53
    %s56 = sphi 0, %s55
    %s70 = sphi 0, %s56
    %s74 = sphi 0, %s74
    %s76 = sphi 0, %s74
    %s77 = sphi 0, %s76
    %s91 = sphi 0, %s77
    %s95 = sphi 0, %s95
    %s97 = sphi 0, %s95
    %s98 = sphi 0, %s97
    %s112 = sphi 0, %s98
    %s116 = sphi 0, %s116
    %s118 = sphi 0, %s116
    %s119 = sphi 0, %s118
    %s133 = sphi 0, %s119
    %s137 = sphi 0, %s137
    %s139 = sphi 0, %s137
    %s140 = sphi 0, %s139
    %s154 = sphi 0, %s140
    %s158 = sphi 0, %s158
    %s160 = sphi 0, %s158
    %s161 = sphi 0, %s160
    %s175 = sphi 0, %s161
    %s179 = sphi 0, %s179
    %s181 = sphi 0, %s179
    %s182 = sphi 0, %s181
    %s196 = sphi 0, %s182
    %s200 = sphi 0, %s200
    %s202 = sphi 0, %s200
    %s203 = sphi 0, %s202
    %s217 = sphi 0, %s203
    %s221 = sphi 0, %s221
    %s223 = sphi 0, %s221
    %s224 = sphi 0, %s223
    %s238 = sphi 0, %s224
    %s242 = sphi 0, %s242
    %s244 = sphi 0, %s242
    %s245 = sphi 0, %s244
    %s259 = sphi 0, %s245
    %s263 = sphi 0, %s263
    %s265 = sphi 0, %s263
    %s266 = sphi 0, %s265
    %s280 = sphi 0, %s266
    %s284 = sphi 0, %s284
    %s286 = sphi 0, %s284
    %s287 = sphi 0, %s286
    %s301 = sphi 0, %s287
    %s307 = sphi 0, %s309
    %s310 = sphi 0, %s307
    %s311 = sphi 0, %s310
    %s327 = sphi 0, %s311
  $region4: #{encoder_forward.1} parent=0 // loop_header_branch
    %22 = sbr.rel (%p20) target = $region8
  $region5: #{encoder_forward.1} parent=0 // loop_body
    %s24 = ssub.s32 %s19, 1
    %s25 = ssub.s32 %s19, 2
    %s26 = sadd.s32 %s19, 1
    %s27 = ssub.s32 %s19, %s26
    %p28 = scmp.eq.s32.totalorder %s27, 0
    %s30 = sadd.s32 %s29, 1
    %s31 = scalar_select %p28, %s29, %s30
    %p34 = pneg %p28
    %p35 = scmp.eq.s32.totalorder %s19, 1
    %p36 = por %p34, %p35
    %p37 = scmp.ne.s32.totalorder %s29, %s32
    %p38 = scmp.eq.s32.totalorder %s19, 0
    %p39 = por %p37, %p38
    %p40 = scmp.ne.s32.totalorder %s29, %s32
    %p41 = scmp.eq.s32.totalorder %s24, 1
    %p42 = por %p40, %p41
    %p43 = scmp.ne.s32.totalorder %s32, %s33
    %p44 = scmp.eq.s32.totalorder %s24, 0
    %p45 = por %p43, %p44
    %p46 = scmp.ne.s32.totalorder %s32, %s33
    %p47 = scmp.eq.s32.totalorder %s25, 1
    %p48 = por %p46, %p47
    %p50 = scmp.ne.s32.totalorder %s33, %s49
    %p51 = scmp.eq.s32.totalorder %s25, 0
    %p52 = por %p50, %p51
    %s54 = sadd.s32 %s53, 1
    %p57 = scmp.eq.s32.totalorder %s19, 1
    %p58 = scmp.ne.s32.totalorder %s53, %s55
    %p59 = scmp.eq.s32.totalorder %s19, 0
    %p60 = por %p58, %p59
    %p61 = scmp.ne.s32.totalorder %s53, %s55
    %p62 = scmp.eq.s32.totalorder %s24, 1
    %p63 = por %p61, %p62
    %p64 = scmp.ne.s32.totalorder %s55, %s56
    %p65 = scmp.eq.s32.totalorder %s24, 0
    %p66 = por %p64, %p65
    %p67 = scmp.ne.s32.totalorder %s55, %s56
    %p68 = scmp.eq.s32.totalorder %s25, 1
    %p69 = por %p67, %p68
    %p71 = scmp.ne.s32.totalorder %s56, %s70
    %p72 = scmp.eq.s32.totalorder %s25, 0
    %p73 = por %p71, %p72
    %s75 = sadd.s32 %s74, 1
    %p78 = scmp.eq.s32.totalorder %s19, 1
    %p79 = scmp.ne.s32.totalorder %s74, %s76
    %p80 = scmp.eq.s32.totalorder %s19, 0
    %p81 = por %p79, %p80
    %p82 = scmp.ne.s32.totalorder %s74, %s76
    %p83 = scmp.eq.s32.totalorder %s24, 1
    %p84 = por %p82, %p83
    %p85 = scmp.ne.s32.totalorder %s76, %s77
    %p86 = scmp.eq.s32.totalorder %s24, 0
    %p87 = por %p85, %p86
    %p88 = scmp.ne.s32.totalorder %s76, %s77
    %p89 = scmp.eq.s32.totalorder %s25, 1
    %p90 = por %p88, %p89
    %p92 = scmp.ne.s32.totalorder %s77, %s91
    %p93 = scmp.eq.s32.totalorder %s25, 0
    %p94 = por %p92, %p93
    %s96 = sadd.s32 %s95, 1
    %p99 = scmp.eq.s32.totalorder %s19, 1
    %p100 = scmp.ne.s32.totalorder %s95, %s97
    %p101 = scmp.eq.s32.totalorder %s19, 0
    %p102 = por %p100, %p101
    %p103 = scmp.ne.s32.totalorder %s95, %s97
    %p104 = scmp.eq.s32.totalorder %s24, 1
    %p105 = por %p103, %p104
    %p106 = scmp.ne.s32.totalorder %s97, %s98
    %p107 = scmp.eq.s32.totalorder %s24, 0
    %p108 = por %p106, %p107
    %p109 = scmp.ne.s32.totalorder %s97, %s98
    %p110 = scmp.eq.s32.totalorder %s25, 1
    %p111 = por %p109, %p110
    %p113 = scmp.ne.s32.totalorder %s98, %s112
    %p114 = scmp.eq.s32.totalorder %s25, 0
    %p115 = por %p113, %p114
    %s117 = sadd.s32 %s116, 1
    %p120 = scmp.eq.s32.totalorder %s19, 1
    %p121 = scmp.ne.s32.totalorder %s116, %s118
    %p122 = scmp.eq.s32.totalorder %s19, 0
    %p123 = por %p121, %p122
    %p124 = scmp.ne.s32.totalorder %s116, %s118
    %p125 = scmp.eq.s32.totalorder %s24, 1
    %p126 = por %p124, %p125
    %p127 = scmp.ne.s32.totalorder %s118, %s119
    %p128 = scmp.eq.s32.totalorder %s24, 0
    %p129 = por %p127, %p128
    %p130 = scmp.ne.s32.totalorder %s118, %s119
    %p131 = scmp.eq.s32.totalorder %s25, 1
    %p132 = por %p130, %p131
    %p134 = scmp.ne.s32.totalorder %s119, %s133
    %p135 = scmp.eq.s32.totalorder %s25, 0
    %p136 = por %p134, %p135
    %s138 = sadd.s32 %s137, 1
    %p141 = scmp.eq.s32.totalorder %s19, 1
    %p142 = scmp.ne.s32.totalorder %s137, %s139
    %p143 = scmp.eq.s32.totalorder %s19, 0
    %p144 = por %p142, %p143
    %p145 = scmp.ne.s32.totalorder %s137, %s139
    %p146 = scmp.eq.s32.totalorder %s24, 1
    %p147 = por %p145, %p146
    %p148 = scmp.ne.s32.totalorder %s139, %s140
    %p149 = scmp.eq.s32.totalorder %s24, 0
    %p150 = por %p148, %p149
    %p151 = scmp.ne.s32.totalorder %s139, %s140
    %p152 = scmp.eq.s32.totalorder %s25, 1
    %p153 = por %p151, %p152
    %p155 = scmp.ne.s32.totalorder %s140, %s154
    %p156 = scmp.eq.s32.totalorder %s25, 0
    %p157 = por %p155, %p156
    %s159 = sadd.s32 %s158, 1
    %p162 = scmp.eq.s32.totalorder %s19, 1
    %p163 = scmp.ne.s32.totalorder %s158, %s160
    %p164 = scmp.eq.s32.totalorder %s19, 0
    %p165 = por %p163, %p164
    %p166 = scmp.ne.s32.totalorder %s158, %s160
    %p167 = scmp.eq.s32.totalorder %s24, 1
    %p168 = por %p166, %p167
    %p169 = scmp.ne.s32.totalorder %s160, %s161
    %p170 = scmp.eq.s32.totalorder %s24, 0
    %p171 = por %p169, %p170
    %p172 = scmp.ne.s32.totalorder %s160, %s161
    %p173 = scmp.eq.s32.totalorder %s25, 1
    %p174 = por %p172, %p173
    %p176 = scmp.ne.s32.totalorder %s161, %s175
    %p177 = scmp.eq.s32.totalorder %s25, 0
    %p178 = por %p176, %p177
    %s180 = sadd.s32 %s179, 1
    %p183 = scmp.eq.s32.totalorder %s19, 1
    %p184 = scmp.ne.s32.totalorder %s179, %s181
    %p185 = scmp.eq.s32.totalorder %s19, 0
    %p186 = por %p184, %p185
    %p187 = scmp.ne.s32.totalorder %s179, %s181
    %p188 = scmp.eq.s32.totalorder %s24, 1
    %p189 = por %p187, %p188
    %p190 = scmp.ne.s32.totalorder %s181, %s182
    %p191 = scmp.eq.s32.totalorder %s24, 0
    %p192 = por %p190, %p191
    %p193 = scmp.ne.s32.totalorder %s181, %s182
    %p194 = scmp.eq.s32.totalorder %s25, 1
    %p195 = por %p193, %p194
    %p197 = scmp.ne.s32.totalorder %s182, %s196
    %p198 = scmp.eq.s32.totalorder %s25, 0
    %p199 = por %p197, %p198
    %s201 = sadd.s32 %s200, 1
    %p204 = scmp.eq.s32.totalorder %s19, 1
    %p205 = scmp.ne.s32.totalorder %s200, %s202
    %p206 = scmp.eq.s32.totalorder %s19, 0
    %p207 = por %p205, %p206
    %p208 = scmp.ne.s32.totalorder %s200, %s202
    %p209 = scmp.eq.s32.totalorder %s24, 1
    %p210 = por %p208, %p209
    %p211 = scmp.ne.s32.totalorder %s202, %s203
    %p212 = scmp.eq.s32.totalorder %s24, 0
    %p213 = por %p211, %p212
    %p214 = scmp.ne.s32.totalorder %s202, %s203
    %p215 = scmp.eq.s32.totalorder %s25, 1
    %p216 = por %p214, %p215
    %p218 = scmp.ne.s32.totalorder %s203, %s217
    %p219 = scmp.eq.s32.totalorder %s25, 0
    %p220 = por %p218, %p219
    %s222 = sadd.s32 %s221, 1
    %p225 = scmp.eq.s32.totalorder %s19, 1
    %p226 = scmp.ne.s32.totalorder %s221, %s223
    %p227 = scmp.eq.s32.totalorder %s19, 0
    %p228 = por %p226, %p227
    %p229 = scmp.ne.s32.totalorder %s221, %s223
    %p230 = scmp.eq.s32.totalorder %s24, 1
    %p231 = por %p229, %p230
    %p232 = scmp.ne.s32.totalorder %s223, %s224
    %p233 = scmp.eq.s32.totalorder %s24, 0
    %p234 = por %p232, %p233
    %p235 = scmp.ne.s32.totalorder %s223, %s224
    %p236 = scmp.eq.s32.totalorder %s25, 1
    %p237 = por %p235, %p236
    %p239 = scmp.ne.s32.totalorder %s224, %s238
    %p240 = scmp.eq.s32.totalorder %s25, 0
    %p241 = por %p239, %p240
    %s243 = sadd.s32 %s242, 1
    %p246 = scmp.eq.s32.totalorder %s19, 1
    %p247 = scmp.ne.s32.totalorder %s242, %s244
    %p248 = scmp.eq.s32.totalorder %s19, 0
    %p249 = por %p247, %p248
    %p250 = scmp.ne.s32.totalorder %s242, %s244
    %p251 = scmp.eq.s32.totalorder %s24, 1
    %p252 = por %p250, %p251
    %p253 = scmp.ne.s32.totalorder %s244, %s245
    %p254 = scmp.eq.s32.totalorder %s24, 0
    %p255 = por %p253, %p254
    %p256 = scmp.ne.s32.totalorder %s244, %s245
    %p257 = scmp.eq.s32.totalorder %s25, 1
    %p258 = por %p256, %p257
    %p260 = scmp.ne.s32.totalorder %s245, %s259
    %p261 = scmp.eq.s32.totalorder %s25, 0
    %p262 = por %p260, %p261
    %s264 = sadd.s32 %s263, 1
    %p267 = scmp.eq.s32.totalorder %s19, 1
    %p268 = scmp.ne.s32.totalorder %s263, %s265
    %p269 = scmp.eq.s32.totalorder %s19, 0
    %p270 = por %p268, %p269
    %p271 = scmp.ne.s32.totalorder %s263, %s265
    %p272 = scmp.eq.s32.totalorder %s24, 1
    %p273 = por %p271, %p272
    %p274 = scmp.ne.s32.totalorder %s265, %s266
    %p275 = scmp.eq.s32.totalorder %s24, 0
    %p276 = por %p274, %p275
    %p277 = scmp.ne.s32.totalorder %s265, %s266
    %p278 = scmp.eq.s32.totalorder %s25, 1
    %p279 = por %p277, %p278
    %p281 = scmp.ne.s32.totalorder %s266, %s280
    %p282 = scmp.eq.s32.totalorder %s25, 0
    %p283 = por %p281, %p282
    %s285 = sadd.s32 %s284, 1
    %p288 = scmp.eq.s32.totalorder %s19, 1
    %p289 = scmp.ne.s32.totalorder %s284, %s286
    %p290 = scmp.eq.s32.totalorder %s19, 0
    %p291 = por %p289, %p290
    %p292 = scmp.ne.s32.totalorder %s284, %s286
    %p293 = scmp.eq.s32.totalorder %s24, 1
    %p294 = por %p292, %p293
    %p295 = scmp.ne.s32.totalorder %s286, %s287
    %p296 = scmp.eq.s32.totalorder %s24, 0
    %p297 = por %p295, %p296
    %p298 = scmp.ne.s32.totalorder %s286, %s287
    %p299 = scmp.eq.s32.totalorder %s25, 1
    %p300 = por %p298, %p299
    %p302 = scmp.ne.s32.totalorder %s287, %s301
    %p303 = scmp.eq.s32.totalorder %s25, 0
    %p304 = por %p302, %p303
    %s305 = ssub.s32 %s19, %s26
    %p306 = scmp.eq.s32.totalorder %s305, 0
    %s308 = sadd.s32 %s307, 1
    %s309 = scalar_select %p306, %s307, %s308
    %p312 = pneg %p306
    %p313 = scmp.eq.s32.totalorder %s19, 1
    %p314 = por %p312, %p313
    %p315 = scmp.ne.s32.totalorder %s307, %s310
    %p316 = scmp.eq.s32.totalorder %s19, 0
    %p317 = por %p315, %p316
    %p318 = scmp.ne.s32.totalorder %s307, %s310
    %p319 = scmp.eq.s32.totalorder %s24, 1
    %p320 = por %p318, %p319
    %p321 = scmp.ne.s32.totalorder %s310, %s311
    %p322 = scmp.eq.s32.totalorder %s24, 0
    %p323 = por %p321, %p322
    %p324 = scmp.ne.s32.totalorder %s310, %s311
    %p325 = scmp.eq.s32.totalorder %s25, 1
    %p326 = por %p324, %p325
    %p328 = scmp.ne.s32.totalorder %s311, %s327
    %p329 = scmp.eq.s32.totalorder %s25, 0
    %p330 = por %p328, %p329
    %p331 = scmp.le.s32.totalorder 1, %s19
    %p332 = scmp.lt.s32.totalorder %s19, 3
    %p333 = pnand %p331, %p332
    %p334 = pneg %p333
    // Predicated region
    $region9: #{encoder_forward.1} parent=5 // pred_check
      _
    $region10: #{encoder_forward.1} parent=5 // pred_check_branch
      %336 = sbr.rel (%p333) target = $region12
    $region11: #{encoder_forward.1} parent=5 // pred_region
      %s337 = ssub.s32 %s19, 1
      // Predicated region
      $region13: #{encoder_forward.1} parent=11 // pred_check
        %p338 = pneg %p66
      $region14: #{encoder_forward.1} parent=11 // pred_check_branch
        %340 = sbr.rel (%p338) target = $region16
      $region15: #{encoder_forward.1} parent=11 // pred_region
        _
      $region16: #{encoder_forward.1} parent=11 // pred_fallthru
        _
      // Predicated region
      $region17: #{encoder_forward.1} parent=11 // pred_check
        %p341 = pneg %p87
      $region18: #{encoder_forward.1} parent=11 // pred_check_branch
        %343 = sbr.rel (%p341) target = $region20
      $region19: #{encoder_forward.1} parent=11 // pred_region
        _
      $region20: #{encoder_forward.1} parent=11 // pred_fallthru
        _
      // Predicated region
      $region21: #{encoder_forward.1} parent=11 // pred_check
        %p344 = pneg %p108
      $region22: #{encoder_forward.1} parent=11 // pred_check_branch
        %346 = sbr.rel (%p344) target = $region24
      $region23: #{encoder_forward.1} parent=11 // pred_region
        _
      $region24: #{encoder_forward.1} parent=11 // pred_fallthru
        _
      // Predicated region
      $region25: #{encoder_forward.1} parent=11 // pred_check
        %p347 = pneg %p129
      $region26: #{encoder_forward.1} parent=11 // pred_check_branch
        %349 = sbr.rel (%p347) target = $region28
      $region27: #{encoder_forward.1} parent=11 // pred_region
        _
      $region28: #{encoder_forward.1} parent=11 // pred_fallthru
        _
      // Predicated region
      $region29: #{encoder_forward.1} parent=11 // pred_check
        %p350 = pneg %p150
      $region30: #{encoder_forward.1} parent=11 // pred_check_branch
        %352 = sbr.rel (%p350) target = $region32
      $region31: #{encoder_forward.1} parent=11 // pred_region
        _
      $region32: #{encoder_forward.1} parent=11 // pred_fallthru
        _
      // Predicated region
      $region33: #{encoder_forward.1} parent=11 // pred_check
        %p353 = pneg %p171
      $region34: #{encoder_forward.1} parent=11 // pred_check_branch
        %355 = sbr.rel (%p353) target = $region36
      $region35: #{encoder_forward.1} parent=11 // pred_region
        _
      $region36: #{encoder_forward.1} parent=11 // pred_fallthru
        _
      // Predicated region
      $region37: #{encoder_forward.1} parent=11 // pred_check
        %p356 = pneg %p192
      $region38: #{encoder_forward.1} parent=11 // pred_check_branch
        %358 = sbr.rel (%p356) target = $region40
      $region39: #{encoder_forward.1} parent=11 // pred_region
        _
      $region40: #{encoder_forward.1} parent=11 // pred_fallthru
        _
      // Predicated region
      $region41: #{encoder_forward.1} parent=11 // pred_check
        %p359 = pneg %p213
      $region42: #{encoder_forward.1} parent=11 // pred_check_branch
        %361 = sbr.rel (%p359) target = $region44
      $region43: #{encoder_forward.1} parent=11 // pred_region
        _
      $region44: #{encoder_forward.1} parent=11 // pred_fallthru
        _
      // Predicated region
      $region45: #{encoder_forward.1} parent=11 // pred_check
        %p362 = pneg %p234
      $region46: #{encoder_forward.1} parent=11 // pred_check_branch
        %364 = sbr.rel (%p362) target = $region48
      $region47: #{encoder_forward.1} parent=11 // pred_region
        _
      $region48: #{encoder_forward.1} parent=11 // pred_fallthru
        _
      // Predicated region
      $region49: #{encoder_forward.1} parent=11 // pred_check
        %p365 = pneg %p255
      $region50: #{encoder_forward.1} parent=11 // pred_check_branch
        %367 = sbr.rel (%p365) target = $region52
      $region51: #{encoder_forward.1} parent=11 // pred_region
        _
      $region52: #{encoder_forward.1} parent=11 // pred_fallthru
        _
      // Predicated region
      $region53: #{encoder_forward.1} parent=11 // pred_check
        %p368 = pneg %p276
      $region54: #{encoder_forward.1} parent=11 // pred_check_branch
        %370 = sbr.rel (%p368) target = $region56
      $region55: #{encoder_forward.1} parent=11 // pred_region
        _
      $region56: #{encoder_forward.1} parent=11 // pred_fallthru
        _
      // Predicated region
      $region57: #{encoder_forward.1} parent=11 // pred_check
        %p371 = pneg %p297
      $region58: #{encoder_forward.1} parent=11 // pred_check_branch
        %373 = sbr.rel (%p371) target = $region60
      $region59: #{encoder_forward.1} parent=11 // pred_region
        _
      $region60: #{encoder_forward.1} parent=11 // pred_fallthru
        _
    $region12: #{encoder_forward.1} parent=5 // pred_fallthru
      _
    %p374 = scmp.lt.s32.totalorder %s19, 2
    // Predicated region
    $region61: #{encoder_forward.1} parent=5 // pred_check
      %p375 = pneg %p374
    $region62: #{encoder_forward.1} parent=5 // pred_check_branch
      %377 = sbr.rel (%p375) target = $region64
    $region63: #{encoder_forward.1} parent=5 // pred_region
      // Predicated region
      $region65: #{encoder_forward.1} parent=63 // pred_check
        %p378 = pneg %p39
      $region66: #{encoder_forward.1} parent=63 // pred_check_branch
        %380 = sbr.rel (%p378) target = $region68
      $region67: #{encoder_forward.1} parent=63 // pred_region
        %p381 = scmp.lt.s32.totalorder %s19, 1
        %s382 = scalar_select %p381, %s19, 1
        %s383 = smul.addr %s382, 64
        %s384 = smul.addr %s383, 4
        %s385 = scalar_lea.vmem %s0, %s384
      $region68: #{encoder_forward.1} parent=63 // pred_fallthru
        _
    $region64: #{encoder_forward.1} parent=5 // pred_fallthru
      _
    %p386 = scmp.le.s32.totalorder 1, %s19
    %p387 = scmp.lt.s32.totalorder %s19, 3
    %p388 = pnand %p386, %p387
    %p389 = pneg %p388
    // Predicated region
    $region69: #{encoder_forward.1} parent=5 // pred_check
      _
    $region70: #{encoder_forward.1} parent=5 // pred_check_branch
      %391 = sbr.rel (%p388) target = $region72
    $region71: #{encoder_forward.1} parent=5 // pred_region
      %s392 = ssub.s32 %s19, 1
      %p393 = scmp.lt.s32.totalorder %s24, 1
      %s394 = scalar_select %p393, %s24, 1
      %s395 = smul.addr %s394, 64
      %s396 = smul.addr %s395, 4
      %s397 = scalar_lea.vmem %s0, %s396
      %p398 = pneg %p45
      %p399 = pneg %p42
      %p400 = pneg %p66
      %p401 = pneg %p63
      %p402 = pneg %p87
      %p403 = pneg %p84
      %p404 = pneg %p108
      %p405 = pneg %p105
      %p406 = pneg %p129
      %p407 = pneg %p126
      %p408 = pneg %p150
      %p409 = pneg %p147
      %p410 = pneg %p171
      %p411 = pneg %p168
      %p412 = pneg %p192
      %p413 = pneg %p189
      %p414 = pneg %p213
      %p415 = pneg %p210
      %p416 = pneg %p234
      %p417 = pneg %p231
      %p418 = pneg %p255
      %p419 = pneg %p252
      %p420 = pneg %p276
      %p421 = pneg %p273
      %p422 = pneg %p297
      %p423 = pneg %p294
      %p424 = pneg %p323
      %p425 = pneg %p320
      %p426 = scmp.lt.s32.totalorder %s24, 1
      %s427 = scalar_select %p426, %s24, 1
      %s428 = scalar_lea.vmem %s13, %s427
      %p429 = scmp.lt.s32.totalorder %s24, 1
      %s430 = scalar_select %p429, %s24, 1
      %s431 = smul.addr %s430, 64
      %s432 = smul.addr %s431, 4
      %s433 = scalar_lea.vmem %s0, %s432
      %p434 = scmp.lt.s32.totalorder %s24, 1
      %s435 = scalar_select %p434, %s24, 1
      %s436 = scalar_lea.vmem %s13, %s435
      %v438 = vld [vmem:[%s433] sm:$0xf]
      %v439 = vld [vmem:[%s433 + $0x4] sm:$0xf]
      %v440 = vld [vmem:[%s433 + $0x8] sm:$0xf]
      %v441 = vld [vmem:[%s433 + $0xc] sm:$0xf]
      %v442 = vld [vmem:[%s433 + $0x10] sm:$0xf]
      %v443 = vld [vmem:[%s433 + $0x14] sm:$0xf]
      %v444 = vld [vmem:[%s433 + $0x18] sm:$0xf]
      %v445 = vld [vmem:[%s433 + $0x1c] sm:$0xf]
      %v446 = vld [vmem:[%s433 + $0x20] sm:$0xf]
      %v447 = vld [vmem:[%s433 + $0x24] sm:$0xf]
      %v448 = vld [vmem:[%s433 + $0x28] sm:$0xf]
      %v449 = vld [vmem:[%s433 + $0x2c] sm:$0xf]
      %v450 = vld [vmem:[%s433 + $0x30] sm:$0xf]
      %v451 = vld [vmem:[%s433 + $0x34] sm:$0xf]
      %v452 = vld [vmem:[%s433 + $0x38] sm:$0xf]
      %v453 = vld [vmem:[%s433 + $0x3c] sm:$0xf]
      %v454 = vld [vmem:[%s433 + $0x40] sm:$0xf]
      %v455 = vld [vmem:[%s433 + $0x44] sm:$0xf]
      %v456 = vld [vmem:[%s433 + $0x48] sm:$0xf]
      %v457 = vld [vmem:[%s433 + $0x4c] sm:$0xf]
      %v458 = vld [vmem:[%s433 + $0x50] sm:$0xf]
      %v459 = vld [vmem:[%s433 + $0x54] sm:$0xf]
      %v460 = vld [vmem:[%s433 + $0x58] sm:$0xf]
      %v461 = vld [vmem:[%s433 + $0x5c] sm:$0xf]
      %v462 = vld [vmem:[%s433 + $0x60] sm:$0xf]
      %v463 = vld [vmem:[%s433 + $0x64] sm:$0xf]
      %v464 = vld [vmem:[%s433 + $0x68] sm:$0xf]
      %v465 = vld [vmem:[%s433 + $0x6c] sm:$0xf]
      %v466 = vld [vmem:[%s433 + $0x70] sm:$0xf]
      %v467 = vld [vmem:[%s433 + $0x74] sm:$0xf]
      %v468 = vld [vmem:[%s433 + $0x78] sm:$0xf]
      %v469 = vld [vmem:[%s433 + $0x7c] sm:$0xf]
      %v470 = vld [vmem:[%s433 + $0x80] sm:$0xf]
      %v471 = vld [vmem:[%s433 + $0x84] sm:$0xf]
      %v472 = vld [vmem:[%s433 + $0x88] sm:$0xf]
      %v473 = vld [vmem:[%s433 + $0x8c] sm:$0xf]
      %v474 = vld [vmem:[%s433 + $0x90] sm:$0xf]
      %v475 = vld [vmem:[%s433 + $0x94] sm:$0xf]
      %v476 = vld [vmem:[%s433 + $0x98] sm:$0xf]
      %v477 = vld [vmem:[%s433 + $0x9c] sm:$0xf]
      %v478 = vld [vmem:[%s433 + $0xa0] sm:$0xf]
      %v479 = vld [vmem:[%s433 + $0xa4] sm:$0xf]
      %v480 = vld [vmem:[%s433 + $0xa8] sm:$0xf]
      %v481 = vld [vmem:[%s433 + $0xac] sm:$0xf]
      %v482 = vld [vmem:[%s433 + $0xb0] sm:$0xf]
      %v483 = vld [vmem:[%s433 + $0xb4] sm:$0xf]
      %v484 = vld [vmem:[%s433 + $0xb8] sm:$0xf]
      %v485 = vld [vmem:[%s433 + $0xbc] sm:$0xf]
      %v486 = vld [vmem:[%s433 + $0xc0] sm:$0xf]
      %v487 = vld [vmem:[%s433 + $0xc4] sm:$0xf]
      %v488 = vld [vmem:[%s433 + $0xc8] sm:$0xf]
      %v489 = vld [vmem:[%s433 + $0xcc] sm:$0xf]
      %v490 = vld [vmem:[%s433 + $0xd0] sm:$0xf]
      %v491 = vld [vmem:[%s433 + $0xd4] sm:$0xf]
      %v492 = vld [vmem:[%s433 + $0xd8] sm:$0xf]
      %v493 = vld [vmem:[%s433 + $0xdc] sm:$0xf]
      %v494 = vld [vmem:[%s433 + $0xe0] sm:$0xf]
      %v495 = vld [vmem:[%s433 + $0xe4] sm:$0xf]
      %v496 = vld [vmem:[%s433 + $0xe8] sm:$0xf]
      %v497 = vld [vmem:[%s433 + $0xec] sm:$0xf]
      %v498 = vld [vmem:[%s433 + $0xf0] sm:$0xf]
      %v499 = vld [vmem:[%s433 + $0xf4] sm:$0xf]
      %v500 = vld [vmem:[%s433 + $0xf8] sm:$0xf]
      %v501 = vld [vmem:[%s433 + $0xfc] sm:$0xf]
      %v502 = vld [vmem:[%s1] sm:$0xff]
      %v503 = vld [vmem:[%s1 + $0x8] sm:$0xff]
      %v504 = vld [vmem:[%s1 + $0x10] sm:$0xff]
      %v505 = vld [vmem:[%s1 + $0x18] sm:$0xff]
      %v506 = vld [vmem:[%s1 + $0x20] sm:$0xff]
      %v507 = vld [vmem:[%s1 + $0x28] sm:$0xff]
      %v508 = vld [vmem:[%s1 + $0x30] sm:$0xff]
      %v509 = vld [vmem:[%s1 + $0x38] sm:$0xff]
      %v510 = vld [vmem:[%s1 + $0x40] sm:$0xff]
      %v511 = vld [vmem:[%s1 + $0x48] sm:$0xff]
      %v512 = vld [vmem:[%s1 + $0x50] sm:$0xff]
      %v513 = vld [vmem:[%s1 + $0x58] sm:$0xff]
      %v514 = vld [vmem:[%s1 + $0x60] sm:$0xff]
      %v515 = vld [vmem:[%s1 + $0x68] sm:$0xff]
      %v516 = vld [vmem:[%s1 + $0x70] sm:$0xff]
      %v517 = vld [vmem:[%s1 + $0x78] sm:$0xff]
      %v518 = vld [vmem:[%s2] sm:$0x3]
      %v520 = vlaneseq
      %v521 = vshrl.u32 %v520, 7
      %v522 = vsub.s32 0, %v521
      %v523 = vrot.slane %v518, %v522
      %v524 = vlaneseq
      %v525 = vshrl.u32 %v524, 7
      %v526 = vsub.s32 1, %v525
      %v527 = vrot.slane %v518, %v526
      %v594 = vunpack.c.l.b16 %v438
      %v595 = vunpack.c.l.b16 %v439
      %v596 = vunpack.c.l.b16 %v440
      %v597 = vunpack.c.l.b16 %v441
      %v598 = vunpack.c.l.b16 %v442
      %v599 = vunpack.c.l.b16 %v443
      %v600 = vunpack.c.l.b16 %v444
      %v601 = vunpack.c.l.b16 %v445
      %v602 = vunpack.c.l.b16 %v446
      %v603 = vunpack.c.l.b16 %v447
      %v604 = vunpack.c.l.b16 %v448
      %v605 = vunpack.c.l.b16 %v449
      %v606 = vunpack.c.l.b16 %v450
      %v607 = vunpack.c.l.b16 %v451
      %v608 = vunpack.c.l.b16 %v452
      %v609 = vunpack.c.l.b16 %v453
      %v610 = vunpack.c.l.b16 %v454
      %v611 = vunpack.c.l.b16 %v455
      %v612 = vunpack.c.l.b16 %v456
      %v613 = vunpack.c.l.b16 %v457
      %v614 = vunpack.c.l.b16 %v458
      %v615 = vunpack.c.l.b16 %v459
      %v616 = vunpack.c.l.b16 %v460
      %v617 = vunpack.c.l.b16 %v461
      %v618 = vunpack.c.l.b16 %v462
      %v619 = vunpack.c.l.b16 %v463
      %v620 = vunpack.c.l.b16 %v464
      %v621 = vunpack.c.l.b16 %v465
      %v622 = vunpack.c.l.b16 %v466
      %v623 = vunpack.c.l.b16 %v467
      %v624 = vunpack.c.l.b16 %v468
      %v625 = vunpack.c.l.b16 %v469
      %v626 = vunpack.c.l.b16 %v470
      %v627 = vunpack.c.l.b16 %v471
      %v628 = vunpack.c.l.b16 %v472
      %v629 = vunpack.c.l.b16 %v473
      %v630 = vunpack.c.l.b16 %v474
      %v631 = vunpack.c.l.b16 %v475
      %v632 = vunpack.c.l.b16 %v476
      %v633 = vunpack.c.l.b16 %v477
      %v634 = vunpack.c.l.b16 %v478
      %v635 = vunpack.c.l.b16 %v479
      %v636 = vunpack.c.l.b16 %v480
      %v637 = vunpack.c.l.b16 %v481
      %v638 = vunpack.c.l.b16 %v482
      %v639 = vunpack.c.l.b16 %v483
      %v640 = vunpack.c.l.b16 %v484
      %v641 = vunpack.c.l.b16 %v485
      %v642 = vunpack.c.l.b16 %v486
      %v643 = vunpack.c.l.b16 %v487
      %v644 = vunpack.c.l.b16 %v488
      %v645 = vunpack.c.l.b16 %v489
      %v646 = vunpack.c.l.b16 %v490
      %v647 = vunpack.c.l.b16 %v491
      %v648 = vunpack.c.l.b16 %v492
      %v649 = vunpack.c.l.b16 %v493
      %v650 = vunpack.c.l.b16 %v494
      %v651 = vunpack.c.l.b16 %v495
      %v652 = vunpack.c.l.b16 %v496
      %v653 = vunpack.c.l.b16 %v497
      %v654 = vunpack.c.l.b16 %v498
      %v655 = vunpack.c.l.b16 %v499
      %v656 = vunpack.c.l.b16 %v500
      %v657 = vunpack.c.l.b16 %v501
      %v658 = vpack.c.b16 %v595, %v594
      %v659 = vpack.c.b16 %v597, %v596
      %v660 = vpack.c.b16 %v599, %v598
      %v661 = vpack.c.b16 %v601, %v600
      %v662 = vpack.c.b16 %v603, %v602
      %v663 = vpack.c.b16 %v605, %v604
      %v664 = vpack.c.b16 %v607, %v606
      %v665 = vpack.c.b16 %v609, %v608
      %v666 = vpack.c.b16 %v611, %v610
      %v667 = vpack.c.b16 %v613, %v612
      %v668 = vpack.c.b16 %v615, %v614
      %v669 = vpack.c.b16 %v617, %v616
      %v670 = vpack.c.b16 %v619, %v618
      %v671 = vpack.c.b16 %v621, %v620
      %v672 = vpack.c.b16 %v623, %v622
      %v673 = vpack.c.b16 %v625, %v624
      %v674 = vpack.c.b16 %v627, %v626
      %v675 = vpack.c.b16 %v629, %v628
      %v676 = vpack.c.b16 %v631, %v630
      %v677 = vpack.c.b16 %v633, %v632
      %v678 = vpack.c.b16 %v635, %v634
      %v679 = vpack.c.b16 %v637, %v636
      %v680 = vpack.c.b16 %v639, %v638
      %v681 = vpack.c.b16 %v641, %v640
      %v682 = vpack.c.b16 %v643, %v642
      %v683 = vpack.c.b16 %v645, %v644
      %v684 = vpack.c.b16 %v647, %v646
      %v685 = vpack.c.b16 %v649, %v648
      %v686 = vpack.c.b16 %v651, %v650
      %v687 = vpack.c.b16 %v653, %v652
      %v688 = vpack.c.b16 %v655, %v654
      %v689 = vpack.c.b16 %v657, %v656
      %v738 = vunpack.c.l.b16 %v502
      %v739 = vunpack.c.h.b16 %v502
      %v740 = vunpack.c.l.b16 %v503
      %v741 = vunpack.c.h.b16 %v503
      %v742 = vunpack.c.l.b16 %v504
      %v743 = vunpack.c.h.b16 %v504
      %v744 = vunpack.c.l.b16 %v505
      %v745 = vunpack.c.h.b16 %v505
      %v746 = vunpack.c.l.b16 %v506
      %v747 = vunpack.c.h.b16 %v506
      %v748 = vunpack.c.l.b16 %v507
      %v749 = vunpack.c.h.b16 %v507
      %v750 = vunpack.c.l.b16 %v508
      %v751 = vunpack.c.h.b16 %v508
      %v752 = vunpack.c.l.b16 %v509
      %v753 = vunpack.c.h.b16 %v509
      %v754 = vunpack.c.l.b16 %v510
      %v755 = vunpack.c.h.b16 %v510
      %v756 = vunpack.c.l.b16 %v511
      %v757 = vunpack.c.h.b16 %v511
      %v758 = vunpack.c.l.b16 %v512
      %v759 = vunpack.c.h.b16 %v512
      %v760 = vunpack.c.l.b16 %v513
      %v761 = vunpack.c.h.b16 %v513
      %v762 = vunpack.c.l.b16 %v514
      %v763 = vunpack.c.h.b16 %v514
      %v764 = vunpack.c.l.b16 %v515
      %v765 = vunpack.c.h.b16 %v515
      %v766 = vunpack.c.l.b16 %v516
      %v767 = vunpack.c.h.b16 %v516
      %v768 = vunpack.c.l.b16 %v517
      %v769 = vunpack.c.h.b16 %v517
      %v770 = vpack.c.b16 %v740, %v738
      %v771 = vpack.c.b16 %v741, %v739
      %v772 = vpack.c.b16 %v744, %v742
      %v773 = vpack.c.b16 %v745, %v743
      %v774 = vpack.c.b16 %v748, %v746
      %v775 = vpack.c.b16 %v749, %v747
      %v776 = vpack.c.b16 %v752, %v750
      %v777 = vpack.c.b16 %v753, %v751
      %v778 = vpack.c.b16 %v756, %v754
      %v779 = vpack.c.b16 %v757, %v755
      %v780 = vpack.c.b16 %v760, %v758
      %v781 = vpack.c.b16 %v761, %v759
      %v782 = vpack.c.b16 %v764, %v762
      %v783 = vpack.c.b16 %v765, %v763
      %v784 = vpack.c.b16 %v768, %v766
      %v785 = vpack.c.b16 %v769, %v767
      %802 = vmatprep.subr.bf16.mxu0 %v771
      %803 = vmatpush1.bf16.msra.mxu0 %v770
      %804 = vmatprep.subr.bf16.mxu0 %v773
      %805 = vmatpush1.bf16.msra.mxu0 %v772
      %806 = vmatprep.subr.bf16.mxu0 %v775
      %807 = vmatpush1.bf16.msra.mxu0 %v774
      %808 = vmatprep.subr.bf16.mxu0 %v777
      %809 = vmatpush1.bf16.msra.mxu0 %v776
      %810 = vmatprep.subr.bf16.mxu0 %v779
      %811 = vmatpush1.bf16.msra.mxu0 %v778
      %812 = vmatprep.subr.bf16.mxu0 %v781
      %813 = vmatpush1.bf16.msra.mxu0 %v780
      %814 = vmatprep.subr.bf16.mxu0 %v783
      %815 = vmatpush1.bf16.msra.mxu0 %v782
      %816 = vmatprep.subr.bf16.mxu0 %v785
      %817 = vmatpush1.bf16.msra.mxu0 %v784
      %818 = vmatprep.subr.bf16.mxu0 0
      %819 = vmatpush1.bf16.msra.mxu0 0
      %820 = vmatprep.subr.bf16.mxu0 0
      %821 = vmatpush1.bf16.msra.mxu0 0
      %822 = vmatprep.subr.bf16.mxu0 0
      %823 = vmatpush1.bf16.msra.mxu0 0
      %824 = vmatprep.subr.bf16.mxu0 0
      %825 = vmatpush1.bf16.msra.mxu0 0
      %826 = vmatprep.subr.bf16.mxu0 0
      %827 = vmatpush1.bf16.msra.mxu0 0
      %828 = vmatprep.subr.bf16.mxu0 0
      %829 = vmatpush1.bf16.msra.mxu0 0
      %830 = vmatprep.subr.bf16.mxu0 0
      %831 = vmatpush1.bf16.msra.mxu0 0
      %832 = vmatprep.subr.bf16.mxu0 0
      %833 = vmatpush1.bf16.msra.mxu0 0
      %834 = vmatprep.mubr.bf16.mxu0 0
      %835 = vmatmul.mubr.bf16.gmra.mrb[0].mxu0 %v658
      %v836 = vpop.f32.mrb[0].mxu0
      %v837 = vadd.f32 %v523, %v836
      %v838 = vpop.f32.mrb[0].mxu0
      %v839 = vadd.f32 %v527, %v838
      %v840 = vpop.f32.mrb[0].mxu0
      %v841 = vadd.f32 %v523, %v840
      %v842 = vpop.f32.mrb[0].mxu0
      %v843 = vadd.f32 %v527, %v842
      %844 = vmatprep.mubr.bf16.mxu0 0
      %845 = vmatmul.mubr.bf16.gmra.mrb[0].mxu0 %v659
      %v846 = vpop.f32.mrb[0].mxu0
      %v847 = vadd.f32 %v523, %v846
      %v848 = vpop.f32.mrb[0].mxu0
      %v849 = vadd.f32 %v527, %v848
      %v850 = vpop.f32.mrb[0].mxu0
      %v851 = vadd.f32 %v523, %v850
      %v852 = vpop.f32.mrb[0].mxu0
      %v853 = vadd.f32 %v527, %v852
      %854 = vmatprep.mubr.bf16.mxu0 0
      %855 = vmatmul.mubr.bf16.gmra.mrb[0].mxu0 %v660
      %v856 = vpop.f32.mrb[0].mxu0
      %v857 = vadd.f32 %v523, %v856
      %v858 = vpop.f32.mrb[0].mxu0
      %v859 = vadd.f32 %v527, %v858
      %v860 = vpop.f32.mrb[0].mxu0
      %v861 = vadd.f32 %v523, %v860
      %v862 = vpop.f32.mrb[0].mxu0
      %v863 = vadd.f32 %v527, %v862
      %864 = vmatprep.mubr.bf16.mxu0 0
      %865 = vmatmul.mubr.bf16.gmra.mrb[0].mxu0 %v661
      %v866 = vpop.f32.mrb[0].mxu0
      %v867 = vadd.f32 %v523, %v866
      %v868 = vpop.f32.mrb[0].mxu0
      %v869 = vadd.f32 %v527, %v868
      %v870 = vpop.f32.mrb[0].mxu0
      %v871 = vadd.f32 %v523, %v870
      %v872 = vpop.f32.mrb[0].mxu0
      %v873 = vadd.f32 %v527, %v872
      %874 = vmatprep.mubr.bf16.mxu0 0
      %875 = vmatmul.mubr.bf16.gmra.mrb[0].mxu0 %v662
      %v876 = vpop.f32.mrb[0].mxu0
      %v877 = vadd.f32 %v523, %v876
      %v878 = vpop.f32.mrb[0].mxu0
      %v879 = vadd.f32 %v527, %v878
      %v880 = vpop.f32.mrb[0].mxu0
      %v881 = vadd.f32 %v523, %v880
      %v882 = vpop.f32.mrb[0].mxu0
      %v883 = vadd.f32 %v527, %v882
      %884 = vmatprep.mubr.bf16.mxu0 0
      %885 = vmatmul.mubr.bf16.gmra.mrb[0].mxu0 %v663
      %v886 = vpop.f32.mrb[0].mxu0
      %v887 = vadd.f32 %v523, %v886
      %v888 = vpop.f32.mrb[0].mxu0
      %v889 = vadd.f32 %v527, %v888
      %v890 = vpop.f32.mrb[0].mxu0
      %v891 = vadd.f32 %v523, %v890
      %v892 = vpop.f32.mrb[0].mxu0
      %v893 = vadd.f32 %v527, %v892
      %894 = vmatprep.mubr.bf16.mxu0 0
      %895 = vmatmul.mubr.bf16.gmra.mrb[0].mxu0 %v664
      %v896 = vpop.f32.mrb[0].mxu0
      %v897 = vadd.f32 %v523, %v896
      %v898 = vpop.f32.mrb[0].mxu0
      %v899 = vadd.f32 %v527, %v898
      %v900 = vpop.f32.mrb[0].mxu0
      %v901 = vadd.f32 %v523, %v900
      %v902 = vpop.f32.mrb[0].mxu0
      %v903 = vadd.f32 %v527, %v902
      %904 = vmatprep.mubr.bf16.mxu0 0
      %905 = vmatmul.mubr.bf16.gmra.mrb[0].mxu0 %v665
      %v906 = vpop.f32.mrb[0].mxu0
      %v907 = vadd.f32 %v523, %v906
      %v908 = vpop.f32.mrb[0].mxu0
      %v909 = vadd.f32 %v527, %v908
      %v910 = vpop.f32.mrb[0].mxu0
      %v911 = vadd.f32 %v523, %v910
      %v912 = vpop.f32.mrb[0].mxu0
      %v913 = vadd.f32 %v527, %v912
      %914 = vmatprep.mubr.bf16.mxu0 0
      %915 = vmatmul.mubr.bf16.gmra.mrb[0].mxu0 %v666
      %v916 = vpop.f32.mrb[0].mxu0
      %v917 = vadd.f32 %v523, %v916
      %v918 = vpop.f32.mrb[0].mxu0
      %v919 = vadd.f32 %v527, %v918
      %v920 = vpop.f32.mrb[0].mxu0
      %v921 = vadd.f32 %v523, %v920
      %v922 = vpop.f32.mrb[0].mxu0
      %v923 = vadd.f32 %v527, %v922
      %924 = vmatprep.mubr.bf16.mxu0 0
      %925 = vmatmul.mubr.bf16.gmra.mrb[0].mxu0 %v667
      %v926 = vpop.f32.mrb[0].mxu0
      %v927 = vadd.f32 %v523, %v926
      %v928 = vpop.f32.mrb[0].mxu0
      %v929 = vadd.f32 %v527, %v928
      %v930 = vpop.f32.mrb[0].mxu0
      %v931 = vadd.f32 %v523, %v930
      %v932 = vpop.f32.mrb[0].mxu0
      %v933 = vadd.f32 %v527, %v932
      %934 = vmatprep.mubr.bf16.mxu0 0
      %935 = vmatmul.mubr.bf16.gmra.mrb[0].mxu0 %v668
      %v936 = vpop.f32.mrb[0].mxu0
      %v937 = vadd.f32 %v523, %v936
      %v938 = vpop.f32.mrb[0].mxu0
      %v939 = vadd.f32 %v527, %v938
      %v940 = vpop.f32.mrb[0].mxu0
      %v941 = vadd.f32 %v523, %v940
      %v942 = vpop.f32.mrb[0].mxu0
      %v943 = vadd.f32 %v527, %v942
      %944 = vmatprep.mubr.bf16.mxu0 0
      %945 = vmatmul.mubr.bf16.gmra.mrb[0].mxu0 %v669
      %v946 = vpop.f32.mrb[0].mxu0
      %v947 = vadd.f32 %v523, %v946
      %v948 = vpop.f32.mrb[0].mxu0
      %v949 = vadd.f32 %v527, %v948
      %v950 = vpop.f32.mrb[0].mxu0
      %v951 = vadd.f32 %v523, %v950
      %v952 = vpop.f32.mrb[0].mxu0
      %v953 = vadd.f32 %v527, %v952
      %954 = vmatprep.mubr.bf16.mxu0 0
      %955 = vmatmul.mubr.bf16.gmra.mrb[0].mxu0 %v670
      %v956 = vpop.f32.mrb[0].mxu0
      %v957 = vadd.f32 %v523, %v956
      %v958 = vpop.f32.mrb[0].mxu0
      %v959 = vadd.f32 %v527, %v958
      %v960 = vpop.f32.mrb[0].mxu0
      %v961 = vadd.f32 %v523, %v960
      %v962 = vpop.f32.mrb[0].mxu0
      %v963 = vadd.f32 %v527, %v962
      %964 = vmatprep.mubr.bf16.mxu0 0
      %965 = vmatmul.mubr.bf16.gmra.mrb[0].mxu0 %v671
      %v966 = vpop.f32.mrb[0].mxu0
      %v967 = vadd.f32 %v523, %v966
      %v968 = vpop.f32.mrb[0].mxu0
      %v969 = vadd.f32 %v527, %v968
      %v970 = vpop.f32.mrb[0].mxu0
      %v971 = vadd.f32 %v523, %v970
      %v972 = vpop.f32.mrb[0].mxu0
      %v973 = vadd.f32 %v527, %v972
      %974 = vmatprep.mubr.bf16.mxu0 0
      %975 = vmatmul.mubr.bf16.gmra.mrb[0].mxu0 %v672
      %v976 = vpop.f32.mrb[0].mxu0
      %v977 = vadd.f32 %v523, %v976
      %v978 = vpop.f32.mrb[0].mxu0
      %v979 = vadd.f32 %v527, %v978
      %v980 = vpop.f32.mrb[0].mxu0
      %v981 = vadd.f32 %v523, %v980
      %v982 = vpop.f32.mrb[0].mxu0
      %v983 = vadd.f32 %v527, %v982
      %984 = vmatprep.mubr.bf16.mxu0 0
      %985 = vmatmul.mubr.bf16.gmra.mrb[0].mxu0 %v673
      %v986 = vpop.f32.mrb[0].mxu0
      %v987 = vadd.f32 %v523, %v986
      %v988 = vpop.f32.mrb[0].mxu0
      %v989 = vadd.f32 %v527, %v988
      %v990 = vpop.f32.mrb[0].mxu0
      %v991 = vadd.f32 %v523, %v990
      %v992 = vpop.f32.mrb[0].mxu0
      %v993 = vadd.f32 %v527, %v992
      %994 = vmatprep.mubr.bf16.mxu0 0
      %995 = vmatmul.mubr.bf16.gmra.mrb[0].mxu0 %v674
      %v996 = vpop.f32.mrb[0].mxu0
      %v997 = vadd.f32 %v523, %v996
      %v998 = vpop.f32.mrb[0].mxu0
      %v999 = vadd.f32 %v527, %v998
      %v1000 = vpop.f32.mrb[0].mxu0
      %v1001 = vadd.f32 %v523, %v1000
      %v1002 = vpop.f32.mrb[0].mxu0
      %v1003 = vadd.f32 %v527, %v1002
      %1004 = vmatprep.mubr.bf16.mxu0 0
      %1005 = vmatmul.mubr.bf16.gmra.mrb[0].mxu0 %v675
      %v1006 = vpop.f32.mrb[0].mxu0
      %v1007 = vadd.f32 %v523, %v1006
      %v1008 = vpop.f32.mrb[0].mxu0
      %v1009 = vadd.f32 %v527, %v1008
      %v1010 = vpop.f32.mrb[0].mxu0
      %v1011 = vadd.f32 %v523, %v1010
      %v1012 = vpop.f32.mrb[0].mxu0
      %v1013 = vadd.f32 %v527, %v1012
      %1014 = vmatprep.mubr.bf16.mxu0 0
      %1015 = vmatmul.mubr.bf16.gmra.mrb[0].mxu0 %v676
      %v1016 = vpop.f32.mrb[0].mxu0
      %v1017 = vadd.f32 %v523, %v1016
      %v1018 = vpop.f32.mrb[0].mxu0
      %v1019 = vadd.f32 %v527, %v1018
      %v1020 = vpop.f32.mrb[0].mxu0
      %v1021 = vadd.f32 %v523, %v1020
      %v1022 = vpop.f32.mrb[0].mxu0
      %v1023 = vadd.f32 %v527, %v1022
      %1024 = vmatprep.mubr.bf16.mxu0 0
      %1025 = vmatmul.mubr.bf16.gmra.mrb[0].mxu0 %v677
      %v1026 = vpop.f32.mrb[0].mxu0
      %v1027 = vadd.f32 %v523, %v1026
      %v1028 = vpop.f32.mrb[0].mxu0
      %v1029 = vadd.f32 %v527, %v1028
      %v1030 = vpop.f32.mrb[0].mxu0
      %v1031 = vadd.f32 %v523, %v1030
      %v1032 = vpop.f32.mrb[0].mxu0
      %v1033 = vadd.f32 %v527, %v1032
      %1034 = vmatprep.mubr.bf16.mxu0 0
      %1035 = vmatmul.mubr.bf16.gmra.mrb[0].mxu0 %v678
      %v1036 = vpop.f32.mrb[0].mxu0
      %v1037 = vadd.f32 %v523, %v1036
      %v1038 = vpop.f32.mrb[0].mxu0
      %v1039 = vadd.f32 %v527, %v1038
      %v1040 = vpop.f32.mrb[0].mxu0
      %v1041 = vadd.f32 %v523, %v1040
      %v1042 = vpop.f32.mrb[0].mxu0
      %v1043 = vadd.f32 %v527, %v1042
      %1044 = vmatprep.mubr.bf16.mxu0 0
      %1045 = vmatmul.mubr.bf16.gmra.mrb[0].mxu0 %v679
      %v1046 = vpop.f32.mrb[0].mxu0
      %v1047 = vadd.f32 %v523, %v1046
      %v1048 = vpop.f32.mrb[0].mxu0
      %v1049 = vadd.f32 %v527, %v1048
      %v1050 = vpop.f32.mrb[0].mxu0
      %v1051 = vadd.f32 %v523, %v1050
      %v1052 = vpop.f32.mrb[0].mxu0
      %v1053 = vadd.f32 %v527, %v1052
      %1054 = vmatprep.mubr.bf16.mxu0 0
      %1055 = vmatmul.mubr.bf16.gmra.mrb[0].mxu0 %v680
      %v1056 = vpop.f32.mrb[0].mxu0
      %v1057 = vadd.f32 %v523, %v1056
      %v1058 = vpop.f32.mrb[0].mxu0
      %v1059 = vadd.f32 %v527, %v1058
      %v1060 = vpop.f32.mrb[0].mxu0
      %v1061 = vadd.f32 %v523, %v1060
      %v1062 = vpop.f32.mrb[0].mxu0
      %v1063 = vadd.f32 %v527, %v1062
      %1064 = vmatprep.mubr.bf16.mxu0 0
      %1065 = vmatmul.mubr.bf16.gmra.mrb[0].mxu0 %v681
      %v1066 = vpop.f32.mrb[0].mxu0
      %v1067 = vadd.f32 %v523, %v1066
      %v1068 = vpop.f32.mrb[0].mxu0
      %v1069 = vadd.f32 %v527, %v1068
      %v1070 = vpop.f32.mrb[0].mxu0
      %v1071 = vadd.f32 %v523, %v1070
      %v1072 = vpop.f32.mrb[0].mxu0
      %v1073 = vadd.f32 %v527, %v1072
      %1074 = vmatprep.mubr.bf16.mxu0 0
      %1075 = vmatmul.mubr.bf16.gmra.mrb[0].mxu0 %v682
      %v1076 = vpop.f32.mrb[0].mxu0
      %v1077 = vadd.f32 %v523, %v1076
      %v1078 = vpop.f32.mrb[0].mxu0
      %v1079 = vadd.f32 %v527, %v1078
      %v1080 = vpop.f32.mrb[0].mxu0
      %v1081 = vadd.f32 %v523, %v1080
      %v1082 = vpop.f32.mrb[0].mxu0
      %v1083 = vadd.f32 %v527, %v1082
      %1084 = vmatprep.mubr.bf16.mxu0 0
      %1085 = vmatmul.mubr.bf16.gmra.mrb[0].mxu0 %v683
      %v1086 = vpop.f32.mrb[0].mxu0
      %v1087 = vadd.f32 %v523, %v1086
      %v1088 = vpop.f32.mrb[0].mxu0
      %v1089 = vadd.f32 %v527, %v1088
      %v1090 = vpop.f32.mrb[0].mxu0
      %v1091 = vadd.f32 %v523, %v1090
      %v1092 = vpop.f32.mrb[0].mxu0
      %v1093 = vadd.f32 %v527, %v1092
      %1094 = vmatprep.mubr.bf16.mxu0 0
      %1095 = vmatmul.mubr.bf16.gmra.mrb[0].mxu0 %v684
      %v1096 = vpop.f32.mrb[0].mxu0
      %v1097 = vadd.f32 %v523, %v1096
      %v1098 = vpop.f32.mrb[0].mxu0
      %v1099 = vadd.f32 %v527, %v1098
      %v1100 = vpop.f32.mrb[0].mxu0
      %v1101 = vadd.f32 %v523, %v1100
      %v1102 = vpop.f32.mrb[0].mxu0
      %v1103 = vadd.f32 %v527, %v1102
      %1104 = vmatprep.mubr.bf16.mxu0 0
      %1105 = vmatmul.mubr.bf16.gmra.mrb[0].mxu0 %v685
      %v1106 = vpop.f32.mrb[0].mxu0
      %v1107 = vadd.f32 %v523, %v1106
      %v1108 = vpop.f32.mrb[0].mxu0
      %v1109 = vadd.f32 %v527, %v1108
      %v1110 = vpop.f32.mrb[0].mxu0
      %v1111 = vadd.f32 %v523, %v1110
      %v1112 = vpop.f32.mrb[0].mxu0
      %v1113 = vadd.f32 %v527, %v1112
      %1114 = vmatprep.mubr.bf16.mxu0 0
      %1115 = vmatmul.mubr.bf16.gmra.mrb[0].mxu0 %v686
      %v1116 = vpop.f32.mrb[0].mxu0
      %v1117 = vadd.f32 %v523, %v1116
      %v1118 = vpop.f32.mrb[0].mxu0
      %v1119 = vadd.f32 %v527, %v1118
      %v1120 = vpop.f32.mrb[0].mxu0
      %v1121 = vadd.f32 %v523, %v1120
      %v1122 = vpop.f32.mrb[0].mxu0
      %v1123 = vadd.f32 %v527, %v1122
      %1124 = vmatprep.mubr.bf16.mxu0 0
      %1125 = vmatmul.mubr.bf16.gmra.mrb[0].mxu0 %v687
      %v1126 = vpop.f32.mrb[0].mxu0
      %v1127 = vadd.f32 %v523, %v1126
      %v1128 = vpop.f32.mrb[0].mxu0
      %v1129 = vadd.f32 %v527, %v1128
      %v1130 = vpop.f32.mrb[0].mxu0
      %v1131 = vadd.f32 %v523, %v1130
      %v1132 = vpop.f32.mrb[0].mxu0
      %v1133 = vadd.f32 %v527, %v1132
      %1134 = vmatprep.mubr.bf16.mxu0 0
      %1135 = vmatmul.mubr.bf16.gmra.mrb[0].mxu0 %v688
      %v1136 = vpop.f32.mrb[0].mxu0
      %v1137 = vadd.f32 %v523, %v1136
      %v1138 = vpop.f32.mrb[0].mxu0
      %v1139 = vadd.f32 %v527, %v1138
      %v1140 = vpop.f32.mrb[0].mxu0
      %v1141 = vadd.f32 %v523, %v1140
      %v1142 = vpop.f32.mrb[0].mxu0
      %v1143 = vadd.f32 %v527, %v1142
      %1144 = vmatprep.mubr.bf16.mxu0 0
      %1145 = vmatmul.mubr.bf16.gmra.mrb[0].mxu0 %v689
      %v1146 = vpop.f32.mrb[0].mxu0
      %v1147 = vadd.f32 %v523, %v1146
      %v1148 = vpop.f32.mrb[0].mxu0
      %v1149 = vadd.f32 %v527, %v1148
      %v1150 = vpop.f32.mrb[0].mxu0
      %v1151 = vadd.f32 %v523, %v1150
      %v1152 = vpop.f32.mrb[0].mxu0
      %v1153 = vadd.f32 %v527, %v1152
      %1154 = vdwg.mxu0
      %v1155 = vmul.f32 %v837, 0.2
      %v1156 = vmul.f32 %v839, 0.2
      %v1157 = vmul.f32 %v841, 0.2
      %v1158 = vmul.f32 %v843, 0.2
      %v1159 = vmul.f32 %v847, 0.2
      %v1160 = vmul.f32 %v849, 0.2
      %v1161 = vmul.f32 %v851, 0.2
      %v1162 = vmul.f32 %v853, 0.2
      %v1163 = vmul.f32 %v857, 0.2
      %v1164 = vmul.f32 %v859, 0.2
      %v1165 = vmul.f32 %v861, 0.2
      %v1166 = vmul.f32 %v863, 0.2
      %v1167 = vmul.f32 %v867, 0.2
      %v1168 = vmul.f32 %v869, 0.2
      %v1169 = vmul.f32 %v871, 0.2
      %v1170 = vmul.f32 %v873, 0.2
      %v1171 = vmul.f32 %v877, 0.2
      %v1172 = vmul.f32 %v879, 0.2
      %v1173 = vmul.f32 %v881, 0.2
      %v1174 = vmul.f32 %v883, 0.2
      %v1175 = vmul.f32 %v887, 0.2
      %v1176 = vmul.f32 %v889, 0.2
      %v1177 = vmul.f32 %v891, 0.2
      %v1178 = vmul.f32 %v893, 0.2
      %v1179 = vmul.f32 %v897, 0.2
      %v1180 = vmul.f32 %v899, 0.2
      %v1181 = vmul.f32 %v901, 0.2
      %v1182 = vmul.f32 %v903, 0.2
      %v1183 = vmul.f32 %v907, 0.2
      %v1184 = vmul.f32 %v909, 0.2
      %v1185 = vmul.f32 %v911, 0.2
      %v1186 = vmul.f32 %v913, 0.2
      %v1187 = vmul.f32 %v917, 0.2
      %v1188 = vmul.f32 %v919, 0.2
      %v1189 = vmul.f32 %v921, 0.2
      %v1190 = vmul.f32 %v923, 0.2
      %v1191 = vmul.f32 %v927, 0.2
      %v1192 = vmul.f32 %v929, 0.2
      %v1193 = vmul.f32 %v931, 0.2
      %v1194 = vmul.f32 %v933, 0.2
      %v1195 = vmul.f32 %v937, 0.2
      %v1196 = vmul.f32 %v939, 0.2
      %v1197 = vmul.f32 %v941, 0.2
      %v1198 = vmul.f32 %v943, 0.2
      %v1199 = vmul.f32 %v947, 0.2
      %v1200 = vmul.f32 %v949, 0.2
      %v1201 = vmul.f32 %v951, 0.2
      %v1202 = vmul.f32 %v953, 0.2
      %v1203 = vmul.f32 %v957, 0.2
      %v1204 = vmul.f32 %v959, 0.2
      %v1205 = vmul.f32 %v961, 0.2
      %v1206 = vmul.f32 %v963, 0.2
      %v1207 = vmul.f32 %v967, 0.2
      %v1208 = vmul.f32 %v969, 0.2
      %v1209 = vmul.f32 %v971, 0.2
      %v1210 = vmul.f32 %v973, 0.2
      %v1211 = vmul.f32 %v977, 0.2
      %v1212 = vmul.f32 %v979, 0.2
      %v1213 = vmul.f32 %v981, 0.2
      %v1214 = vmul.f32 %v983, 0.2
      %v1215 = vmul.f32 %v987, 0.2
      %v1216 = vmul.f32 %v989, 0.2
      %v1217 = vmul.f32 %v991, 0.2
      %v1218 = vmul.f32 %v993, 0.2
      %v1219 = vmul.f32 %v997, 0.2
      %v1220 = vmul.f32 %v999, 0.2
      %v1221 = vmul.f32 %v1001, 0.2
      %v1222 = vmul.f32 %v1003, 0.2
      %v1223 = vmul.f32 %v1007, 0.2
      %v1224 = vmul.f32 %v1009, 0.2
      %v1225 = vmul.f32 %v1011, 0.2
      %v1226 = vmul.f32 %v1013, 0.2
      %v1227 = vmul.f32 %v1017, 0.2
      %v1228 = vmul.f32 %v1019, 0.2
      %v1229 = vmul.f32 %v1021, 0.2
      %v1230 = vmul.f32 %v1023, 0.2
      %v1231 = vmul.f32 %v1027, 0.2
      %v1232 = vmul.f32 %v1029, 0.2
      %v1233 = vmul.f32 %v1031, 0.2
      %v1234 = vmul.f32 %v1033, 0.2
      %v1235 = vmul.f32 %v1037, 0.2
      %v1236 = vmul.f32 %v1039, 0.2
      %v1237 = vmul.f32 %v1041, 0.2
      %v1238 = vmul.f32 %v1043, 0.2
      %v1239 = vmul.f32 %v1047, 0.2
      %v1240 = vmul.f32 %v1049, 0.2
      %v1241 = vmul.f32 %v1051, 0.2
      %v1242 = vmul.f32 %v1053, 0.2
      %v1243 = vmul.f32 %v1057, 0.2
      %v1244 = vmul.f32 %v1059, 0.2
      %v1245 = vmul.f32 %v1061, 0.2
      %v1246 = vmul.f32 %v1063, 0.2
      %v1247 = vmul.f32 %v1067, 0.2
      %v1248 = vmul.f32 %v1069, 0.2
      %v1249 = vmul.f32 %v1071, 0.2
      %v1250 = vmul.f32 %v1073, 0.2
      %v1251 = vmul.f32 %v1077, 0.2
      %v1252 = vmul.f32 %v1079, 0.2
      %v1253 = vmul.f32 %v1081, 0.2
      %v1254 = vmul.f32 %v1083, 0.2
      %v1255 = vmul.f32 %v1087, 0.2
      %v1256 = vmul.f32 %v1089, 0.2
      %v1257 = vmul.f32 %v1091, 0.2
      %v1258 = vmul.f32 %v1093, 0.2
      %v1259 = vmul.f32 %v1097, 0.2
      %v1260 = vmul.f32 %v1099, 0.2
      %v1261 = vmul.f32 %v1101, 0.2
      %v1262 = vmul.f32 %v1103, 0.2
      %v1263 = vmul.f32 %v1107, 0.2
      %v1264 = vmul.f32 %v1109, 0.2
      %v1265 = vmul.f32 %v1111, 0.2
      %v1266 = vmul.f32 %v1113, 0.2
      %v1267 = vmul.f32 %v1117, 0.2
      %v1268 = vmul.f32 %v1119, 0.2
      %v1269 = vmul.f32 %v1121, 0.2
      %v1270 = vmul.f32 %v1123, 0.2
      %v1271 = vmul.f32 %v1127, 0.2
      %v1272 = vmul.f32 %v1129, 0.2
      %v1273 = vmul.f32 %v1131, 0.2
      %v1274 = vmul.f32 %v1133, 0.2
      %v1275 = vmul.f32 %v1137, 0.2
      %v1276 = vmul.f32 %v1139, 0.2
      %v1277 = vmul.f32 %v1141, 0.2
      %v1278 = vmul.f32 %v1143, 0.2
      %v1279 = vmul.f32 %v1147, 0.2
      %v1280 = vmul.f32 %v1149, 0.2
      %v1281 = vmul.f32 %v1151, 0.2
      %v1282 = vmul.f32 %v1153, 0.2
      %v1283 = vmax.f32 %v837, %v1155
      %v1284 = vmax.f32 %v839, %v1156
      %v1285 = vmax.f32 %v841, %v1157
      %v1286 = vmax.f32 %v843, %v1158
      %v1287 = vmax.f32 %v847, %v1159
      %v1288 = vmax.f32 %v849, %v1160
      %v1289 = vmax.f32 %v851, %v1161
      %v1290 = vmax.f32 %v853, %v1162
      %v1291 = vmax.f32 %v857, %v1163
      %v1292 = vmax.f32 %v859, %v1164
      %v1293 = vmax.f32 %v861, %v1165
      %v1294 = vmax.f32 %v863, %v1166
      %v1295 = vmax.f32 %v867, %v1167
      %v1296 = vmax.f32 %v869, %v1168
      %v1297 = vmax.f32 %v871, %v1169
      %v1298 = vmax.f32 %v873, %v1170
      %v1299 = vmax.f32 %v877, %v1171
      %v1300 = vmax.f32 %v879, %v1172
      %v1301 = vmax.f32 %v881, %v1173
      %v1302 = vmax.f32 %v883, %v1174
      %v1303 = vmax.f32 %v887, %v1175
      %v1304 = vmax.f32 %v889, %v1176
      %v1305 = vmax.f32 %v891, %v1177
      %v1306 = vmax.f32 %v893, %v1178
      %v1307 = vmax.f32 %v897, %v1179
      %v1308 = vmax.f32 %v899, %v1180
      %v1309 = vmax.f32 %v901, %v1181
      %v1310 = vmax.f32 %v903, %v1182
      %v1311 = vmax.f32 %v907, %v1183
      %v1312 = vmax.f32 %v909, %v1184
      %v1313 = vmax.f32 %v911, %v1185
      %v1314 = vmax.f32 %v913, %v1186
      %v1315 = vmax.f32 %v917, %v1187
      %v1316 = vmax.f32 %v919, %v1188
      %v1317 = vmax.f32 %v921, %v1189
      %v1318 = vmax.f32 %v923, %v1190
      %v1319 = vmax.f32 %v927, %v1191
      %v1320 = vmax.f32 %v929, %v1192
      %v1321 = vmax.f32 %v931, %v1193
      %v1322 = vmax.f32 %v933, %v1194
      %v1323 = vmax.f32 %v937, %v1195
      %v1324 = vmax.f32 %v939, %v1196
      %v1325 = vmax.f32 %v941, %v1197
      %v1326 = vmax.f32 %v943, %v1198
      %v1327 = vmax.f32 %v947, %v1199
      %v1328 = vmax.f32 %v949, %v1200
      %v1329 = vmax.f32 %v951, %v1201
      %v1330 = vmax.f32 %v953, %v1202
      %v1331 = vmax.f32 %v957, %v1203
      %v1332 = vmax.f32 %v959, %v1204
      %v1333 = vmax.f32 %v961, %v1205
      %v1334 = vmax.f32 %v963, %v1206
      %v1335 = vmax.f32 %v967, %v1207
      %v1336 = vmax.f32 %v969, %v1208
      %v1337 = vmax.f32 %v971, %v1209
      %v1338 = vmax.f32 %v973, %v1210
      %v1339 = vmax.f32 %v977, %v1211
      %v1340 = vmax.f32 %v979, %v1212
      %v1341 = vmax.f32 %v981, %v1213
      %v1342 = vmax.f32 %v983, %v1214
      %v1343 = vmax.f32 %v987, %v1215
      %v1344 = vmax.f32 %v989, %v1216
      %v1345 = vmax.f32 %v991, %v1217
      %v1346 = vmax.f32 %v993, %v1218
      %v1347 = vmax.f32 %v997, %v1219
      %v1348 = vmax.f32 %v999, %v1220
      %v1349 = vmax.f32 %v1001, %v1221
      %v1350 = vmax.f32 %v1003, %v1222
      %v1351 = vmax.f32 %v1007, %v1223
      %v1352 = vmax.f32 %v1009, %v1224
      %v1353 = vmax.f32 %v1011, %v1225
      %v1354 = vmax.f32 %v1013, %v1226
      %v1355 = vmax.f32 %v1017, %v1227
      %v1356 = vmax.f32 %v1019, %v1228
      %v1357 = vmax.f32 %v1021, %v1229
      %v1358 = vmax.f32 %v1023, %v1230
      %v1359 = vmax.f32 %v1027, %v1231
      %v1360 = vmax.f32 %v1029, %v1232
      %v1361 = vmax.f32 %v1031, %v1233
      %v1362 = vmax.f32 %v1033, %v1234
      %v1363 = vmax.f32 %v1037, %v1235
      %v1364 = vmax.f32 %v1039, %v1236
      %v1365 = vmax.f32 %v1041, %v1237
      %v1366 = vmax.f32 %v1043, %v1238
      %v1367 = vmax.f32 %v1047, %v1239
      %v1368 = vmax.f32 %v1049, %v1240
      %v1369 = vmax.f32 %v1051, %v1241
      %v1370 = vmax.f32 %v1053, %v1242
      %v1371 = vmax.f32 %v1057, %v1243
      %v1372 = vmax.f32 %v1059, %v1244
      %v1373 = vmax.f32 %v1061, %v1245
      %v1374 = vmax.f32 %v1063, %v1246
      %v1375 = vmax.f32 %v1067, %v1247
      %v1376 = vmax.f32 %v1069, %v1248
      %v1377 = vmax.f32 %v1071, %v1249
      %v1378 = vmax.f32 %v1073, %v1250
      %v1379 = vmax.f32 %v1077, %v1251
      %v1380 = vmax.f32 %v1079, %v1252
      %v1381 = vmax.f32 %v1081, %v1253
      %v1382 = vmax.f32 %v1083, %v1254
      %v1383 = vmax.f32 %v1087, %v1255
      %v1384 = vmax.f32 %v1089, %v1256
      %v1385 = vmax.f32 %v1091, %v1257
      %v1386 = vmax.f32 %v1093, %v1258
      %v1387 = vmax.f32 %v1097, %v1259
      %v1388 = vmax.f32 %v1099, %v1260
      %v1389 = vmax.f32 %v1101, %v1261
      %v1390 = vmax.f32 %v1103, %v1262
      %v1391 = vmax.f32 %v1107, %v1263
      %v1392 = vmax.f32 %v1109, %v1264
      %v1393 = vmax.f32 %v1111, %v1265
      %v1394 = vmax.f32 %v1113, %v1266
      %v1395 = vmax.f32 %v1117, %v1267
      %v1396 = vmax.f32 %v1119, %v1268
      %v1397 = vmax.f32 %v1121, %v1269
      %v1398 = vmax.f32 %v1123, %v1270
      %v1399 = vmax.f32 %v1127, %v1271
      %v1400 = vmax.f32 %v1129, %v1272
      %v1401 = vmax.f32 %v1131, %v1273
      %v1402 = vmax.f32 %v1133, %v1274
      %v1403 = vmax.f32 %v1137, %v1275
      %v1404 = vmax.f32 %v1139, %v1276
      %v1405 = vmax.f32 %v1141, %v1277
      %v1406 = vmax.f32 %v1143, %v1278
      %v1407 = vmax.f32 %v1147, %v1279
      %v1408 = vmax.f32 %v1149, %v1280
      %v1409 = vmax.f32 %v1151, %v1281
      %v1410 = vmax.f32 %v1153, %v1282
      %v1411 = vpack.c.bf16 %v1285, %v1283
      %v1412 = vpack.c.bf16 %v1286, %v1284
      %v1413 = vpack.c.bf16 %v1289, %v1287
      %v1414 = vpack.c.bf16 %v1290, %v1288
      %v1415 = vpack.c.bf16 %v1293, %v1291
      %v1416 = vpack.c.bf16 %v1294, %v1292
      %v1417 = vpack.c.bf16 %v1297, %v1295
      %v1418 = vpack.c.bf16 %v1298, %v1296
      %v1419 = vpack.c.bf16 %v1301, %v1299
      %v1420 = vpack.c.bf16 %v1302, %v1300
      %v1421 = vpack.c.bf16 %v1305, %v1303
      %v1422 = vpack.c.bf16 %v1306, %v1304
      %v1423 = vpack.c.bf16 %v1309, %v1307
      %v1424 = vpack.c.bf16 %v1310, %v1308
      %v1425 = vpack.c.bf16 %v1313, %v1311
      %v1426 = vpack.c.bf16 %v1314, %v1312
      %v1427 = vpack.c.bf16 %v1317, %v1315
      %v1428 = vpack.c.bf16 %v1318, %v1316
      %v1429 = vpack.c.bf16 %v1321, %v1319
      %v1430 = vpack.c.bf16 %v1322, %v1320
      %v1431 = vpack.c.bf16 %v1325, %v1323
      %v1432 = vpack.c.bf16 %v1326, %v1324
      %v1433 = vpack.c.bf16 %v1329, %v1327
      %v1434 = vpack.c.bf16 %v1330, %v1328
      %v1435 = vpack.c.bf16 %v1333, %v1331
      %v1436 = vpack.c.bf16 %v1334, %v1332
      %v1437 = vpack.c.bf16 %v1337, %v1335
      %v1438 = vpack.c.bf16 %v1338, %v1336
      %v1439 = vpack.c.bf16 %v1341, %v1339
      %v1440 = vpack.c.bf16 %v1342, %v1340
      %v1441 = vpack.c.bf16 %v1345, %v1343
      %v1442 = vpack.c.bf16 %v1346, %v1344
      %v1443 = vpack.c.bf16 %v1349, %v1347
      %v1444 = vpack.c.bf16 %v1350, %v1348
      %v1445 = vpack.c.bf16 %v1353, %v1351
      %v1446 = vpack.c.bf16 %v1354, %v1352
      %v1447 = vpack.c.bf16 %v1357, %v1355
      %v1448 = vpack.c.bf16 %v1358, %v1356
      %v1449 = vpack.c.bf16 %v1361, %v1359
      %v1450 = vpack.c.bf16 %v1362, %v1360
      %v1451 = vpack.c.bf16 %v1365, %v1363
      %v1452 = vpack.c.bf16 %v1366, %v1364
      %v1453 = vpack.c.bf16 %v1369, %v1367
      %v1454 = vpack.c.bf16 %v1370, %v1368
      %v1455 = vpack.c.bf16 %v1373, %v1371
      %v1456 = vpack.c.bf16 %v1374, %v1372
      %v1457 = vpack.c.bf16 %v1377, %v1375
      %v1458 = vpack.c.bf16 %v1378, %v1376
      %v1459 = vpack.c.bf16 %v1381, %v1379
      %v1460 = vpack.c.bf16 %v1382, %v1380
      %v1461 = vpack.c.bf16 %v1385, %v1383
      %v1462 = vpack.c.bf16 %v1386, %v1384
      %v1463 = vpack.c.bf16 %v1389, %v1387
      %v1464 = vpack.c.bf16 %v1390, %v1388
      %v1465 = vpack.c.bf16 %v1393, %v1391
      %v1466 = vpack.c.bf16 %v1394, %v1392
      %v1467 = vpack.c.bf16 %v1397, %v1395
      %v1468 = vpack.c.bf16 %v1398, %v1396
      %v1469 = vpack.c.bf16 %v1401, %v1399
      %v1470 = vpack.c.bf16 %v1402, %v1400
      %v1471 = vpack.c.bf16 %v1405, %v1403
      %v1472 = vpack.c.bf16 %v1406, %v1404
      %v1473 = vpack.c.bf16 %v1409, %v1407
      %v1474 = vpack.c.bf16 %v1410, %v1408
      %v1475 = vld [vmem:[%s3] sm:$0xf]
      %v1476 = vld [vmem:[%s3 + $0x4] sm:$0xf]
      %v1477 = vld [vmem:[%s3 + $0x8] sm:$0xf]
      %v1478 = vld [vmem:[%s3 + $0xc] sm:$0xf]
      %v1479 = vld [vmem:[%s3 + $0x10] sm:$0xf]
      %v1480 = vld [vmem:[%s3 + $0x14] sm:$0xf]
      %v1481 = vld [vmem:[%s3 + $0x18] sm:$0xf]
      %v1482 = vld [vmem:[%s3 + $0x1c] sm:$0xf]
      %v1483 = vld [vmem:[%s3 + $0x20] sm:$0xf]
      %v1484 = vld [vmem:[%s3 + $0x24] sm:$0xf]
      %v1485 = vld [vmem:[%s3 + $0x28] sm:$0xf]
      %v1486 = vld [vmem:[%s3 + $0x2c] sm:$0xf]
      %v1487 = vld [vmem:[%s3 + $0x30] sm:$0xf]
      %v1488 = vld [vmem:[%s3 + $0x34] sm:$0xf]
      %v1489 = vld [vmem:[%s3 + $0x38] sm:$0xf]
      %v1490 = vld [vmem:[%s3 + $0x3c] sm:$0xf]
      %v1491 = vld [vmem:[%s3 + $0x40] sm:$0xf]
      %v1492 = vld [vmem:[%s3 + $0x44] sm:$0xf]
      %v1493 = vld [vmem:[%s3 + $0x48] sm:$0xf]
      %v1494 = vld [vmem:[%s3 + $0x4c] sm:$0xf]
      %v1495 = vld [vmem:[%s3 + $0x50] sm:$0xf]
      %v1496 = vld [vmem:[%s3 + $0x54] sm:$0xf]
      %v1497 = vld [vmem:[%s3 + $0x58] sm:$0xf]
      %v1498 = vld [vmem:[%s3 + $0x5c] sm:$0xf]
      %v1499 = vld [vmem:[%s3 + $0x60] sm:$0xf]
      %v1500 = vld [vmem:[%s3 + $0x64] sm:$0xf]
      %v1501 = vld [vmem:[%s3 + $0x68] sm:$0xf]
      %v1502 = vld [vmem:[%s3 + $0x6c] sm:$0xf]
      %v1503 = vld [vmem:[%s3 + $0x70] sm:$0xf]
      %v1504 = vld [vmem:[%s3 + $0x74] sm:$0xf]
      %v1505 = vld [vmem:[%s3 + $0x78] sm:$0xf]
      %v1506 = vld [vmem:[%s3 + $0x7c] sm:$0xf]
      %v1507 = vld [vmem:[%s4] sm:$0x1]
      %v1509 = vlaneseq
      %v1510 = vshrl.u32 %v1509, 7
      %v1511 = vsub.s32 0, %v1510
      %v1512 = vrot.slane %v1507, %v1511
      %v1546 = vunpack.c.l.b16 %v1475
      %v1547 = vunpack.c.l.b16 %v1476
      %v1548 = vunpack.c.l.b16 %v1477
      %v1549 = vunpack.c.l.b16 %v1478
      %v1550 = vunpack.c.l.b16 %v1479
      %v1551 = vunpack.c.l.b16 %v1480
      %v1552 = vunpack.c.l.b16 %v1481
      %v1553 = vunpack.c.l.b16 %v1482
      %v1554 = vunpack.c.l.b16 %v1483
      %v1555 = vunpack.c.l.b16 %v1484
      %v1556 = vunpack.c.l.b16 %v1485
      %v1557 = vunpack.c.l.b16 %v1486
      %v1558 = vunpack.c.l.b16 %v1487
      %v1559 = vunpack.c.l.b16 %v1488
      %v1560 = vunpack.c.l.b16 %v1489
      %v1561 = vunpack.c.l.b16 %v1490
      %v1562 = vunpack.c.l.b16 %v1491
      %v1563 = vunpack.c.l.b16 %v1492
      %v1564 = vunpack.c.l.b16 %v1493
      %v1565 = vunpack.c.l.b16 %v1494
      %v1566 = vunpack.c.l.b16 %v1495
      %v1567 = vunpack.c.l.b16 %v1496
      %v1568 = vunpack.c.l.b16 %v1497
      %v1569 = vunpack.c.l.b16 %v1498
      %v1570 = vunpack.c.l.b16 %v1499
      %v1571 = vunpack.c.l.b16 %v1500
      %v1572 = vunpack.c.l.b16 %v1501
      %v1573 = vunpack.c.l.b16 %v1502
      %v1574 = vunpack.c.l.b16 %v1503
      %v1575 = vunpack.c.l.b16 %v1504
      %v1576 = vunpack.c.l.b16 %v1505
      %v1577 = vunpack.c.l.b16 %v1506
      %v1578 = vpack.c.b16 %v1547, %v1546
      %v1579 = vpack.c.b16 %v1549, %v1548
      %v1580 = vpack.c.b16 %v1551, %v1550
      %v1581 = vpack.c.b16 %v1553, %v1552
      %v1582 = vpack.c.b16 %v1555, %v1554
      %v1583 = vpack.c.b16 %v1557, %v1556
      %v1584 = vpack.c.b16 %v1559, %v1558
      %v1585 = vpack.c.b16 %v1561, %v1560
      %v1586 = vpack.c.b16 %v1563, %v1562
      %v1587 = vpack.c.b16 %v1565, %v1564
      %v1588 = vpack.c.b16 %v1567, %v1566
      %v1589 = vpack.c.b16 %v1569, %v1568
      %v1590 = vpack.c.b16 %v1571, %v1570
      %v1591 = vpack.c.b16 %v1573, %v1572
      %v1592 = vpack.c.b16 %v1575, %v1574
      %v1593 = vpack.c.b16 %v1577, %v1576
      %1610 = vmatprep.subr.bf16.mxu0 0
      %1611 = vmatpush1.bf16.msra.mxu0 %v1578
      %1612 = vmatprep.subr.bf16.mxu0 0
      %1613 = vmatpush1.bf16.msra.mxu0 %v1579
      %1614 = vmatprep.subr.bf16.mxu0 0
      %1615 = vmatpush1.bf16.msra.mxu0 %v1580
      %1616 = vmatprep.subr.bf16.mxu0 0
      %1617 = vmatpush1.bf16.msra.mxu0 %v1581
      %1618 = vmatprep.subr.bf16.mxu0 0
      %1619 = vmatpush1.bf16.msra.mxu0 %v1582
      %1620 = vmatprep.subr.bf16.mxu0 0
      %1621 = vmatpush1.bf16.msra.mxu0 %v1583
      %1622 = vmatprep.subr.bf16.mxu0 0
      %1623 = vmatpush1.bf16.msra.mxu0 %v1584
      %1624 = vmatprep.subr.bf16.mxu0 0
      %1625 = vmatpush1.bf16.msra.mxu0 %v1585
      %1626 = vmatprep.subr.bf16.mxu0 0
      %1627 = vmatpush1.bf16.msra.mxu0 %v1586
      %1628 = vmatprep.subr.bf16.mxu0 0
      %1629 = vmatpush1.bf16.msra.mxu0 %v1587
      %1630 = vmatprep.subr.bf16.mxu0 0
      %1631 = vmatpush1.bf16.msra.mxu0 %v1588
      %1632 = vmatprep.subr.bf16.mxu0 0
      %1633 = vmatpush1.bf16.msra.mxu0 %v1589
      %1634 = vmatprep.subr.bf16.mxu0 0
      %1635 = vmatpush1.bf16.msra.mxu0 %v1590
      %1636 = vmatprep.subr.bf16.mxu0 0
      %1637 = vmatpush1.bf16.msra.mxu0 %v1591
      %1638 = vmatprep.subr.bf16.mxu0 0
      %1639 = vmatpush1.bf16.msra.mxu0 %v1592
      %1640 = vmatprep.subr.bf16.mxu0 0
      %1641 = vmatpush1.bf16.msra.mxu0 %v1593
      %1642 = vmatprep.mubr.bf16.mxu0 %v1412
      %1643 = vmatmul.mubr.bf16.gmra.mrb[0].mxu0 %v1411
      %v1644 = vpop.f32.mrb[0].mxu0
      %v1645 = vadd.f32 %v1512, %v1644
      %v1646 = vpop.f32.mrb[0].mxu0
      %v1647 = vpop.f32.mrb[0].mxu0
      %v1648 = vadd.f32 %v1512, %v1647
      %v1649 = vpop.f32.mrb[0].mxu0
      %1650 = vmatprep.mubr.bf16.mxu0 %v1414
      %1651 = vmatmul.mubr.bf16.gmra.mrb[0].mxu0 %v1413
      %v1652 = vpop.f32.mrb[0].mxu0
      %v1653 = vadd.f32 %v1512, %v1652
      %v1654 = vpop.f32.mrb[0].mxu0
      %v1655 = vpop.f32.mrb[0].mxu0
      %v1656 = vadd.f32 %v1512, %v1655
      %v1657 = vpop.f32.mrb[0].mxu0
      %1658 = vmatprep.mubr.bf16.mxu0 %v1416
      %1659 = vmatmul.mubr.bf16.gmra.mrb[0].mxu0 %v1415
      %v1660 = vpop.f32.mrb[0].mxu0
      %v1661 = vadd.f32 %v1512, %v1660
      %v1662 = vpop.f32.mrb[0].mxu0
      %v1663 = vpop.f32.mrb[0].mxu0
      %v1664 = vadd.f32 %v1512, %v1663
      %v1665 = vpop.f32.mrb[0].mxu0
      %1666 = vmatprep.mubr.bf16.mxu0 %v1418
      %1667 = vmatmul.mubr.bf16.gmra.mrb[0].mxu0 %v1417
      %v1668 = vpop.f32.mrb[0].mxu0
      %v1669 = vadd.f32 %v1512, %v1668
      %v1670 = vpop.f32.mrb[0].mxu0
      %v1671 = vpop.f32.mrb[0].mxu0
      %v1672 = vadd.f32 %v1512, %v1671
      %v1673 = vpop.f32.mrb[0].mxu0
      %1674 = vmatprep.mubr.bf16.mxu0 %v1420
      %1675 = vmatmul.mubr.bf16.gmra.mrb[0].mxu0 %v1419
      %v1676 = vpop.f32.mrb[0].mxu0
      %v1677 = vadd.f32 %v1512, %v1676
      %v1678 = vpop.f32.mrb[0].mxu0
      %v1679 = vpop.f32.mrb[0].mxu0
      %v1680 = vadd.f32 %v1512, %v1679
      %v1681 = vpop.f32.mrb[0].mxu0
      %1682 = vmatprep.mubr.bf16.mxu0 %v1422
      %1683 = vmatmul.mubr.bf16.gmra.mrb[0].mxu0 %v1421
      %v1684 = vpop.f32.mrb[0].mxu0
      %v1685 = vadd.f32 %v1512, %v1684
      %v1686 = vpop.f32.mrb[0].mxu0
      %v1687 = vpop.f32.mrb[0].mxu0
      %v1688 = vadd.f32 %v1512, %v1687
      %v1689 = vpop.f32.mrb[0].mxu0
      %1690 = vmatprep.mubr.bf16.mxu0 %v1424
      %1691 = vmatmul.mubr.bf16.gmra.mrb[0].mxu0 %v1423
      %v1692 = vpop.f32.mrb[0].mxu0
      %v1693 = vadd.f32 %v1512, %v1692
      %v1694 = vpop.f32.mrb[0].mxu0
      %v1695 = vpop.f32.mrb[0].mxu0
      %v1696 = vadd.f32 %v1512, %v1695
      %v1697 = vpop.f32.mrb[0].mxu0
      %1698 = vmatprep.mubr.bf16.mxu0 %v1426
      %1699 = vmatmul.mubr.bf16.gmra.mrb[0].mxu0 %v1425
      %v1700 = vpop.f32.mrb[0].mxu0
      %v1701 = vadd.f32 %v1512, %v1700
      %v1702 = vpop.f32.mrb[0].mxu0
      %v1703 = vpop.f32.mrb[0].mxu0
      %v1704 = vadd.f32 %v1512, %v1703
      %v1705 = vpop.f32.mrb[0].mxu0
      %1706 = vmatprep.mubr.bf16.mxu0 %v1428
      %1707 = vmatmul.mubr.bf16.gmra.mrb[0].mxu0 %v1427
      %v1708 = vpop.f32.mrb[0].mxu0
      %v1709 = vadd.f32 %v1512, %v1708
      %v1710 = vpop.f32.mrb[0].mxu0
      %v1711 = vpop.f32.mrb[0].mxu0
      %v1712 = vadd.f32 %v1512, %v1711
      %v1713 = vpop.f32.mrb[0].mxu0
      %1714 = vmatprep.mubr.bf16.mxu0 %v1430
      %1715 = vmatmul.mubr.bf16.gmra.mrb[0].mxu0 %v1429
      %v1716 = vpop.f32.mrb[0].mxu0
      %v1717 = vadd.f32 %v1512, %v1716
      %v1718 = vpop.f32.mrb[0].mxu0
      %v1719 = vpop.f32.mrb[0].mxu0
      %v1720 = vadd.f32 %v1512, %v1719
      %v1721 = vpop.f32.mrb[0].mxu0
      %1722 = vmatprep.mubr.bf16.mxu0 %v1432
      %1723 = vmatmul.mubr.bf16.gmra.mrb[0].mxu0 %v1431
      %v1724 = vpop.f32.mrb[0].mxu0
      %v1725 = vadd.f32 %v1512, %v1724
      %v1726 = vpop.f32.mrb[0].mxu0
      %v1727 = vpop.f32.mrb[0].mxu0
      %v1728 = vadd.f32 %v1512, %v1727
      %v1729 = vpop.f32.mrb[0].mxu0
      %1730 = vmatprep.mubr.bf16.mxu0 %v1434
      %1731 = vmatmul.mubr.bf16.gmra.mrb[0].mxu0 %v1433
      %v1732 = vpop.f32.mrb[0].mxu0
      %v1733 = vadd.f32 %v1512, %v1732
      %v1734 = vpop.f32.mrb[0].mxu0
      %v1735 = vpop.f32.mrb[0].mxu0
      %v1736 = vadd.f32 %v1512, %v1735
      %v1737 = vpop.f32.mrb[0].mxu0
      %1738 = vmatprep.mubr.bf16.mxu0 %v1436
      %1739 = vmatmul.mubr.bf16.gmra.mrb[0].mxu0 %v1435
      %v1740 = vpop.f32.mrb[0].mxu0
      %v1741 = vadd.f32 %v1512, %v1740
      %v1742 = vpop.f32.mrb[0].mxu0
      %v1743 = vpop.f32.mrb[0].mxu0
      %v1744 = vadd.f32 %v1512, %v1743
      %v1745 = vpop.f32.mrb[0].mxu0
      %1746 = vmatprep.mubr.bf16.mxu0 %v1438
      %1747 = vmatmul.mubr.bf16.gmra.mrb[0].mxu0 %v1437
      %v1748 = vpop.f32.mrb[0].mxu0
      %v1749 = vadd.f32 %v1512, %v1748
      %v1750 = vpop.f32.mrb[0].mxu0
      %v1751 = vpop.f32.mrb[0].mxu0
      %v1752 = vadd.f32 %v1512, %v1751
      %v1753 = vpop.f32.mrb[0].mxu0
      %1754 = vmatprep.mubr.bf16.mxu0 %v1440
      %1755 = vmatmul.mubr.bf16.gmra.mrb[0].mxu0 %v1439
      %v1756 = vpop.f32.mrb[0].mxu0
      %v1757 = vadd.f32 %v1512, %v1756
      %v1758 = vpop.f32.mrb[0].mxu0
      %v1759 = vpop.f32.mrb[0].mxu0
      %v1760 = vadd.f32 %v1512, %v1759
      %v1761 = vpop.f32.mrb[0].mxu0
      %1762 = vmatprep.mubr.bf16.mxu0 %v1442
      %1763 = vmatmul.mubr.bf16.gmra.mrb[0].mxu0 %v1441
      %v1764 = vpop.f32.mrb[0].mxu0
      %v1765 = vadd.f32 %v1512, %v1764
      %v1766 = vpop.f32.mrb[0].mxu0
      %v1767 = vpop.f32.mrb[0].mxu0
      %v1768 = vadd.f32 %v1512, %v1767
      %v1769 = vpop.f32.mrb[0].mxu0
      %1770 = vmatprep.mubr.bf16.mxu0 %v1444
      %1771 = vmatmul.mubr.bf16.gmra.mrb[0].mxu0 %v1443
      %v1772 = vpop.f32.mrb[0].mxu0
      %v1773 = vadd.f32 %v1512, %v1772
      %v1774 = vpop.f32.mrb[0].mxu0
      %v1775 = vpop.f32.mrb[0].mxu0
      %v1776 = vadd.f32 %v1512, %v1775
      %v1777 = vpop.f32.mrb[0].mxu0
      %1778 = vmatprep.mubr.bf16.mxu0 %v1446
      %1779 = vmatmul.mubr.bf16.gmra.mrb[0].mxu0 %v1445
      %v1780 = vpop.f32.mrb[0].mxu0
      %v1781 = vadd.f32 %v1512, %v1780
      %v1782 = vpop.f32.mrb[0].mxu0
      %v1783 = vpop.f32.mrb[0].mxu0
      %v1784 = vadd.f32 %v1512, %v1783
      %v1785 = vpop.f32.mrb[0].mxu0
      %1786 = vmatprep.mubr.bf16.mxu0 %v1448
      %1787 = vmatmul.mubr.bf16.gmra.mrb[0].mxu0 %v1447
      %v1788 = vpop.f32.mrb[0].mxu0
      %v1789 = vadd.f32 %v1512, %v1788
      %v1790 = vpop.f32.mrb[0].mxu0
      %v1791 = vpop.f32.mrb[0].mxu0
      %v1792 = vadd.f32 %v1512, %v1791
      %v1793 = vpop.f32.mrb[0].mxu0
      %1794 = vmatprep.mubr.bf16.mxu0 %v1450
      %1795 = vmatmul.mubr.bf16.gmra.mrb[0].mxu0 %v1449
      %v1796 = vpop.f32.mrb[0].mxu0
      %v1797 = vadd.f32 %v1512, %v1796
      %v1798 = vpop.f32.mrb[0].mxu0
      %v1799 = vpop.f32.mrb[0].mxu0
      %v1800 = vadd.f32 %v1512, %v1799
      %v1801 = vpop.f32.mrb[0].mxu0
      %1802 = vmatprep.mubr.bf16.mxu0 %v1452
      %1803 = vmatmul.mubr.bf16.gmra.mrb[0].mxu0 %v1451
      %v1804 = vpop.f32.mrb[0].mxu0
      %v1805 = vadd.f32 %v1512, %v1804
      %v1806 = vpop.f32.mrb[0].mxu0
      %v1807 = vpop.f32.mrb[0].mxu0
      %v1808 = vadd.f32 %v1512, %v1807
      %v1809 = vpop.f32.mrb[0].mxu0
      %1810 = vmatprep.mubr.bf16.mxu0 %v1454
      %1811 = vmatmul.mubr.bf16.gmra.mrb[0].mxu0 %v1453
      %v1812 = vpop.f32.mrb[0].mxu0
      %v1813 = vadd.f32 %v1512, %v1812
      %v1814 = vpop.f32.mrb[0].mxu0
      %v1815 = vpop.f32.mrb[0].mxu0
      %v1816 = vadd.f32 %v1512, %v1815
      %v1817 = vpop.f32.mrb[0].mxu0
      %1818 = vmatprep.mubr.bf16.mxu0 %v1456
      %1819 = vmatmul.mubr.bf16.gmra.mrb[0].mxu0 %v1455
      %v1820 = vpop.f32.mrb[0].mxu0
      %v1821 = vadd.f32 %v1512, %v1820
      %v1822 = vpop.f32.mrb[0].mxu0
      %v1823 = vpop.f32.mrb[0].mxu0
      %v1824 = vadd.f32 %v1512, %v1823
      %v1825 = vpop.f32.mrb[0].mxu0
      %1826 = vmatprep.mubr.bf16.mxu0 %v1458
      %1827 = vmatmul.mubr.bf16.gmra.mrb[0].mxu0 %v1457
      %v1828 = vpop.f32.mrb[0].mxu0
      %v1829 = vadd.f32 %v1512, %v1828
      %v1830 = vpop.f32.mrb[0].mxu0
      %v1831 = vpop.f32.mrb[0].mxu0
      %v1832 = vadd.f32 %v1512, %v1831
      %v1833 = vpop.f32.mrb[0].mxu0
      %1834 = vmatprep.mubr.bf16.mxu0 %v1460
      %1835 = vmatmul.mubr.bf16.gmra.mrb[0].mxu0 %v1459
      %v1836 = vpop.f32.mrb[0].mxu0
      %v1837 = vadd.f32 %v1512, %v1836
      %v1838 = vpop.f32.mrb[0].mxu0
      %v1839 = vpop.f32.mrb[0].mxu0
      %v1840 = vadd.f32 %v1512, %v1839
      %v1841 = vpop.f32.mrb[0].mxu0
      %1842 = vmatprep.mubr.bf16.mxu0 %v1462
      %1843 = vmatmul.mubr.bf16.gmra.mrb[0].mxu0 %v1461
      %v1844 = vpop.f32.mrb[0].mxu0
      %v1845 = vadd.f32 %v1512, %v1844
      %v1846 = vpop.f32.mrb[0].mxu0
      %v1847 = vpop.f32.mrb[0].mxu0
      %v1848 = vadd.f32 %v1512, %v1847
      %v1849 = vpop.f32.mrb[0].mxu0
      %1850 = vmatprep.mubr.bf16.mxu0 %v1464
      %1851 = vmatmul.mubr.bf16.gmra.mrb[0].mxu0 %v1463
      %v1852 = vpop.f32.mrb[0].mxu0
      %v1853 = vadd.f32 %v1512, %v1852
      %v1854 = vpop.f32.mrb[0].mxu0
      %v1855 = vpop.f32.mrb[0].mxu0
      %v1856 = vadd.f32 %v1512, %v1855
      %v1857 = vpop.f32.mrb[0].mxu0
      %1858 = vmatprep.mubr.bf16.mxu0 %v1466
      %1859 = vmatmul.mubr.bf16.gmra.mrb[0].mxu0 %v1465
      %v1860 = vpop.f32.mrb[0].mxu0
      %v1861 = vadd.f32 %v1512, %v1860
      %v1862 = vpop.f32.mrb[0].mxu0
      %v1863 = vpop.f32.mrb[0].mxu0
      %v1864 = vadd.f32 %v1512, %v1863
      %v1865 = vpop.f32.mrb[0].mxu0
      %1866 = vmatprep.mubr.bf16.mxu0 %v1468
      %1867 = vmatmul.mubr.bf16.gmra.mrb[0].mxu0 %v1467
      %v1868 = vpop.f32.mrb[0].mxu0
      %v1869 = vadd.f32 %v1512, %v1868
      %v1870 = vpop.f32.mrb[0].mxu0
      %v1871 = vpop.f32.mrb[0].mxu0
      %v1872 = vadd.f32 %v1512, %v1871
      %v1873 = vpop.f32.mrb[0].mxu0
      %1874 = vmatprep.mubr.bf16.mxu0 %v1470
      %1875 = vmatmul.mubr.bf16.gmra.mrb[0].mxu0 %v1469
      %v1876 = vpop.f32.mrb[0].mxu0
      %v1877 = vadd.f32 %v1512, %v1876
      %v1878 = vpop.f32.mrb[0].mxu0
      %v1879 = vpop.f32.mrb[0].mxu0
      %v1880 = vadd.f32 %v1512, %v1879
      %v1881 = vpop.f32.mrb[0].mxu0
      %1882 = vmatprep.mubr.bf16.mxu0 %v1472
      %1883 = vmatmul.mubr.bf16.gmra.mrb[0].mxu0 %v1471
      %v1884 = vpop.f32.mrb[0].mxu0
      %v1885 = vadd.f32 %v1512, %v1884
      %v1886 = vpop.f32.mrb[0].mxu0
      %v1887 = vpop.f32.mrb[0].mxu0
      %v1888 = vadd.f32 %v1512, %v1887
      %v1889 = vpop.f32.mrb[0].mxu0
      %1890 = vmatprep.mubr.bf16.mxu0 %v1474
      %1891 = vmatmul.mubr.bf16.gmra.mrb[0].mxu0 %v1473
      %v1892 = vpop.f32.mrb[0].mxu0
      %v1893 = vadd.f32 %v1512, %v1892
      %v1894 = vpop.f32.mrb[0].mxu0
      %v1895 = vpop.f32.mrb[0].mxu0
      %v1896 = vadd.f32 %v1512, %v1895
      %v1897 = vpop.f32.mrb[0].mxu0
      %1898 = vdwg.mxu0
      %v1899 = vmul.f32 %v1645, 0.2
      %v1900 = vmul.f32 %v1648, 0.2
      %v1901 = vmul.f32 %v1653, 0.2
      %v1902 = vmul.f32 %v1656, 0.2
      %v1903 = vmul.f32 %v1661, 0.2
      %v1904 = vmul.f32 %v1664, 0.2
      %v1905 = vmul.f32 %v1669, 0.2
      %v1906 = vmul.f32 %v1672, 0.2
      %v1907 = vmul.f32 %v1677, 0.2
      %v1908 = vmul.f32 %v1680, 0.2
      %v1909 = vmul.f32 %v1685, 0.2
      %v1910 = vmul.f32 %v1688, 0.2
      %v1911 = vmul.f32 %v1693, 0.2
      %v1912 = vmul.f32 %v1696, 0.2
      %v1913 = vmul.f32 %v1701, 0.2
      %v1914 = vmul.f32 %v1704, 0.2
      %v1915 = vmul.f32 %v1709, 0.2
      %v1916 = vmul.f32 %v1712, 0.2
      %v1917 = vmul.f32 %v1717, 0.2
      %v1918 = vmul.f32 %v1720, 0.2
      %v1919 = vmul.f32 %v1725, 0.2
      %v1920 = vmul.f32 %v1728, 0.2
      %v1921 = vmul.f32 %v1733, 0.2
      %v1922 = vmul.f32 %v1736, 0.2
      %v1923 = vmul.f32 %v1741, 0.2
      %v1924 = vmul.f32 %v1744, 0.2
      %v1925 = vmul.f32 %v1749, 0.2
      %v1926 = vmul.f32 %v1752, 0.2
      %v1927 = vmul.f32 %v1757, 0.2
      %v1928 = vmul.f32 %v1760, 0.2
      %v1929 = vmul.f32 %v1765, 0.2
      %v1930 = vmul.f32 %v1768, 0.2
      %v1931 = vmul.f32 %v1773, 0.2
      %v1932 = vmul.f32 %v1776, 0.2
      %v1933 = vmul.f32 %v1781, 0.2
      %v1934 = vmul.f32 %v1784, 0.2
      %v1935 = vmul.f32 %v1789, 0.2
      %v1936 = vmul.f32 %v1792, 0.2
      %v1937 = vmul.f32 %v1797, 0.2
      %v1938 = vmul.f32 %v1800, 0.2
      %v1939 = vmul.f32 %v1805, 0.2
      %v1940 = vmul.f32 %v1808, 0.2
      %v1941 = vmul.f32 %v1813, 0.2
      %v1942 = vmul.f32 %v1816, 0.2
      %v1943 = vmul.f32 %v1821, 0.2
      %v1944 = vmul.f32 %v1824, 0.2
      %v1945 = vmul.f32 %v1829, 0.2
      %v1946 = vmul.f32 %v1832, 0.2
      %v1947 = vmul.f32 %v1837, 0.2
      %v1948 = vmul.f32 %v1840, 0.2
      %v1949 = vmul.f32 %v1845, 0.2
      %v1950 = vmul.f32 %v1848, 0.2
      %v1951 = vmul.f32 %v1853, 0.2
      %v1952 = vmul.f32 %v1856, 0.2
      %v1953 = vmul.f32 %v1861, 0.2
      %v1954 = vmul.f32 %v1864, 0.2
      %v1955 = vmul.f32 %v1869, 0.2
      %v1956 = vmul.f32 %v1872, 0.2
      %v1957 = vmul.f32 %v1877, 0.2
      %v1958 = vmul.f32 %v1880, 0.2
      %v1959 = vmul.f32 %v1885, 0.2
      %v1960 = vmul.f32 %v1888, 0.2
      %v1961 = vmul.f32 %v1893, 0.2
      %v1962 = vmul.f32 %v1896, 0.2
      %v1963 = vmax.f32 %v1645, %v1899
      %v1964 = vmax.f32 %v1648, %v1900
      %v1965 = vmax.f32 %v1653, %v1901
      %v1966 = vmax.f32 %v1656, %v1902
      %v1967 = vmax.f32 %v1661, %v1903
      %v1968 = vmax.f32 %v1664, %v1904
      %v1969 = vmax.f32 %v1669, %v1905
      %v1970 = vmax.f32 %v1672, %v1906
      %v1971 = vmax.f32 %v1677, %v1907
      %v1972 = vmax.f32 %v1680, %v1908
      %v1973 = vmax.f32 %v1685, %v1909
      %v1974 = vmax.f32 %v1688, %v1910
      %v1975 = vmax.f32 %v1693, %v1911
      %v1976 = vmax.f32 %v1696, %v1912
      %v1977 = vmax.f32 %v1701, %v1913
      %v1978 = vmax.f32 %v1704, %v1914
      %v1979 = vmax.f32 %v1709, %v1915
      %v1980 = vmax.f32 %v1712, %v1916
      %v1981 = vmax.f32 %v1717, %v1917
      %v1982 = vmax.f32 %v1720, %v1918
      %v1983 = vmax.f32 %v1725, %v1919
      %v1984 = vmax.f32 %v1728, %v1920
      %v1985 = vmax.f32 %v1733, %v1921
      %v1986 = vmax.f32 %v1736, %v1922
      %v1987 = vmax.f32 %v1741, %v1923
      %v1988 = vmax.f32 %v1744, %v1924
      %v1989 = vmax.f32 %v1749, %v1925
      %v1990 = vmax.f32 %v1752, %v1926
      %v1991 = vmax.f32 %v1757, %v1927
      %v1992 = vmax.f32 %v1760, %v1928
      %v1993 = vmax.f32 %v1765, %v1929
      %v1994 = vmax.f32 %v1768, %v1930
      %v1995 = vmax.f32 %v1773, %v1931
      %v1996 = vmax.f32 %v1776, %v1932
      %v1997 = vmax.f32 %v1781, %v1933
      %v1998 = vmax.f32 %v1784, %v1934
      %v1999 = vmax.f32 %v1789, %v1935
      %v2000 = vmax.f32 %v1792, %v1936
      %v2001 = vmax.f32 %v1797, %v1937
      %v2002 = vmax.f32 %v1800, %v1938
      %v2003 = vmax.f32 %v1805, %v1939
      %v2004 = vmax.f32 %v1808, %v1940
      %v2005 = vmax.f32 %v1813, %v1941
      %v2006 = vmax.f32 %v1816, %v1942
      %v2007 = vmax.f32 %v1821, %v1943
      %v2008 = vmax.f32 %v1824, %v1944
      %v2009 = vmax.f32 %v1829, %v1945
      %v2010 = vmax.f32 %v1832, %v1946
      %v2011 = vmax.f32 %v1837, %v1947
      %v2012 = vmax.f32 %v1840, %v1948
      %v2013 = vmax.f32 %v1845, %v1949
      %v2014 = vmax.f32 %v1848, %v1950
      %v2015 = vmax.f32 %v1853, %v1951
      %v2016 = vmax.f32 %v1856, %v1952
      %v2017 = vmax.f32 %v1861, %v1953
      %v2018 = vmax.f32 %v1864, %v1954
      %v2019 = vmax.f32 %v1869, %v1955
      %v2020 = vmax.f32 %v1872, %v1956
      %v2021 = vmax.f32 %v1877, %v1957
      %v2022 = vmax.f32 %v1880, %v1958
      %v2023 = vmax.f32 %v1885, %v1959
      %v2024 = vmax.f32 %v1888, %v1960
      %v2025 = vmax.f32 %v1893, %v1961
      %v2026 = vmax.f32 %v1896, %v1962
      %v2027 = vpack.c.bf16 %v1964, %v1963
      %v2028 = vpack.c.bf16 %v1966, %v1965
      %v2029 = vpack.c.bf16 %v1968, %v1967
      %v2030 = vpack.c.bf16 %v1970, %v1969
      %v2031 = vpack.c.bf16 %v1972, %v1971
      %v2032 = vpack.c.bf16 %v1974, %v1973
      %v2033 = vpack.c.bf16 %v1976, %v1975
      %v2034 = vpack.c.bf16 %v1978, %v1977
      %v2035 = vpack.c.bf16 %v1980, %v1979
      %v2036 = vpack.c.bf16 %v1982, %v1981
      %v2037 = vpack.c.bf16 %v1984, %v1983
      %v2038 = vpack.c.bf16 %v1986, %v1985
      %v2039 = vpack.c.bf16 %v1988, %v1987
      %v2040 = vpack.c.bf16 %v1990, %v1989
      %v2041 = vpack.c.bf16 %v1992, %v1991
      %v2042 = vpack.c.bf16 %v1994, %v1993
      %v2043 = vpack.c.bf16 %v1996, %v1995
      %v2044 = vpack.c.bf16 %v1998, %v1997
      %v2045 = vpack.c.bf16 %v2000, %v1999
      %v2046 = vpack.c.bf16 %v2002, %v2001
      %v2047 = vpack.c.bf16 %v2004, %v2003
      %v2048 = vpack.c.bf16 %v2006, %v2005
      %v2049 = vpack.c.bf16 %v2008, %v2007
      %v2050 = vpack.c.bf16 %v2010, %v2009
      %v2051 = vpack.c.bf16 %v2012, %v2011
      %v2052 = vpack.c.bf16 %v2014, %v2013
      %v2053 = vpack.c.bf16 %v2016, %v2015
      %v2054 = vpack.c.bf16 %v2018, %v2017
      %v2055 = vpack.c.bf16 %v2020, %v2019
      %v2056 = vpack.c.bf16 %v2022, %v2021
      %v2057 = vpack.c.bf16 %v2024, %v2023
      %v2058 = vpack.c.bf16 %v2026, %v2025
      %2075 = vrot.lane.b32.xlu0 %v2043, 64
      %v2076 = vpop.permute.xlu0 %2075
      %2077 = vrot.lane.b32.xlu0 %v2044, 64
      %v2078 = vpop.permute.xlu0 %2077
      %2079 = vrot.lane.b32.xlu0 %v2045, 64
      %v2080 = vpop.permute.xlu0 %2079
      %2081 = vrot.lane.b32.xlu0 %v2046, 64
      %v2082 = vpop.permute.xlu0 %2081
      %2083 = vrot.lane.b32.xlu0 %v2047, 64
      %v2084 = vpop.permute.xlu0 %2083
      %2085 = vrot.lane.b32.xlu0 %v2048, 64
      %v2086 = vpop.permute.xlu0 %2085
      %2087 = vrot.lane.b32.xlu0 %v2049, 64
      %v2088 = vpop.permute.xlu0 %2087
      %2089 = vrot.lane.b32.xlu0 %v2050, 64
      %v2090 = vpop.permute.xlu0 %2089
      %2091 = vrot.lane.b32.xlu0 %v2051, 64
      %v2092 = vpop.permute.xlu0 %2091
      %2093 = vrot.lane.b32.xlu0 %v2052, 64
      %v2094 = vpop.permute.xlu0 %2093
      %2095 = vrot.lane.b32.xlu0 %v2053, 64
      %v2096 = vpop.permute.xlu0 %2095
      %2097 = vrot.lane.b32.xlu0 %v2054, 64
      %v2098 = vpop.permute.xlu0 %2097
      %2099 = vrot.lane.b32.xlu0 %v2055, 64
      %v2100 = vpop.permute.xlu0 %2099
      %2101 = vrot.lane.b32.xlu0 %v2056, 64
      %v2102 = vpop.permute.xlu0 %2101
      %2103 = vrot.lane.b32.xlu0 %v2057, 64
      %v2104 = vpop.permute.xlu0 %2103
      %2105 = vrot.lane.b32.xlu0 %v2058, 64
      %v2106 = vpop.permute.xlu0 %2105
      %vm2107 = vcmask 523264
      %v2110 = vsel %vm2107, %v2027, %v2076
      %v2114 = vsel %vm2107, %v2028, %v2078
      %v2118 = vsel %vm2107, %v2029, %v2080
      %v2122 = vsel %vm2107, %v2030, %v2082
      %v2126 = vsel %vm2107, %v2031, %v2084
      %v2130 = vsel %vm2107, %v2032, %v2086
      %v2134 = vsel %vm2107, %v2033, %v2088
      %v2138 = vsel %vm2107, %v2034, %v2090
      %v2142 = vsel %vm2107, %v2035, %v2092
      %v2146 = vsel %vm2107, %v2036, %v2094
      %v2150 = vsel %vm2107, %v2037, %v2096
      %v2154 = vsel %vm2107, %v2038, %v2098
      %v2158 = vsel %vm2107, %v2039, %v2100
      %v2162 = vsel %vm2107, %v2040, %v2102
      %v2166 = vsel %vm2107, %v2041, %v2104
      %v2170 = vsel %vm2107, %v2042, %v2106
      %v2172 = vld [vmem:[%s5] sm:$0xf]
      %v2173 = vld [vmem:[%s5 + $0x4] sm:$0xf]
      %v2174 = vld [vmem:[%s5 + $0x8] sm:$0xf]
      %v2175 = vld [vmem:[%s5 + $0xc] sm:$0xf]
      %v2176 = vld [vmem:[%s5 + $0x10] sm:$0xf]
      %v2177 = vld [vmem:[%s5 + $0x14] sm:$0xf]
      %v2178 = vld [vmem:[%s5 + $0x18] sm:$0xf]
      %v2179 = vld [vmem:[%s5 + $0x1c] sm:$0xf]
      %v2180 = vld [vmem:[%s5 + $0x20] sm:$0xf]
      %v2181 = vld [vmem:[%s5 + $0x24] sm:$0xf]
      %v2182 = vld [vmem:[%s5 + $0x28] sm:$0xf]
      %v2183 = vld [vmem:[%s5 + $0x2c] sm:$0xf]
      %v2184 = vld [vmem:[%s5 + $0x30] sm:$0xf]
      %v2185 = vld [vmem:[%s5 + $0x34] sm:$0xf]
      %v2186 = vld [vmem:[%s5 + $0x38] sm:$0xf]
      %v2187 = vld [vmem:[%s5 + $0x3c] sm:$0xf]
      %v2188 = vld [vmem:[%s6] sm:$0x1]
      %v2190 = vlaneseq
      %v2191 = vshrl.u32 %v2190, 7
      %v2192 = vsub.s32 0, %v2191
      %v2193 = vrot.slane %v2188, %v2192
      %v2211 = vunpack.c.l.b16 %v2172
      %v2212 = vunpack.c.l.b16 %v2173
      %v2213 = vunpack.c.l.b16 %v2174
      %v2214 = vunpack.c.l.b16 %v2175
      %v2215 = vunpack.c.l.b16 %v2176
      %v2216 = vunpack.c.l.b16 %v2177
      %v2217 = vunpack.c.l.b16 %v2178
      %v2218 = vunpack.c.l.b16 %v2179
      %v2219 = vunpack.c.l.b16 %v2180
      %v2220 = vunpack.c.l.b16 %v2181
      %v2221 = vunpack.c.l.b16 %v2182
      %v2222 = vunpack.c.l.b16 %v2183
      %v2223 = vunpack.c.l.b16 %v2184
      %v2224 = vunpack.c.l.b16 %v2185
      %v2225 = vunpack.c.l.b16 %v2186
      %v2226 = vunpack.c.l.b16 %v2187
      %v2227 = vpack.c.b16 %v2212, %v2211
      %v2228 = vpack.c.b16 %v2214, %v2213
      %v2229 = vpack.c.b16 %v2216, %v2215
      %v2230 = vpack.c.b16 %v2218, %v2217
      %v2231 = vpack.c.b16 %v2220, %v2219
      %v2232 = vpack.c.b16 %v2222, %v2221
      %v2233 = vpack.c.b16 %v2224, %v2223
      %v2234 = vpack.c.b16 %v2226, %v2225
      %2243 = vmatprep.subr.bf16.mxu0 0
      %2244 = vmatpush1.bf16.msra.mxu0 %v2227
      %2245 = vmatprep.subr.bf16.mxu0 0
      %2246 = vmatpush1.bf16.msra.mxu0 %v2228
      %2247 = vmatprep.subr.bf16.mxu0 0
      %2248 = vmatpush1.bf16.msra.mxu0 %v2229
      %2249 = vmatprep.subr.bf16.mxu0 0
      %2250 = vmatpush1.bf16.msra.mxu0 %v2230
      %2251 = vmatprep.subr.bf16.mxu0 0
      %2252 = vmatpush1.bf16.msra.mxu0 %v2231
      %2253 = vmatprep.subr.bf16.mxu0 0
      %2254 = vmatpush1.bf16.msra.mxu0 %v2232
      %2255 = vmatprep.subr.bf16.mxu0 0
      %2256 = vmatpush1.bf16.msra.mxu0 %v2233
      %2257 = vmatprep.subr.bf16.mxu0 0
      %2258 = vmatpush1.bf16.msra.mxu0 %v2234
      %2259 = vmatprep.subr.bf16.mxu0 0
      %2260 = vmatpush1.bf16.msra.mxu0 0
      %2261 = vmatprep.subr.bf16.mxu0 0
      %2262 = vmatpush1.bf16.msra.mxu0 0
      %2263 = vmatprep.subr.bf16.mxu0 0
      %2264 = vmatpush1.bf16.msra.mxu0 0
      %2265 = vmatprep.subr.bf16.mxu0 0
      %2266 = vmatpush1.bf16.msra.mxu0 0
      %2267 = vmatprep.subr.bf16.mxu0 0
      %2268 = vmatpush1.bf16.msra.mxu0 0
      %2269 = vmatprep.subr.bf16.mxu0 0
      %2270 = vmatpush1.bf16.msra.mxu0 0
      %2271 = vmatprep.subr.bf16.mxu0 0
      %2272 = vmatpush1.bf16.msra.mxu0 0
      %2273 = vmatprep.subr.bf16.mxu0 0
      %2274 = vmatpush1.bf16.msra.mxu0 0
      %2275 = vmatprep.mubr.bf16.mxu0 0
      %2276 = vmatmul.mubr.bf16.gmra.mrb[0].mxu0 %v2110
      %v2277 = vpop.f32.mrb[0].mxu0
      %v2278 = vadd.f32 %v2193, %v2277
      %v2279 = vpop.f32.mrb[0].mxu0
      %v2280 = vpop.f32.mrb[0].mxu0
      %v2281 = vadd.f32 %v2193, %v2280
      %v2282 = vpop.f32.mrb[0].mxu0
      %2283 = vmatprep.mubr.bf16.mxu0 0
      %2284 = vmatmul.mubr.bf16.gmra.mrb[0].mxu0 %v2114
      %v2285 = vpop.f32.mrb[0].mxu0
      %v2286 = vadd.f32 %v2193, %v2285
      %v2287 = vpop.f32.mrb[0].mxu0
      %v2288 = vpop.f32.mrb[0].mxu0
      %v2289 = vadd.f32 %v2193, %v2288
      %v2290 = vpop.f32.mrb[0].mxu0
      %2291 = vmatprep.mubr.bf16.mxu0 0
      %2292 = vmatmul.mubr.bf16.gmra.mrb[0].mxu0 %v2118
      %v2293 = vpop.f32.mrb[0].mxu0
      %v2294 = vadd.f32 %v2193, %v2293
      %v2295 = vpop.f32.mrb[0].mxu0
      %v2296 = vpop.f32.mrb[0].mxu0
      %v2297 = vadd.f32 %v2193, %v2296
      %v2298 = vpop.f32.mrb[0].mxu0
      %2299 = vmatprep.mubr.bf16.mxu0 0
      %2300 = vmatmul.mubr.bf16.gmra.mrb[0].mxu0 %v2122
      %v2301 = vpop.f32.mrb[0].mxu0
      %v2302 = vadd.f32 %v2193, %v2301
      %v2303 = vpop.f32.mrb[0].mxu0
      %v2304 = vpop.f32.mrb[0].mxu0
      %v2305 = vadd.f32 %v2193, %v2304
      %v2306 = vpop.f32.mrb[0].mxu0
      %2307 = vmatprep.mubr.bf16.mxu0 0
      %2308 = vmatmul.mubr.bf16.gmra.mrb[0].mxu0 %v2126
      %v2309 = vpop.f32.mrb[0].mxu0
      %v2310 = vadd.f32 %v2193, %v2309
      %v2311 = vpop.f32.mrb[0].mxu0
      %v2312 = vpop.f32.mrb[0].mxu0
      %v2313 = vadd.f32 %v2193, %v2312
      %v2314 = vpop.f32.mrb[0].mxu0
      %2315 = vmatprep.mubr.bf16.mxu0 0
      %2316 = vmatmul.mubr.bf16.gmra.mrb[0].mxu0 %v2130
      %v2317 = vpop.f32.mrb[0].mxu0
      %v2318 = vadd.f32 %v2193, %v2317
      %v2319 = vpop.f32.mrb[0].mxu0
      %v2320 = vpop.f32.mrb[0].mxu0
      %v2321 = vadd.f32 %v2193, %v2320
      %v2322 = vpop.f32.mrb[0].mxu0
      %2323 = vmatprep.mubr.bf16.mxu0 0
      %2324 = vmatmul.mubr.bf16.gmra.mrb[0].mxu0 %v2134
      %v2325 = vpop.f32.mrb[0].mxu0
      %v2326 = vadd.f32 %v2193, %v2325
      %v2327 = vpop.f32.mrb[0].mxu0
      %v2328 = vpop.f32.mrb[0].mxu0
      %v2329 = vadd.f32 %v2193, %v2328
      %v2330 = vpop.f32.mrb[0].mxu0
      %2331 = vmatprep.mubr.bf16.mxu0 0
      %2332 = vmatmul.mubr.bf16.gmra.mrb[0].mxu0 %v2138
      %v2333 = vpop.f32.mrb[0].mxu0
      %v2334 = vadd.f32 %v2193, %v2333
      %v2335 = vpop.f32.mrb[0].mxu0
      %v2336 = vpop.f32.mrb[0].mxu0
      %v2337 = vadd.f32 %v2193, %v2336
      %v2338 = vpop.f32.mrb[0].mxu0
      %2339 = vmatprep.mubr.bf16.mxu0 0
      %2340 = vmatmul.mubr.bf16.gmra.mrb[0].mxu0 %v2142
      %v2341 = vpop.f32.mrb[0].mxu0
      %v2342 = vadd.f32 %v2193, %v2341
      %v2343 = vpop.f32.mrb[0].mxu0
      %v2344 = vpop.f32.mrb[0].mxu0
      %v2345 = vadd.f32 %v2193, %v2344
      %v2346 = vpop.f32.mrb[0].mxu0
      %2347 = vmatprep.mubr.bf16.mxu0 0
      %2348 = vmatmul.mubr.bf16.gmra.mrb[0].mxu0 %v2146
      %v2349 = vpop.f32.mrb[0].mxu0
      %v2350 = vadd.f32 %v2193, %v2349
      %v2351 = vpop.f32.mrb[0].mxu0
      %v2352 = vpop.f32.mrb[0].mxu0
      %v2353 = vadd.f32 %v2193, %v2352
      %v2354 = vpop.f32.mrb[0].mxu0
      %2355 = vmatprep.mubr.bf16.mxu0 0
      %2356 = vmatmul.mubr.bf16.gmra.mrb[0].mxu0 %v2150
      %v2357 = vpop.f32.mrb[0].mxu0
      %v2358 = vadd.f32 %v2193, %v2357
      %v2359 = vpop.f32.mrb[0].mxu0
      %v2360 = vpop.f32.mrb[0].mxu0
      %v2361 = vadd.f32 %v2193, %v2360
      %v2362 = vpop.f32.mrb[0].mxu0
      %2363 = vmatprep.mubr.bf16.mxu0 0
      %2364 = vmatmul.mubr.bf16.gmra.mrb[0].mxu0 %v2154
      %v2365 = vpop.f32.mrb[0].mxu0
      %v2366 = vadd.f32 %v2193, %v2365
      %v2367 = vpop.f32.mrb[0].mxu0
      %v2368 = vpop.f32.mrb[0].mxu0
      %v2369 = vadd.f32 %v2193, %v2368
      %v2370 = vpop.f32.mrb[0].mxu0
      %2371 = vmatprep.mubr.bf16.mxu0 0
      %2372 = vmatmul.mubr.bf16.gmra.mrb[0].mxu0 %v2158
      %v2373 = vpop.f32.mrb[0].mxu0
      %v2374 = vadd.f32 %v2193, %v2373
      %v2375 = vpop.f32.mrb[0].mxu0
      %v2376 = vpop.f32.mrb[0].mxu0
      %v2377 = vadd.f32 %v2193, %v2376
      %v2378 = vpop.f32.mrb[0].mxu0
      %2379 = vmatprep.mubr.bf16.mxu0 0
      %2380 = vmatmul.mubr.bf16.gmra.mrb[0].mxu0 %v2162
      %v2381 = vpop.f32.mrb[0].mxu0
      %v2382 = vadd.f32 %v2193, %v2381
      %v2383 = vpop.f32.mrb[0].mxu0
      %v2384 = vpop.f32.mrb[0].mxu0
      %v2385 = vadd.f32 %v2193, %v2384
      %v2386 = vpop.f32.mrb[0].mxu0
      %2387 = vmatprep.mubr.bf16.mxu0 0
      %2388 = vmatmul.mubr.bf16.gmra.mrb[0].mxu0 %v2166
      %v2389 = vpop.f32.mrb[0].mxu0
      %v2390 = vadd.f32 %v2193, %v2389
      %v2391 = vpop.f32.mrb[0].mxu0
      %v2392 = vpop.f32.mrb[0].mxu0
      %v2393 = vadd.f32 %v2193, %v2392
      %v2394 = vpop.f32.mrb[0].mxu0
      %2395 = vmatprep.mubr.bf16.mxu0 0
      %2396 = vmatmul.mubr.bf16.gmra.mrb[0].mxu0 %v2170
      %v2397 = vpop.f32.mrb[0].mxu0
      %v2398 = vadd.f32 %v2193, %v2397
      %v2399 = vpop.f32.mrb[0].mxu0
      %v2400 = vpop.f32.mrb[0].mxu0
      %v2401 = vadd.f32 %v2193, %v2400
      %v2402 = vpop.f32.mrb[0].mxu0
      %2403 = vdwg.mxu0
      %v2404 = vmul.f32 %v2278, 0.2
      %v2405 = vmul.f32 %v2281, 0.2
      %v2406 = vmul.f32 %v2286, 0.2
      %v2407 = vmul.f32 %v2289, 0.2
      %v2408 = vmul.f32 %v2294, 0.2
      %v2409 = vmul.f32 %v2297, 0.2
      %v2410 = vmul.f32 %v2302, 0.2
      %v2411 = vmul.f32 %v2305, 0.2
      %v2412 = vmul.f32 %v2310, 0.2
      %v2413 = vmul.f32 %v2313, 0.2
      %v2414 = vmul.f32 %v2318, 0.2
      %v2415 = vmul.f32 %v2321, 0.2
      %v2416 = vmul.f32 %v2326, 0.2
      %v2417 = vmul.f32 %v2329, 0.2
      %v2418 = vmul.f32 %v2334, 0.2
      %v2419 = vmul.f32 %v2337, 0.2
      %v2420 = vmul.f32 %v2342, 0.2
      %v2421 = vmul.f32 %v2345, 0.2
      %v2422 = vmul.f32 %v2350, 0.2
      %v2423 = vmul.f32 %v2353, 0.2
      %v2424 = vmul.f32 %v2358, 0.2
      %v2425 = vmul.f32 %v2361, 0.2
      %v2426 = vmul.f32 %v2366, 0.2
      %v2427 = vmul.f32 %v2369, 0.2
      %v2428 = vmul.f32 %v2374, 0.2
      %v2429 = vmul.f32 %v2377, 0.2
      %v2430 = vmul.f32 %v2382, 0.2
      %v2431 = vmul.f32 %v2385, 0.2
      %v2432 = vmul.f32 %v2390, 0.2
      %v2433 = vmul.f32 %v2393, 0.2
      %v2434 = vmul.f32 %v2398, 0.2
      %v2435 = vmul.f32 %v2401, 0.2
      %v2436 = vmax.f32 %v2278, %v2404
      %v2437 = vmax.f32 %v2281, %v2405
      %v2438 = vmax.f32 %v2286, %v2406
      %v2439 = vmax.f32 %v2289, %v2407
      %v2440 = vmax.f32 %v2294, %v2408
      %v2441 = vmax.f32 %v2297, %v2409
      %v2442 = vmax.f32 %v2302, %v2410
      %v2443 = vmax.f32 %v2305, %v2411
      %v2444 = vmax.f32 %v2310, %v2412
      %v2445 = vmax.f32 %v2313, %v2413
      %v2446 = vmax.f32 %v2318, %v2414
      %v2447 = vmax.f32 %v2321, %v2415
      %v2448 = vmax.f32 %v2326, %v2416
      %v2449 = vmax.f32 %v2329, %v2417
      %v2450 = vmax.f32 %v2334, %v2418
      %v2451 = vmax.f32 %v2337, %v2419
      %v2452 = vmax.f32 %v2342, %v2420
      %v2453 = vmax.f32 %v2345, %v2421
      %v2454 = vmax.f32 %v2350, %v2422
      %v2455 = vmax.f32 %v2353, %v2423
      %v2456 = vmax.f32 %v2358, %v2424
      %v2457 = vmax.f32 %v2361, %v2425
      %v2458 = vmax.f32 %v2366, %v2426
      %v2459 = vmax.f32 %v2369, %v2427
      %v2460 = vmax.f32 %v2374, %v2428
      %v2461 = vmax.f32 %v2377, %v2429
      %v2462 = vmax.f32 %v2382, %v2430
      %v2463 = vmax.f32 %v2385, %v2431
      %v2464 = vmax.f32 %v2390, %v2432
      %v2465 = vmax.f32 %v2393, %v2433
      %v2466 = vmax.f32 %v2398, %v2434
      %v2467 = vmax.f32 %v2401, %v2435
      %v2468 = vpack.c.bf16 %v2437, %v2436
      %v2469 = vpack.c.bf16 %v2439, %v2438
      %v2470 = vpack.c.bf16 %v2441, %v2440
      %v2471 = vpack.c.bf16 %v2443, %v2442
      %v2472 = vpack.c.bf16 %v2445, %v2444
      %v2473 = vpack.c.bf16 %v2447, %v2446
      %v2474 = vpack.c.bf16 %v2449, %v2448
      %v2475 = vpack.c.bf16 %v2451, %v2450
      %v2476 = vpack.c.bf16 %v2453, %v2452
      %v2477 = vpack.c.bf16 %v2455, %v2454
      %v2478 = vpack.c.bf16 %v2457, %v2456
      %v2479 = vpack.c.bf16 %v2459, %v2458
      %v2480 = vpack.c.bf16 %v2461, %v2460
      %v2481 = vpack.c.bf16 %v2463, %v2462
      %v2482 = vpack.c.bf16 %v2465, %v2464
      %v2483 = vpack.c.bf16 %v2467, %v2466
      %2488 = vrot.lane.b32.xlu0 %v2472, 64
      %v2489 = vpop.permute.xlu0 %2488
      %2490 = vrot.lane.b32.xlu0 %v2473, 64
      %v2491 = vpop.permute.xlu0 %2490
      %2492 = vrot.lane.b32.xlu0 %v2474, 64
      %v2493 = vpop.permute.xlu0 %2492
      %2494 = vrot.lane.b32.xlu0 %v2475, 64
      %v2495 = vpop.permute.xlu0 %2494
      %2500 = vrot.lane.b32.xlu0 %v2480, 64
      %v2501 = vpop.permute.xlu0 %2500
      %2502 = vrot.lane.b32.xlu0 %v2481, 64
      %v2503 = vpop.permute.xlu0 %2502
      %2504 = vrot.lane.b32.xlu0 %v2482, 64
      %v2505 = vpop.permute.xlu0 %2504
      %2506 = vrot.lane.b32.xlu0 %v2483, 64
      %v2507 = vpop.permute.xlu0 %2506
      %v2510 = vsel %vm2107, %v2468, %v2489
      %v2514 = vsel %vm2107, %v2469, %v2491
      %v2518 = vsel %vm2107, %v2470, %v2493
      %v2522 = vsel %vm2107, %v2471, %v2495
      %v2526 = vsel %vm2107, %v2476, %v2501
      %v2530 = vsel %vm2107, %v2477, %v2503
      %v2534 = vsel %vm2107, %v2478, %v2505
      %v2538 = vsel %vm2107, %v2479, %v2507
      %v2540 = vld [vmem:[%s7] sm:$0xf]
      %v2541 = vld [vmem:[%s7 + $0x4] sm:$0xf]
      %v2542 = vld [vmem:[%s7 + $0x8] sm:$0xf]
      %v2543 = vld [vmem:[%s7 + $0xc] sm:$0xf]
      %v2544 = vld [vmem:[%s7 + $0x10] sm:$0xf]
      %v2545 = vld [vmem:[%s7 + $0x14] sm:$0xf]
      %v2546 = vld [vmem:[%s7 + $0x18] sm:$0xf]
      %v2547 = vld [vmem:[%s7 + $0x1c] sm:$0xf]
      %v2548 = vld [vmem:[%s7 + $0x20] sm:$0xf]
      %v2549 = vld [vmem:[%s7 + $0x24] sm:$0xf]
      %v2550 = vld [vmem:[%s7 + $0x28] sm:$0xf]
      %v2551 = vld [vmem:[%s7 + $0x2c] sm:$0xf]
      %v2552 = vld [vmem:[%s7 + $0x30] sm:$0xf]
      %v2553 = vld [vmem:[%s7 + $0x34] sm:$0xf]
      %v2554 = vld [vmem:[%s7 + $0x38] sm:$0xf]
      %v2555 = vld [vmem:[%s7 + $0x3c] sm:$0xf]
      %v2556 = vld [vmem:[%s7 + $0x40] sm:$0xf]
      %v2557 = vld [vmem:[%s7 + $0x44] sm:$0xf]
      %v2558 = vld [vmem:[%s7 + $0x48] sm:$0xf]
      %v2559 = vld [vmem:[%s7 + $0x4c] sm:$0xf]
      %v2560 = vld [vmem:[%s7 + $0x50] sm:$0xf]
      %v2561 = vld [vmem:[%s7 + $0x54] sm:$0xf]
      %v2562 = vld [vmem:[%s7 + $0x58] sm:$0xf]
      %v2563 = vld [vmem:[%s7 + $0x5c] sm:$0xf]
      %v2564 = vld [vmem:[%s7 + $0x60] sm:$0xf]
      %v2565 = vld [vmem:[%s7 + $0x64] sm:$0xf]
      %v2566 = vld [vmem:[%s7 + $0x68] sm:$0xf]
      %v2567 = vld [vmem:[%s7 + $0x6c] sm:$0xf]
      %v2568 = vld [vmem:[%s7 + $0x70] sm:$0xf]
      %v2569 = vld [vmem:[%s7 + $0x74] sm:$0xf]
      %v2570 = vld [vmem:[%s7 + $0x78] sm:$0xf]
      %v2571 = vld [vmem:[%s7 + $0x7c] sm:$0xf]
      %v2572 = vld [vmem:[%s8] sm:$0x1]
      %v2574 = vlaneseq
      %v2575 = vshrl.u32 %v2574, 7
      %v2576 = vsub.s32 0, %v2575
      %v2577 = vrot.slane %v2572, %v2576
      %v2611 = vunpack.c.l.b16 %v2540
      %v2612 = vunpack.c.l.b16 %v2541
      %v2613 = vunpack.c.l.b16 %v2542
      %v2614 = vunpack.c.l.b16 %v2543
      %v2615 = vunpack.c.l.b16 %v2544
      %v2616 = vunpack.c.l.b16 %v2545
      %v2617 = vunpack.c.l.b16 %v2546
      %v2618 = vunpack.c.l.b16 %v2547
      %v2619 = vunpack.c.l.b16 %v2548
      %v2620 = vunpack.c.l.b16 %v2549
      %v2621 = vunpack.c.l.b16 %v2550
      %v2622 = vunpack.c.l.b16 %v2551
      %v2623 = vunpack.c.l.b16 %v2552
      %v2624 = vunpack.c.l.b16 %v2553
      %v2625 = vunpack.c.l.b16 %v2554
      %v2626 = vunpack.c.l.b16 %v2555
      %v2627 = vunpack.c.l.b16 %v2556
      %v2628 = vunpack.c.l.b16 %v2557
      %v2629 = vunpack.c.l.b16 %v2558
      %v2630 = vunpack.c.l.b16 %v2559
      %v2631 = vunpack.c.l.b16 %v2560
      %v2632 = vunpack.c.l.b16 %v2561
      %v2633 = vunpack.c.l.b16 %v2562
      %v2634 = vunpack.c.l.b16 %v2563
      %v2635 = vunpack.c.l.b16 %v2564
      %v2636 = vunpack.c.l.b16 %v2565
      %v2637 = vunpack.c.l.b16 %v2566
      %v2638 = vunpack.c.l.b16 %v2567
      %v2639 = vunpack.c.l.b16 %v2568
      %v2640 = vunpack.c.l.b16 %v2569
      %v2641 = vunpack.c.l.b16 %v2570
      %v2642 = vunpack.c.l.b16 %v2571
      %v2643 = vpack.c.b16 %v2612, %v2611
      %v2644 = vpack.c.b16 %v2614, %v2613
      %v2645 = vpack.c.b16 %v2616, %v2615
      %v2646 = vpack.c.b16 %v2618, %v2617
      %v2647 = vpack.c.b16 %v2620, %v2619
      %v2648 = vpack.c.b16 %v2622, %v2621
      %v2649 = vpack.c.b16 %v2624, %v2623
      %v2650 = vpack.c.b16 %v2626, %v2625
      %v2651 = vpack.c.b16 %v2628, %v2627
      %v2652 = vpack.c.b16 %v2630, %v2629
      %v2653 = vpack.c.b16 %v2632, %v2631
      %v2654 = vpack.c.b16 %v2634, %v2633
      %v2655 = vpack.c.b16 %v2636, %v2635
      %v2656 = vpack.c.b16 %v2638, %v2637
      %v2657 = vpack.c.b16 %v2640, %v2639
      %v2658 = vpack.c.b16 %v2642, %v2641
      %2675 = vmatprep.subr.bf16.mxu0 0
      %2676 = vmatpush1.bf16.msra.mxu0 %v2643
      %2677 = vmatprep.subr.bf16.mxu0 0
      %2678 = vmatpush1.bf16.msra.mxu0 %v2644
      %2679 = vmatprep.subr.bf16.mxu0 0
      %2680 = vmatpush1.bf16.msra.mxu0 %v2645
      %2681 = vmatprep.subr.bf16.mxu0 0
      %2682 = vmatpush1.bf16.msra.mxu0 %v2646
      %2683 = vmatprep.subr.bf16.mxu0 0
      %2684 = vmatpush1.bf16.msra.mxu0 %v2647
      %2685 = vmatprep.subr.bf16.mxu0 0
      %2686 = vmatpush1.bf16.msra.mxu0 %v2648
      %2687 = vmatprep.subr.bf16.mxu0 0
      %2688 = vmatpush1.bf16.msra.mxu0 %v2649
      %2689 = vmatprep.subr.bf16.mxu0 0
      %2690 = vmatpush1.bf16.msra.mxu0 %v2650
      %2691 = vmatprep.subr.bf16.mxu0 0
      %2692 = vmatpush1.bf16.msra.mxu0 %v2651
      %2693 = vmatprep.subr.bf16.mxu0 0
      %2694 = vmatpush1.bf16.msra.mxu0 %v2652
      %2695 = vmatprep.subr.bf16.mxu0 0
      %2696 = vmatpush1.bf16.msra.mxu0 %v2653
      %2697 = vmatprep.subr.bf16.mxu0 0
      %2698 = vmatpush1.bf16.msra.mxu0 %v2654
      %2699 = vmatprep.subr.bf16.mxu0 0
      %2700 = vmatpush1.bf16.msra.mxu0 %v2655
      %2701 = vmatprep.subr.bf16.mxu0 0
      %2702 = vmatpush1.bf16.msra.mxu0 %v2656
      %2703 = vmatprep.subr.bf16.mxu0 0
      %2704 = vmatpush1.bf16.msra.mxu0 %v2657
      %2705 = vmatprep.subr.bf16.mxu0 0
      %2706 = vmatpush1.bf16.msra.mxu0 %v2658
      %2707 = vmatprep.mubr.bf16.mxu0 %v2526
      %2708 = vmatmul.mubr.bf16.gmra.mrb[0].mxu0 %v2510
      %v2709 = vpop.f32.mrb[0].mxu0
      %v2710 = vadd.f32 %v2577, %v2709
      %v2711 = vpop.f32.mrb[0].mxu0
      %v2712 = vpop.f32.mrb[0].mxu0
      %v2713 = vadd.f32 %v2577, %v2712
      %v2714 = vpop.f32.mrb[0].mxu0
      %2715 = vmatprep.mubr.bf16.mxu0 %v2530
      %2716 = vmatmul.mubr.bf16.gmra.mrb[0].mxu0 %v2514
      %v2717 = vpop.f32.mrb[0].mxu0
      %v2718 = vadd.f32 %v2577, %v2717
      %v2719 = vpop.f32.mrb[0].mxu0
      %v2720 = vpop.f32.mrb[0].mxu0
      %v2721 = vadd.f32 %v2577, %v2720
      %v2722 = vpop.f32.mrb[0].mxu0
      %2723 = vmatprep.mubr.bf16.mxu0 %v2534
      %2724 = vmatmul.mubr.bf16.gmra.mrb[0].mxu0 %v2518
      %v2725 = vpop.f32.mrb[0].mxu0
      %v2726 = vadd.f32 %v2577, %v2725
      %v2727 = vpop.f32.mrb[0].mxu0
      %v2728 = vpop.f32.mrb[0].mxu0
      %v2729 = vadd.f32 %v2577, %v2728
      %v2730 = vpop.f32.mrb[0].mxu0
      %2731 = vmatprep.mubr.bf16.mxu0 %v2538
      %2732 = vmatmul.mubr.bf16.gmra.mrb[0].mxu0 %v2522
      %v2733 = vpop.f32.mrb[0].mxu0
      %v2734 = vadd.f32 %v2577, %v2733
      %v2735 = vpop.f32.mrb[0].mxu0
      %v2736 = vpop.f32.mrb[0].mxu0
      %v2737 = vadd.f32 %v2577, %v2736
      %v2738 = vpop.f32.mrb[0].mxu0
      %2739 = vdwg.mxu0
      %v2740 = vmul.f32 %v2710, 0.2
      %v2741 = vmul.f32 %v2713, 0.2
      %v2742 = vmul.f32 %v2718, 0.2
      %v2743 = vmul.f32 %v2721, 0.2
      %v2744 = vmul.f32 %v2726, 0.2
      %v2745 = vmul.f32 %v2729, 0.2
      %v2746 = vmul.f32 %v2734, 0.2
      %v2747 = vmul.f32 %v2737, 0.2
      %v2748 = vmax.f32 %v2710, %v2740
      %v2749 = vmax.f32 %v2713, %v2741
      %v2750 = vmax.f32 %v2718, %v2742
      %v2751 = vmax.f32 %v2721, %v2743
      %v2752 = vmax.f32 %v2726, %v2744
      %v2753 = vmax.f32 %v2729, %v2745
      %v2754 = vmax.f32 %v2734, %v2746
      %v2755 = vmax.f32 %v2737, %v2747
      %v2756 = vpack.c.bf16 %v2749, %v2748
      %v2757 = vpack.c.bf16 %v2751, %v2750
      %v2758 = vpack.c.bf16 %v2753, %v2752
      %v2759 = vpack.c.bf16 %v2755, %v2754
      %v2761 = vrot.slane %v2756, 4
      %2762 = vrot.lane.b32.xlu0 %v2761, 64
      %v2763 = vpop.permute.xlu0 %2762
      %v2765 = vrot.slane %v2757, 4
      %2766 = vrot.lane.b32.xlu0 %v2765, 64
      %v2767 = vpop.permute.xlu0 %2766
      %v2769 = vrot.slane %v2758, 4
      %2770 = vrot.lane.b32.xlu0 %v2769, 64
      %v2771 = vpop.permute.xlu0 %2770
      %v2773 = vrot.slane %v2759, 4
      %2774 = vrot.lane.b32.xlu0 %v2773, 64
      %v2775 = vpop.permute.xlu0 %2774
      %v2778 = vsel %vm2107, %v2756, %v2763
      %v2782 = vsel %vm2107, %v2757, %v2767
      %v2786 = vsel %vm2107, %v2758, %v2771
      %v2790 = vsel %vm2107, %v2759, %v2775
      %v2792 = vld [vmem:[%s9] sm:$0xff]
      %v2793 = vld [vmem:[%s9 + $0x8] sm:$0xff]
      %v2794 = vld [vmem:[%s9 + $0x10] sm:$0xff]
      %v2795 = vld [vmem:[%s9 + $0x18] sm:$0xff]
      %v2796 = vld [vmem:[%s9 + $0x20] sm:$0xff]
      %v2797 = vld [vmem:[%s9 + $0x28] sm:$0xff]
      %v2798 = vld [vmem:[%s9 + $0x30] sm:$0xff]
      %v2799 = vld [vmem:[%s9 + $0x38] sm:$0xff]
      %v2800 = vld [vmem:[%s9 + $0x40] sm:$0xff]
      %v2801 = vld [vmem:[%s9 + $0x48] sm:$0xff]
      %v2802 = vld [vmem:[%s9 + $0x50] sm:$0xff]
      %v2803 = vld [vmem:[%s9 + $0x58] sm:$0xff]
      %v2804 = vld [vmem:[%s9 + $0x60] sm:$0xff]
      %v2805 = vld [vmem:[%s9 + $0x68] sm:$0xff]
      %v2806 = vld [vmem:[%s9 + $0x70] sm:$0xff]
      %v2807 = vld [vmem:[%s9 + $0x78] sm:$0xff]
      %v2808 = vld [vmem:[%s9 + $0x80] sm:$0xff]
      %v2809 = vld [vmem:[%s9 + $0x88] sm:$0xff]
      %v2810 = vld [vmem:[%s9 + $0x90] sm:$0xff]
      %v2811 = vld [vmem:[%s9 + $0x98] sm:$0xff]
      %v2812 = vld [vmem:[%s9 + $0xa0] sm:$0xff]
      %v2813 = vld [vmem:[%s9 + $0xa8] sm:$0xff]
      %v2814 = vld [vmem:[%s9 + $0xb0] sm:$0xff]
      %v2815 = vld [vmem:[%s9 + $0xb8] sm:$0xff]
      %v2816 = vld [vmem:[%s9 + $0xc0] sm:$0xff]
      %v2817 = vld [vmem:[%s9 + $0xc8] sm:$0xff]
      %v2818 = vld [vmem:[%s9 + $0xd0] sm:$0xff]
      %v2819 = vld [vmem:[%s9 + $0xd8] sm:$0xff]
      %v2820 = vld [vmem:[%s9 + $0xe0] sm:$0xff]
      %v2821 = vld [vmem:[%s9 + $0xe8] sm:$0xff]
      %v2822 = vld [vmem:[%s9 + $0xf0] sm:$0xff]
      %v2823 = vld [vmem:[%s9 + $0xf8] sm:$0xff]
      %v2824 = vld [vmem:[%s9 + $0x100] sm:$0xff]
      %v2825 = vld [vmem:[%s9 + $0x108] sm:$0xff]
      %v2826 = vld [vmem:[%s9 + $0x110] sm:$0xff]
      %v2827 = vld [vmem:[%s9 + $0x118] sm:$0xff]
      %v2828 = vld [vmem:[%s9 + $0x120] sm:$0xff]
      %v2829 = vld [vmem:[%s9 + $0x128] sm:$0xff]
      %v2830 = vld [vmem:[%s9 + $0x130] sm:$0xff]
      %v2831 = vld [vmem:[%s9 + $0x138] sm:$0xff]
      %v2832 = vld [vmem:[%s9 + $0x140] sm:$0xff]
      %v2833 = vld [vmem:[%s9 + $0x148] sm:$0xff]
      %v2834 = vld [vmem:[%s9 + $0x150] sm:$0xff]
      %v2835 = vld [vmem:[%s9 + $0x158] sm:$0xff]
      %v2836 = vld [vmem:[%s9 + $0x160] sm:$0xff]
      %v2837 = vld [vmem:[%s9 + $0x168] sm:$0xff]
      %v2838 = vld [vmem:[%s9 + $0x170] sm:$0xff]
      %v2839 = vld [vmem:[%s9 + $0x178] sm:$0xff]
      %v2840 = vld [vmem:[%s9 + $0x180] sm:$0xff]
      %v2841 = vld [vmem:[%s9 + $0x188] sm:$0xff]
      %v2842 = vld [vmem:[%s9 + $0x190] sm:$0xff]
      %v2843 = vld [vmem:[%s9 + $0x198] sm:$0xff]
      %v2844 = vld [vmem:[%s9 + $0x1a0] sm:$0xff]
      %v2845 = vld [vmem:[%s9 + $0x1a8] sm:$0xff]
      %v2846 = vld [vmem:[%s9 + $0x1b0] sm:$0xff]
      %v2847 = vld [vmem:[%s9 + $0x1b8] sm:$0xff]
      %v2848 = vld [vmem:[%s9 + $0x1c0] sm:$0xff]
      %v2849 = vld [vmem:[%s9 + $0x1c8] sm:$0xff]
      %v2850 = vld [vmem:[%s9 + $0x1d0] sm:$0xff]
      %v2851 = vld [vmem:[%s9 + $0x1d8] sm:$0xff]
      %v2852 = vld [vmem:[%s9 + $0x1e0] sm:$0xff]
      %v2853 = vld [vmem:[%s9 + $0x1e8] sm:$0xff]
      %v2854 = vld [vmem:[%s9 + $0x1f0] sm:$0xff]
      %v2855 = vld [vmem:[%s9 + $0x1f8] sm:$0xff]
      %v2856 = vld [vmem:[%s9 + $0x200] sm:$0xff]
      %v2857 = vld [vmem:[%s9 + $0x208] sm:$0xff]
      %v2858 = vld [vmem:[%s9 + $0x210] sm:$0xff]
      %v2859 = vld [vmem:[%s9 + $0x218] sm:$0xff]
      %v2860 = vld [vmem:[%s9 + $0x220] sm:$0xff]
      %v2861 = vld [vmem:[%s9 + $0x228] sm:$0xff]
      %v2862 = vld [vmem:[%s9 + $0x230] sm:$0xff]
      %v2863 = vld [vmem:[%s9 + $0x238] sm:$0xff]
      %v2864 = vld [vmem:[%s9 + $0x240] sm:$0xff]
      %v2865 = vld [vmem:[%s9 + $0x248] sm:$0xff]
      %v2866 = vld [vmem:[%s9 + $0x250] sm:$0xff]
      %v2867 = vld [vmem:[%s9 + $0x258] sm:$0xff]
      %v2868 = vld [vmem:[%s9 + $0x260] sm:$0xff]
      %v2869 = vld [vmem:[%s9 + $0x268] sm:$0xff]
      %v2870 = vld [vmem:[%s9 + $0x270] sm:$0xff]
      %v2871 = vld [vmem:[%s9 + $0x278] sm:$0xff]
      %v2872 = vld [vmem:[%s9 + $0x280] sm:$0xff]
      %v2873 = vld [vmem:[%s9 + $0x288] sm:$0xff]
      %v2874 = vld [vmem:[%s9 + $0x290] sm:$0xff]
      %v2875 = vld [vmem:[%s9 + $0x298] sm:$0xff]
      %v2876 = vld [vmem:[%s9 + $0x2a0] sm:$0xff]
      %v2877 = vld [vmem:[%s9 + $0x2a8] sm:$0xff]
      %v2878 = vld [vmem:[%s9 + $0x2b0] sm:$0xff]
      %v2879 = vld [vmem:[%s9 + $0x2b8] sm:$0xff]
      %v2880 = vld [vmem:[%s9 + $0x2c0] sm:$0xff]
      %v2881 = vld [vmem:[%s9 + $0x2c8] sm:$0xff]
      %v2882 = vld [vmem:[%s9 + $0x2d0] sm:$0xff]
      %v2883 = vld [vmem:[%s9 + $0x2d8] sm:$0xff]
      %v2884 = vld [vmem:[%s9 + $0x2e0] sm:$0xff]
      %v2885 = vld [vmem:[%s9 + $0x2e8] sm:$0xff]
      %v2886 = vld [vmem:[%s9 + $0x2f0] sm:$0xff]
      %v2887 = vld [vmem:[%s9 + $0x2f8] sm:$0xff]
      %v2888 = vld [vmem:[%s9 + $0x300] sm:$0xff]
      %v2889 = vld [vmem:[%s9 + $0x308] sm:$0xff]
      %v2890 = vld [vmem:[%s9 + $0x310] sm:$0xff]
      %v2891 = vld [vmem:[%s9 + $0x318] sm:$0xff]
      %v2892 = vld [vmem:[%s9 + $0x320] sm:$0xff]
      %v2893 = vld [vmem:[%s9 + $0x328] sm:$0xff]
      %v2894 = vld [vmem:[%s9 + $0x330] sm:$0xff]
      %v2895 = vld [vmem:[%s9 + $0x338] sm:$0xff]
      %v2896 = vld [vmem:[%s9 + $0x340] sm:$0xff]
      %v2897 = vld [vmem:[%s9 + $0x348] sm:$0xff]
      %v2898 = vld [vmem:[%s9 + $0x350] sm:$0xff]
      %v2899 = vld [vmem:[%s9 + $0x358] sm:$0xff]
      %v2900 = vld [vmem:[%s9 + $0x360] sm:$0xff]
      %v2901 = vld [vmem:[%s9 + $0x368] sm:$0xff]
      %v2902 = vld [vmem:[%s9 + $0x370] sm:$0xff]
      %v2903 = vld [vmem:[%s9 + $0x378] sm:$0xff]
      %v2904 = vld [vmem:[%s9 + $0x380] sm:$0xff]
      %v2905 = vld [vmem:[%s9 + $0x388] sm:$0xff]
      %v2906 = vld [vmem:[%s9 + $0x390] sm:$0xff]
      %v2907 = vld [vmem:[%s9 + $0x398] sm:$0xff]
      %v2908 = vld [vmem:[%s9 + $0x3a0] sm:$0xff]
      %v2909 = vld [vmem:[%s9 + $0x3a8] sm:$0xff]
      %v2910 = vld [vmem:[%s9 + $0x3b0] sm:$0xff]
      %v2911 = vld [vmem:[%s9 + $0x3b8] sm:$0xff]
      %v2912 = vld [vmem:[%s9 + $0x3c0] sm:$0xff]
      %v2913 = vld [vmem:[%s9 + $0x3c8] sm:$0xff]
      %v2914 = vld [vmem:[%s9 + $0x3d0] sm:$0xff]
      %v2915 = vld [vmem:[%s9 + $0x3d8] sm:$0xff]
      %v2916 = vld [vmem:[%s9 + $0x3e0] sm:$0xff]
      %v2917 = vld [vmem:[%s9 + $0x3e8] sm:$0xff]
      %v2918 = vld [vmem:[%s9 + $0x3f0] sm:$0xff]
      %v2919 = vld [vmem:[%s9 + $0x3f8] sm:$0xff]
      %v3048 = vunpack.c.l.b16 %v2792
      %v3049 = vunpack.c.h.b16 %v2792
      %v3050 = vunpack.c.l.b16 %v2793
      %v3051 = vunpack.c.h.b16 %v2793
      %v3052 = vunpack.c.l.b16 %v2794
      %v3053 = vunpack.c.h.b16 %v2794
      %v3054 = vunpack.c.l.b16 %v2795
      %v3055 = vunpack.c.h.b16 %v2795
      %v3056 = vunpack.c.l.b16 %v2796
      %v3057 = vunpack.c.h.b16 %v2796
      %v3058 = vunpack.c.l.b16 %v2797
      %v3059 = vunpack.c.h.b16 %v2797
      %v3060 = vunpack.c.l.b16 %v2798
      %v3061 = vunpack.c.h.b16 %v2798
      %v3062 = vunpack.c.l.b16 %v2799
      %v3063 = vunpack.c.h.b16 %v2799
      %v3064 = vunpack.c.l.b16 %v2800
      %v3065 = vunpack.c.h.b16 %v2800
      %v3066 = vunpack.c.l.b16 %v2801
      %v3067 = vunpack.c.h.b16 %v2801
      %v3068 = vunpack.c.l.b16 %v2802
      %v3069 = vunpack.c.h.b16 %v2802
      %v3070 = vunpack.c.l.b16 %v2803
      %v3071 = vunpack.c.h.b16 %v2803
      %v3072 = vunpack.c.l.b16 %v2804
      %v3073 = vunpack.c.h.b16 %v2804
      %v3074 = vunpack.c.l.b16 %v2805
      %v3075 = vunpack.c.h.b16 %v2805
      %v3076 = vunpack.c.l.b16 %v2806
      %v3077 = vunpack.c.h.b16 %v2806
      %v3078 = vunpack.c.l.b16 %v2807
      %v3079 = vunpack.c.h.b16 %v2807
      %v3080 = vunpack.c.l.b16 %v2808
      %v3081 = vunpack.c.h.b16 %v2808
      %v3082 = vunpack.c.l.b16 %v2809
      %v3083 = vunpack.c.h.b16 %v2809
      %v3084 = vunpack.c.l.b16 %v2810
      %v3085 = vunpack.c.h.b16 %v2810
      %v3086 = vunpack.c.l.b16 %v2811
      %v3087 = vunpack.c.h.b16 %v2811
      %v3088 = vunpack.c.l.b16 %v2812
      %v3089 = vunpack.c.h.b16 %v2812
      %v3090 = vunpack.c.l.b16 %v2813
      %v3091 = vunpack.c.h.b16 %v2813
      %v3092 = vunpack.c.l.b16 %v2814
      %v3093 = vunpack.c.h.b16 %v2814
      %v3094 = vunpack.c.l.b16 %v2815
      %v3095 = vunpack.c.h.b16 %v2815
      %v3096 = vunpack.c.l.b16 %v2816
      %v3097 = vunpack.c.h.b16 %v2816
      %v3098 = vunpack.c.l.b16 %v2817
      %v3099 = vunpack.c.h.b16 %v2817
      %v3100 = vunpack.c.l.b16 %v2818
      %v3101 = vunpack.c.h.b16 %v2818
      %v3102 = vunpack.c.l.b16 %v2819
      %v3103 = vunpack.c.h.b16 %v2819
      %v3104 = vunpack.c.l.b16 %v2820
      %v3105 = vunpack.c.h.b16 %v2820
      %v3106 = vunpack.c.l.b16 %v2821
      %v3107 = vunpack.c.h.b16 %v2821
      %v3108 = vunpack.c.l.b16 %v2822
      %v3109 = vunpack.c.h.b16 %v2822
      %v3110 = vunpack.c.l.b16 %v2823
      %v3111 = vunpack.c.h.b16 %v2823
      %v3112 = vunpack.c.l.b16 %v2824
      %v3113 = vunpack.c.h.b16 %v2824
      %v3114 = vunpack.c.l.b16 %v2825
      %v3115 = vunpack.c.h.b16 %v2825
      %v3116 = vunpack.c.l.b16 %v2826
      %v3117 = vunpack.c.h.b16 %v2826
      %v3118 = vunpack.c.l.b16 %v2827
      %v3119 = vunpack.c.h.b16 %v2827
      %v3120 = vunpack.c.l.b16 %v2828
      %v3121 = vunpack.c.h.b16 %v2828
      %v3122 = vunpack.c.l.b16 %v2829
      %v3123 = vunpack.c.h.b16 %v2829
      %v3124 = vunpack.c.l.b16 %v2830
      %v3125 = vunpack.c.h.b16 %v2830
      %v3126 = vunpack.c.l.b16 %v2831
      %v3127 = vunpack.c.h.b16 %v2831
      %v3128 = vunpack.c.l.b16 %v2832
      %v3129 = vunpack.c.h.b16 %v2832
      %v3130 = vunpack.c.l.b16 %v2833
      %v3131 = vunpack.c.h.b16 %v2833
      %v3132 = vunpack.c.l.b16 %v2834
      %v3133 = vunpack.c.h.b16 %v2834
      %v3134 = vunpack.c.l.b16 %v2835
      %v3135 = vunpack.c.h.b16 %v2835
      %v3136 = vunpack.c.l.b16 %v2836
      %v3137 = vunpack.c.h.b16 %v2836
      %v3138 = vunpack.c.l.b16 %v2837
      %v3139 = vunpack.c.h.b16 %v2837
      %v3140 = vunpack.c.l.b16 %v2838
      %v3141 = vunpack.c.h.b16 %v2838
      %v3142 = vunpack.c.l.b16 %v2839
      %v3143 = vunpack.c.h.b16 %v2839
      %v3144 = vunpack.c.l.b16 %v2840
      %v3145 = vunpack.c.h.b16 %v2840
      %v3146 = vunpack.c.l.b16 %v2841
      %v3147 = vunpack.c.h.b16 %v2841
      %v3148 = vunpack.c.l.b16 %v2842
      %v3149 = vunpack.c.h.b16 %v2842
      %v3150 = vunpack.c.l.b16 %v2843
      %v3151 = vunpack.c.h.b16 %v2843
      %v3152 = vunpack.c.l.b16 %v2844
      %v3153 = vunpack.c.h.b16 %v2844
      %v3154 = vunpack.c.l.b16 %v2845
      %v3155 = vunpack.c.h.b16 %v2845
      %v3156 = vunpack.c.l.b16 %v2846
      %v3157 = vunpack.c.h.b16 %v2846
      %v3158 = vunpack.c.l.b16 %v2847
      %v3159 = vunpack.c.h.b16 %v2847
      %v3160 = vunpack.c.l.b16 %v2848
      %v3161 = vunpack.c.h.b16 %v2848
      %v3162 = vunpack.c.l.b16 %v2849
      %v3163 = vunpack.c.h.b16 %v2849
      %v3164 = vunpack.c.l.b16 %v2850
      %v3165 = vunpack.c.h.b16 %v2850
      %v3166 = vunpack.c.l.b16 %v2851
      %v3167 = vunpack.c.h.b16 %v2851
      %v3168 = vunpack.c.l.b16 %v2852
      %v3169 = vunpack.c.h.b16 %v2852
      %v3170 = vunpack.c.l.b16 %v2853
      %v3171 = vunpack.c.h.b16 %v2853
      %v3172 = vunpack.c.l.b16 %v2854
      %v3173 = vunpack.c.h.b16 %v2854
      %v3174 = vunpack.c.l.b16 %v2855
      %v3175 = vunpack.c.h.b16 %v2855
      %v3176 = vunpack.c.l.b16 %v2856
      %v3177 = vunpack.c.h.b16 %v2856
      %v3178 = vunpack.c.l.b16 %v2857
      %v3179 = vunpack.c.h.b16 %v2857
      %v3180 = vunpack.c.l.b16 %v2858
      %v3181 = vunpack.c.h.b16 %v2858
      %v3182 = vunpack.c.l.b16 %v2859
      %v3183 = vunpack.c.h.b16 %v2859
      %v3184 = vunpack.c.l.b16 %v2860
      %v3185 = vunpack.c.h.b16 %v2860
      %v3186 = vunpack.c.l.b16 %v2861
      %v3187 = vunpack.c.h.b16 %v2861
      %v3188 = vunpack.c.l.b16 %v2862
      %v3189 = vunpack.c.h.b16 %v2862
      %v3190 = vunpack.c.l.b16 %v2863
      %v3191 = vunpack.c.h.b16 %v2863
      %v3192 = vunpack.c.l.b16 %v2864
      %v3193 = vunpack.c.h.b16 %v2864
      %v3194 = vunpack.c.l.b16 %v2865
      %v3195 = vunpack.c.h.b16 %v2865
      %v3196 = vunpack.c.l.b16 %v2866
      %v3197 = vunpack.c.h.b16 %v2866
      %v3198 = vunpack.c.l.b16 %v2867
      %v3199 = vunpack.c.h.b16 %v2867
      %v3200 = vunpack.c.l.b16 %v2868
      %v3201 = vunpack.c.h.b16 %v2868
      %v3202 = vunpack.c.l.b16 %v2869
      %v3203 = vunpack.c.h.b16 %v2869
      %v3204 = vunpack.c.l.b16 %v2870
      %v3205 = vunpack.c.h.b16 %v2870
      %v3206 = vunpack.c.l.b16 %v2871
      %v3207 = vunpack.c.h.b16 %v2871
      %v3208 = vunpack.c.l.b16 %v2872
      %v3209 = vunpack.c.h.b16 %v2872
      %v3210 = vunpack.c.l.b16 %v2873
      %v3211 = vunpack.c.h.b16 %v2873
      %v3212 = vunpack.c.l.b16 %v2874
      %v3213 = vunpack.c.h.b16 %v2874
      %v3214 = vunpack.c.l.b16 %v2875
      %v3215 = vunpack.c.h.b16 %v2875
      %v3216 = vunpack.c.l.b16 %v2876
      %v3217 = vunpack.c.h.b16 %v2876
      %v3218 = vunpack.c.l.b16 %v2877
      %v3219 = vunpack.c.h.b16 %v2877
      %v3220 = vunpack.c.l.b16 %v2878
      %v3221 = vunpack.c.h.b16 %v2878
      %v3222 = vunpack.c.l.b16 %v2879
      %v3223 = vunpack.c.h.b16 %v2879
      %v3224 = vunpack.c.l.b16 %v2880
      %v3225 = vunpack.c.h.b16 %v2880
      %v3226 = vunpack.c.l.b16 %v2881
      %v3227 = vunpack.c.h.b16 %v2881
      %v3228 = vunpack.c.l.b16 %v2882
      %v3229 = vunpack.c.h.b16 %v2882
      %v3230 = vunpack.c.l.b16 %v2883
      %v3231 = vunpack.c.h.b16 %v2883
      %v3232 = vunpack.c.l.b16 %v2884
      %v3233 = vunpack.c.h.b16 %v2884
      %v3234 = vunpack.c.l.b16 %v2885
      %v3235 = vunpack.c.h.b16 %v2885
      %v3236 = vunpack.c.l.b16 %v2886
      %v3237 = vunpack.c.h.b16 %v2886
      %v3238 = vunpack.c.l.b16 %v2887
      %v3239 = vunpack.c.h.b16 %v2887
      %v3240 = vunpack.c.l.b16 %v2888
      %v3241 = vunpack.c.h.b16 %v2888
      %v3242 = vunpack.c.l.b16 %v2889
      %v3243 = vunpack.c.h.b16 %v2889
      %v3244 = vunpack.c.l.b16 %v2890
      %v3245 = vunpack.c.h.b16 %v2890
      %v3246 = vunpack.c.l.b16 %v2891
      %v3247 = vunpack.c.h.b16 %v2891
      %v3248 = vunpack.c.l.b16 %v2892
      %v3249 = vunpack.c.h.b16 %v2892
      %v3250 = vunpack.c.l.b16 %v2893
      %v3251 = vunpack.c.h.b16 %v2893
      %v3252 = vunpack.c.l.b16 %v2894
      %v3253 = vunpack.c.h.b16 %v2894
      %v3254 = vunpack.c.l.b16 %v2895
      %v3255 = vunpack.c.h.b16 %v2895
      %v3256 = vunpack.c.l.b16 %v2896
      %v3257 = vunpack.c.h.b16 %v2896
      %v3258 = vunpack.c.l.b16 %v2897
      %v3259 = vunpack.c.h.b16 %v2897
      %v3260 = vunpack.c.l.b16 %v2898
      %v3261 = vunpack.c.h.b16 %v2898
      %v3262 = vunpack.c.l.b16 %v2899
      %v3263 = vunpack.c.h.b16 %v2899
      %v3264 = vunpack.c.l.b16 %v2900
      %v3265 = vunpack.c.h.b16 %v2900
      %v3266 = vunpack.c.l.b16 %v2901
      %v3267 = vunpack.c.h.b16 %v2901
      %v3268 = vunpack.c.l.b16 %v2902
      %v3269 = vunpack.c.h.b16 %v2902
      %v3270 = vunpack.c.l.b16 %v2903
      %v3271 = vunpack.c.h.b16 %v2903
      %v3272 = vunpack.c.l.b16 %v2904
      %v3273 = vunpack.c.h.b16 %v2904
      %v3274 = vunpack.c.l.b16 %v2905
      %v3275 = vunpack.c.h.b16 %v2905
      %v3276 = vunpack.c.l.b16 %v2906
      %v3277 = vunpack.c.h.b16 %v2906
      %v3278 = vunpack.c.l.b16 %v2907
      %v3279 = vunpack.c.h.b16 %v2907
      %v3280 = vunpack.c.l.b16 %v2908
      %v3281 = vunpack.c.h.b16 %v2908
      %v3282 = vunpack.c.l.b16 %v2909
      %v3283 = vunpack.c.h.b16 %v2909
      %v3284 = vunpack.c.l.b16 %v2910
      %v3285 = vunpack.c.h.b16 %v2910
      %v3286 = vunpack.c.l.b16 %v2911
      %v3287 = vunpack.c.h.b16 %v2911
      %v3288 = vunpack.c.l.b16 %v2912
      %v3289 = vunpack.c.h.b16 %v2912
      %v3290 = vunpack.c.l.b16 %v2913
      %v3291 = vunpack.c.h.b16 %v2913
      %v3292 = vunpack.c.l.b16 %v2914
      %v3293 = vunpack.c.h.b16 %v2914
      %v3294 = vunpack.c.l.b16 %v2915
      %v3295 = vunpack.c.h.b16 %v2915
      %v3296 = vunpack.c.l.b16 %v2916
      %v3297 = vunpack.c.h.b16 %v2916
      %v3298 = vunpack.c.l.b16 %v2917
      %v3299 = vunpack.c.h.b16 %v2917
      %v3300 = vunpack.c.l.b16 %v2918
      %v3301 = vunpack.c.h.b16 %v2918
      %v3302 = vunpack.c.l.b16 %v2919
      %v3303 = vunpack.c.h.b16 %v2919
      %v3304 = vpack.c.b16 %v3052, %v3048
      %v3305 = vpack.c.b16 %v3053, %v3049
      %v3306 = vpack.c.b16 %v3054, %v3050
      %v3307 = vpack.c.b16 %v3055, %v3051
      %v3308 = vpack.c.b16 %v3060, %v3056
      %v3309 = vpack.c.b16 %v3061, %v3057
      %v3310 = vpack.c.b16 %v3062, %v3058
      %v3311 = vpack.c.b16 %v3063, %v3059
      %v3312 = vpack.c.b16 %v3068, %v3064
      %v3313 = vpack.c.b16 %v3069, %v3065
      %v3314 = vpack.c.b16 %v3070, %v3066
      %v3315 = vpack.c.b16 %v3071, %v3067
      %v3316 = vpack.c.b16 %v3076, %v3072
      %v3317 = vpack.c.b16 %v3077, %v3073
      %v3318 = vpack.c.b16 %v3078, %v3074
      %v3319 = vpack.c.b16 %v3079, %v3075
      %v3320 = vpack.c.b16 %v3084, %v3080
      %v3321 = vpack.c.b16 %v3085, %v3081
      %v3322 = vpack.c.b16 %v3086, %v3082
      %v3323 = vpack.c.b16 %v3087, %v3083
      %v3324 = vpack.c.b16 %v3092, %v3088
      %v3325 = vpack.c.b16 %v3093, %v3089
      %v3326 = vpack.c.b16 %v3094, %v3090
      %v3327 = vpack.c.b16 %v3095, %v3091
      %v3328 = vpack.c.b16 %v3100, %v3096
      %v3329 = vpack.c.b16 %v3101, %v3097
      %v3330 = vpack.c.b16 %v3102, %v3098
      %v3331 = vpack.c.b16 %v3103, %v3099
      %v3332 = vpack.c.b16 %v3108, %v3104
      %v3333 = vpack.c.b16 %v3109, %v3105
      %v3334 = vpack.c.b16 %v3110, %v3106
      %v3335 = vpack.c.b16 %v3111, %v3107
      %v3336 = vpack.c.b16 %v3116, %v3112
      %v3337 = vpack.c.b16 %v3117, %v3113
      %v3338 = vpack.c.b16 %v3118, %v3114
      %v3339 = vpack.c.b16 %v3119, %v3115
      %v3340 = vpack.c.b16 %v3124, %v3120
      %v3341 = vpack.c.b16 %v3125, %v3121
      %v3342 = vpack.c.b16 %v3126, %v3122
      %v3343 = vpack.c.b16 %v3127, %v3123
      %v3344 = vpack.c.b16 %v3132, %v3128
      %v3345 = vpack.c.b16 %v3133, %v3129
      %v3346 = vpack.c.b16 %v3134, %v3130
      %v3347 = vpack.c.b16 %v3135, %v3131
      %v3348 = vpack.c.b16 %v3140, %v3136
      %v3349 = vpack.c.b16 %v3141, %v3137
      %v3350 = vpack.c.b16 %v3142, %v3138
      %v3351 = vpack.c.b16 %v3143, %v3139
      %v3352 = vpack.c.b16 %v3148, %v3144
      %v3353 = vpack.c.b16 %v3149, %v3145
      %v3354 = vpack.c.b16 %v3150, %v3146
      %v3355 = vpack.c.b16 %v3151, %v3147
      %v3356 = vpack.c.b16 %v3156, %v3152
      %v3357 = vpack.c.b16 %v3157, %v3153
      %v3358 = vpack.c.b16 %v3158, %v3154
      %v3359 = vpack.c.b16 %v3159, %v3155
      %v3360 = vpack.c.b16 %v3164, %v3160
      %v3361 = vpack.c.b16 %v3165, %v3161
      %v3362 = vpack.c.b16 %v3166, %v3162
      %v3363 = vpack.c.b16 %v3167, %v3163
      %v3364 = vpack.c.b16 %v3172, %v3168
      %v3365 = vpack.c.b16 %v3173, %v3169
      %v3366 = vpack.c.b16 %v3174, %v3170
      %v3367 = vpack.c.b16 %v3175, %v3171
      %v3368 = vpack.c.b16 %v3180, %v3176
      %v3369 = vpack.c.b16 %v3181, %v3177
      %v3370 = vpack.c.b16 %v3182, %v3178
      %v3371 = vpack.c.b16 %v3183, %v3179
      %v3372 = vpack.c.b16 %v3188, %v3184
      %v3373 = vpack.c.b16 %v3189, %v3185
      %v3374 = vpack.c.b16 %v3190, %v3186
      %v3375 = vpack.c.b16 %v3191, %v3187
      %v3376 = vpack.c.b16 %v3196, %v3192
      %v3377 = vpack.c.b16 %v3197, %v3193
      %v3378 = vpack.c.b16 %v3198, %v3194
      %v3379 = vpack.c.b16 %v3199, %v3195
      %v3380 = vpack.c.b16 %v3204, %v3200
      %v3381 = vpack.c.b16 %v3205, %v3201
      %v3382 = vpack.c.b16 %v3206, %v3202
      %v3383 = vpack.c.b16 %v3207, %v3203
      %v3384 = vpack.c.b16 %v3212, %v3208
      %v3385 = vpack.c.b16 %v3213, %v3209
      %v3386 = vpack.c.b16 %v3214, %v3210
      %v3387 = vpack.c.b16 %v3215, %v3211
      %v3388 = vpack.c.b16 %v3220, %v3216
      %v3389 = vpack.c.b16 %v3221, %v3217
      %v3390 = vpack.c.b16 %v3222, %v3218
      %v3391 = vpack.c.b16 %v3223, %v3219
      %v3392 = vpack.c.b16 %v3228, %v3224
      %v3393 = vpack.c.b16 %v3229, %v3225
      %v3394 = vpack.c.b16 %v3230, %v3226
      %v3395 = vpack.c.b16 %v3231, %v3227
      %v3396 = vpack.c.b16 %v3236, %v3232
      %v3397 = vpack.c.b16 %v3237, %v3233
      %v3398 = vpack.c.b16 %v3238, %v3234
      %v3399 = vpack.c.b16 %v3239, %v3235
      %v3400 = vpack.c.b16 %v3244, %v3240
      %v3401 = vpack.c.b16 %v3245, %v3241
      %v3402 = vpack.c.b16 %v3246, %v3242
      %v3403 = vpack.c.b16 %v3247, %v3243
      %v3404 = vpack.c.b16 %v3252, %v3248
      %v3405 = vpack.c.b16 %v3253, %v3249
      %v3406 = vpack.c.b16 %v3254, %v3250
      %v3407 = vpack.c.b16 %v3255, %v3251
      %v3408 = vpack.c.b16 %v3260, %v3256
      %v3409 = vpack.c.b16 %v3261, %v3257
      %v3410 = vpack.c.b16 %v3262, %v3258
      %v3411 = vpack.c.b16 %v3263, %v3259
      %v3412 = vpack.c.b16 %v3268, %v3264
      %v3413 = vpack.c.b16 %v3269, %v3265
      %v3414 = vpack.c.b16 %v3270, %v3266
      %v3415 = vpack.c.b16 %v3271, %v3267
      %v3416 = vpack.c.b16 %v3276, %v3272
      %v3417 = vpack.c.b16 %v3277, %v3273
      %v3418 = vpack.c.b16 %v3278, %v3274
      %v3419 = vpack.c.b16 %v3279, %v3275
      %v3420 = vpack.c.b16 %v3284, %v3280
      %v3421 = vpack.c.b16 %v3285, %v3281
      %v3422 = vpack.c.b16 %v3286, %v3282
      %v3423 = vpack.c.b16 %v3287, %v3283
      %v3424 = vpack.c.b16 %v3292, %v3288
      %v3425 = vpack.c.b16 %v3293, %v3289
      %v3426 = vpack.c.b16 %v3294, %v3290
      %v3427 = vpack.c.b16 %v3295, %v3291
      %v3428 = vpack.c.b16 %v3300, %v3296
      %v3429 = vpack.c.b16 %v3301, %v3297
      %v3430 = vpack.c.b16 %v3302, %v3298
      %v3431 = vpack.c.b16 %v3303, %v3299
      %3560 = vmatprep.subr.bf16.mxu0 %v3305
      %3561 = vmatpush1.bf16.msra.mxu0 %v3304
      %3562 = vmatprep.subr.bf16.mxu0 %v3309
      %3563 = vmatpush1.bf16.msra.mxu0 %v3308
      %3564 = vmatprep.subr.bf16.mxu0 %v3313
      %3565 = vmatpush1.bf16.msra.mxu0 %v3312
      %3566 = vmatprep.subr.bf16.mxu0 %v3317
      %3567 = vmatpush1.bf16.msra.mxu0 %v3316
      %3568 = vmatprep.subr.bf16.mxu0 %v3321
      %3569 = vmatpush1.bf16.msra.mxu0 %v3320
      %3570 = vmatprep.subr.bf16.mxu0 %v3325
      %3571 = vmatpush1.bf16.msra.mxu0 %v3324
      %3572 = vmatprep.subr.bf16.mxu0 %v3329
      %3573 = vmatpush1.bf16.msra.mxu0 %v3328
      %3574 = vmatprep.subr.bf16.mxu0 %v3333
      %3575 = vmatpush1.bf16.msra.mxu0 %v3332
      %3576 = vmatprep.subr.bf16.mxu0 %v3337
      %3577 = vmatpush1.bf16.msra.mxu0 %v3336
      %3578 = vmatprep.subr.bf16.mxu0 %v3341
      %3579 = vmatpush1.bf16.msra.mxu0 %v3340
      %3580 = vmatprep.subr.bf16.mxu0 %v3345
      %3581 = vmatpush1.bf16.msra.mxu0 %v3344
      %3582 = vmatprep.subr.bf16.mxu0 %v3349
      %3583 = vmatpush1.bf16.msra.mxu0 %v3348
      %3584 = vmatprep.subr.bf16.mxu0 %v3353
      %3585 = vmatpush1.bf16.msra.mxu0 %v3352
      %3586 = vmatprep.subr.bf16.mxu0 %v3357
      %3587 = vmatpush1.bf16.msra.mxu0 %v3356
      %3588 = vmatprep.subr.bf16.mxu0 %v3361
      %3589 = vmatpush1.bf16.msra.mxu0 %v3360
      %3590 = vmatprep.subr.bf16.mxu0 %v3365
      %3591 = vmatpush1.bf16.msra.mxu0 %v3364
      %3592 = vmatprep.mubr.bf16.mxu0 %v2782
      %3593 = vmatmul.mubr.bf16.gmra.mrb[0].mxu0 %v2778
      %v3594 = vpop.f32.mrb[0].mxu0
      %v3595 = vadd.f32 0.0, %v3594
      %v3596 = vpop.f32.mrb[0].mxu0
      %v3597 = vadd.f32 0.0, %v3596
      %v3598 = vpop.f32.mrb[0].mxu0
      %v3599 = vpop.f32.mrb[0].mxu0
      %3600 = vdwg.mxu0
      %3601 = vmatprep.subr.bf16.mxu0 %v3369
      %3602 = vmatpush1.bf16.msra.mxu0 %v3368
      %3603 = vmatprep.subr.bf16.mxu0 %v3373
      %3604 = vmatpush1.bf16.msra.mxu0 %v3372
      %3605 = vmatprep.subr.bf16.mxu0 %v3377
      %3606 = vmatpush1.bf16.msra.mxu0 %v3376
      %3607 = vmatprep.subr.bf16.mxu0 %v3381
      %3608 = vmatpush1.bf16.msra.mxu0 %v3380
      %3609 = vmatprep.subr.bf16.mxu0 %v3385
      %3610 = vmatpush1.bf16.msra.mxu0 %v3384
      %3611 = vmatprep.subr.bf16.mxu0 %v3389
      %3612 = vmatpush1.bf16.msra.mxu0 %v3388
      %3613 = vmatprep.subr.bf16.mxu0 %v3393
      %3614 = vmatpush1.bf16.msra.mxu0 %v3392
      %3615 = vmatprep.subr.bf16.mxu0 %v3397
      %3616 = vmatpush1.bf16.msra.mxu0 %v3396
      %3617 = vmatprep.subr.bf16.mxu0 %v3401
      %3618 = vmatpush1.bf16.msra.mxu0 %v3400
      %3619 = vmatprep.subr.bf16.mxu0 %v3405
      %3620 = vmatpush1.bf16.msra.mxu0 %v3404
      %3621 = vmatprep.subr.bf16.mxu0 %v3409
      %3622 = vmatpush1.bf16.msra.mxu0 %v3408
      %3623 = vmatprep.subr.bf16.mxu0 %v3413
      %3624 = vmatpush1.bf16.msra.mxu0 %v3412
      %3625 = vmatprep.subr.bf16.mxu0 %v3417
      %3626 = vmatpush1.bf16.msra.mxu0 %v3416
      %3627 = vmatprep.subr.bf16.mxu0 %v3421
      %3628 = vmatpush1.bf16.msra.mxu0 %v3420
      %3629 = vmatprep.subr.bf16.mxu0 %v3425
      %3630 = vmatpush1.bf16.msra.mxu0 %v3424
      %3631 = vmatprep.subr.bf16.mxu0 %v3429
      %3632 = vmatpush1.bf16.msra.mxu0 %v3428
      %3633 = vmatprep.mubr.bf16.mxu0 %v2790
      %3634 = vmatmul.mubr.bf16.gmra.mrb[0].mxu0 %v2786
      %v3635 = vpop.f32.mrb[0].mxu0
      %v3636 = vadd.f32 %v3595, %v3635
      %v3637 = vpop.f32.mrb[0].mxu0
      %v3638 = vadd.f32 %v3597, %v3637
      %v3639 = vpop.f32.mrb[0].mxu0
      %v3640 = vpop.f32.mrb[0].mxu0
      %3641 = vdwg.mxu0
      %3642 = vmatprep.subr.bf16.mxu0 %v3307
      %3643 = vmatpush1.bf16.msra.mxu0 %v3306
      %3644 = vmatprep.subr.bf16.mxu0 %v3311
      %3645 = vmatpush1.bf16.msra.mxu0 %v3310
      %3646 = vmatprep.subr.bf16.mxu0 %v3315
      %3647 = vmatpush1.bf16.msra.mxu0 %v3314
      %3648 = vmatprep.subr.bf16.mxu0 %v3319
      %3649 = vmatpush1.bf16.msra.mxu0 %v3318
      %3650 = vmatprep.subr.bf16.mxu0 %v3323
      %3651 = vmatpush1.bf16.msra.mxu0 %v3322
      %3652 = vmatprep.subr.bf16.mxu0 %v3327
      %3653 = vmatpush1.bf16.msra.mxu0 %v3326
      %3654 = vmatprep.subr.bf16.mxu0 %v3331
      %3655 = vmatpush1.bf16.msra.mxu0 %v3330
      %3656 = vmatprep.subr.bf16.mxu0 %v3335
      %3657 = vmatpush1.bf16.msra.mxu0 %v3334
      %3658 = vmatprep.subr.bf16.mxu0 %v3339
      %3659 = vmatpush1.bf16.msra.mxu0 %v3338
      %3660 = vmatprep.subr.bf16.mxu0 %v3343
      %3661 = vmatpush1.bf16.msra.mxu0 %v3342
      %3662 = vmatprep.subr.bf16.mxu0 %v3347
      %3663 = vmatpush1.bf16.msra.mxu0 %v3346
      %3664 = vmatprep.subr.bf16.mxu0 %v3351
      %3665 = vmatpush1.bf16.msra.mxu0 %v3350
      %3666 = vmatprep.subr.bf16.mxu0 %v3355
      %3667 = vmatpush1.bf16.msra.mxu0 %v3354
      %3668 = vmatprep.subr.bf16.mxu0 %v3359
      %3669 = vmatpush1.bf16.msra.mxu0 %v3358
      %3670 = vmatprep.subr.bf16.mxu0 %v3363
      %3671 = vmatpush1.bf16.msra.mxu0 %v3362
      %3672 = vmatprep.subr.bf16.mxu0 %v3367
      %3673 = vmatpush1.bf16.msra.mxu0 %v3366
      %3674 = vmatprep.mubr.bf16.mxu0 %v2782
      %3675 = vmatmul.mubr.bf16.gmra.mrb[0].mxu0 %v2778
      %v3676 = vpop.f32.mrb[0].mxu0
      %v3677 = vadd.f32 0.0, %v3676
      %v3678 = vpop.f32.mrb[0].mxu0
      %v3679 = vadd.f32 0.0, %v3678
      %v3680 = vpop.f32.mrb[0].mxu0
      %v3681 = vpop.f32.mrb[0].mxu0
      %3682 = vdwg.mxu0
      %3683 = vmatprep.subr.bf16.mxu0 %v3371
      %3684 = vmatpush1.bf16.msra.mxu0 %v3370
      %3685 = vmatprep.subr.bf16.mxu0 %v3375
      %3686 = vmatpush1.bf16.msra.mxu0 %v3374
      %3687 = vmatprep.subr.bf16.mxu0 %v3379
      %3688 = vmatpush1.bf16.msra.mxu0 %v3378
      %3689 = vmatprep.subr.bf16.mxu0 %v3383
      %3690 = vmatpush1.bf16.msra.mxu0 %v3382
      %3691 = vmatprep.subr.bf16.mxu0 %v3387
      %3692 = vmatpush1.bf16.msra.mxu0 %v3386
      %3693 = vmatprep.subr.bf16.mxu0 %v3391
      %3694 = vmatpush1.bf16.msra.mxu0 %v3390
      %3695 = vmatprep.subr.bf16.mxu0 %v3395
      %3696 = vmatpush1.bf16.msra.mxu0 %v3394
      %3697 = vmatprep.subr.bf16.mxu0 %v3399
      %3698 = vmatpush1.bf16.msra.mxu0 %v3398
      %3699 = vmatprep.subr.bf16.mxu0 %v3403
      %3700 = vmatpush1.bf16.msra.mxu0 %v3402
      %3701 = vmatprep.subr.bf16.mxu0 %v3407
      %3702 = vmatpush1.bf16.msra.mxu0 %v3406
      %3703 = vmatprep.subr.bf16.mxu0 %v3411
      %3704 = vmatpush1.bf16.msra.mxu0 %v3410
      %3705 = vmatprep.subr.bf16.mxu0 %v3415
      %3706 = vmatpush1.bf16.msra.mxu0 %v3414
      %3707 = vmatprep.subr.bf16.mxu0 %v3419
      %3708 = vmatpush1.bf16.msra.mxu0 %v3418
      %3709 = vmatprep.subr.bf16.mxu0 %v3423
      %3710 = vmatpush1.bf16.msra.mxu0 %v3422
      %3711 = vmatprep.subr.bf16.mxu0 %v3427
      %3712 = vmatpush1.bf16.msra.mxu0 %v3426
      %3713 = vmatprep.subr.bf16.mxu0 %v3431
      %3714 = vmatpush1.bf16.msra.mxu0 %v3430
      %3715 = vmatprep.mubr.bf16.mxu0 %v2790
      %3716 = vmatmul.mubr.bf16.gmra.mrb[0].mxu0 %v2786
      %v3717 = vpop.f32.mrb[0].mxu0
      %v3718 = vadd.f32 %v3677, %v3717
      %v3719 = vpop.f32.mrb[0].mxu0
      %v3720 = vadd.f32 %v3679, %v3719
      %v3721 = vpop.f32.mrb[0].mxu0
      %v3722 = vpop.f32.mrb[0].mxu0
      %3723 = vdwg.mxu0
      %v3724 = vld [vmem:[%s10] sm:$0xff]
      %v3725 = vld [vmem:[%s10 + $0x8] sm:$0xff]
      %v3726 = vld [vmem:[%s10 + $0x10] sm:$0xff]
      %v3727 = vld [vmem:[%s10 + $0x18] sm:$0xff]
      %v3728 = vmul.f32 %v3636, %v3724
      %v3729 = vmul.f32 %v3638, %v3725
      %v3730 = vmul.f32 %v3718, %v3726
      %v3731 = vmul.f32 %v3720, %v3727
      %v3732 = vrot.slane %v3728, 4
      %v3733 = vadd.f32 %v3728, %v3732
      %v3734 = vrot.slane %v3733, 2
      %v3735 = vadd.f32 %v3733, %v3734
      %v3736 = vrot.slane %v3735, 1
      %v3737 = vadd.f32 %v3735, %v3736
      %v3738 = vrot.slane %v3729, 4
      %v3739 = vadd.f32 %v3729, %v3738
      %v3740 = vrot.slane %v3739, 2
      %v3741 = vadd.f32 %v3739, %v3740
      %v3742 = vrot.slane %v3741, 1
      %v3743 = vadd.f32 %v3741, %v3742
      %v3744 = vrot.slane %v3730, 4
      %v3745 = vadd.f32 %v3730, %v3744
      %v3746 = vrot.slane %v3745, 2
      %v3747 = vadd.f32 %v3745, %v3746
      %v3748 = vrot.slane %v3747, 1
      %v3749 = vadd.f32 %v3747, %v3748
      %v3750 = vrot.slane %v3731, 4
      %v3751 = vadd.f32 %v3731, %v3750
      %v3752 = vrot.slane %v3751, 2
      %v3753 = vadd.f32 %v3751, %v3752
      %v3754 = vrot.slane %v3753, 1
      %v3755 = vadd.f32 %v3753, %v3754
      %v3756 = vpack.c.bf16 %v3737, %v3737
      %v3757 = vpack.c.bf16 %v3743, %v3743
      %v3758 = vpack.c.bf16 %v3749, %v3749
      %v3759 = vpack.c.bf16 %v3755, %v3755
      %v3760 = vld [vmem:[%s11] sm:$0xf]
      %v3761 = vld [vmem:[%s11 + $0x4] sm:$0xf]
      %v3762 = vld [vmem:[%s11 + $0x8] sm:$0xf]
      %v3763 = vld [vmem:[%s11 + $0xc] sm:$0xf]
      %v3764 = vld [vmem:[%s11 + $0x10] sm:$0xf]
      %v3765 = vld [vmem:[%s11 + $0x14] sm:$0xf]
      %v3766 = vld [vmem:[%s11 + $0x18] sm:$0xf]
      %v3767 = vld [vmem:[%s11 + $0x1c] sm:$0xf]
      %v3768 = vld [vmem:[%s11 + $0x20] sm:$0xf]
      %v3769 = vld [vmem:[%s11 + $0x24] sm:$0xf]
      %v3770 = vld [vmem:[%s11 + $0x28] sm:$0xf]
      %v3771 = vld [vmem:[%s11 + $0x2c] sm:$0xf]
      %v3772 = vld [vmem:[%s11 + $0x30] sm:$0xf]
      %v3773 = vld [vmem:[%s11 + $0x34] sm:$0xf]
      %v3774 = vld [vmem:[%s11 + $0x38] sm:$0xf]
      %v3775 = vld [vmem:[%s11 + $0x3c] sm:$0xf]
      %v3776 = vld [vmem:[%s11 + $0x40] sm:$0xf]
      %v3777 = vld [vmem:[%s11 + $0x44] sm:$0xf]
      %v3778 = vld [vmem:[%s11 + $0x48] sm:$0xf]
      %v3779 = vld [vmem:[%s11 + $0x4c] sm:$0xf]
      %v3780 = vld [vmem:[%s11 + $0x50] sm:$0xf]
      %v3781 = vld [vmem:[%s11 + $0x54] sm:$0xf]
      %v3782 = vld [vmem:[%s11 + $0x58] sm:$0xf]
      %v3783 = vld [vmem:[%s11 + $0x5c] sm:$0xf]
      %v3784 = vld [vmem:[%s11 + $0x60] sm:$0xf]
      %v3785 = vld [vmem:[%s11 + $0x64] sm:$0xf]
      %v3786 = vld [vmem:[%s11 + $0x68] sm:$0xf]
      %v3787 = vld [vmem:[%s11 + $0x6c] sm:$0xf]
      %v3788 = vld [vmem:[%s11 + $0x70] sm:$0xf]
      %v3789 = vld [vmem:[%s11 + $0x74] sm:$0xf]
      %v3790 = vld [vmem:[%s11 + $0x78] sm:$0xf]
      %v3791 = vld [vmem:[%s11 + $0x7c] sm:$0xf]
      %v3792 = vld [vmem:[%s11 + $0x80] sm:$0xf]
      %v3793 = vld [vmem:[%s11 + $0x84] sm:$0xf]
      %v3794 = vld [vmem:[%s11 + $0x88] sm:$0xf]
      %v3795 = vld [vmem:[%s11 + $0x8c] sm:$0xf]
      %v3796 = vld [vmem:[%s11 + $0x90] sm:$0xf]
      %v3797 = vld [vmem:[%s11 + $0x94] sm:$0xf]
      %v3798 = vld [vmem:[%s11 + $0x98] sm:$0xf]
      %v3799 = vld [vmem:[%s11 + $0x9c] sm:$0xf]
      %v3800 = vld [vmem:[%s11 + $0xa0] sm:$0xf]
      %v3801 = vld [vmem:[%s11 + $0xa4] sm:$0xf]
      %v3802 = vld [vmem:[%s11 + $0xa8] sm:$0xf]
      %v3803 = vld [vmem:[%s11 + $0xac] sm:$0xf]
      %v3804 = vld [vmem:[%s11 + $0xb0] sm:$0xf]
      %v3805 = vld [vmem:[%s11 + $0xb4] sm:$0xf]
      %v3806 = vld [vmem:[%s11 + $0xb8] sm:$0xf]
      %v3807 = vld [vmem:[%s11 + $0xbc] sm:$0xf]
      %v3808 = vld [vmem:[%s11 + $0xc0] sm:$0xf]
      %v3809 = vld [vmem:[%s11 + $0xc4] sm:$0xf]
      %v3810 = vld [vmem:[%s11 + $0xc8] sm:$0xf]
      %v3811 = vld [vmem:[%s11 + $0xcc] sm:$0xf]
      %v3812 = vld [vmem:[%s11 + $0xd0] sm:$0xf]
      %v3813 = vld [vmem:[%s11 + $0xd4] sm:$0xf]
      %v3814 = vld [vmem:[%s11 + $0xd8] sm:$0xf]
      %v3815 = vld [vmem:[%s11 + $0xdc] sm:$0xf]
      %v3816 = vld [vmem:[%s11 + $0xe0] sm:$0xf]
      %v3817 = vld [vmem:[%s11 + $0xe4] sm:$0xf]
      %v3818 = vld [vmem:[%s11 + $0xe8] sm:$0xf]
      %v3819 = vld [vmem:[%s11 + $0xec] sm:$0xf]
      %v3820 = vld [vmem:[%s11 + $0xf0] sm:$0xf]
      %v3821 = vld [vmem:[%s11 + $0xf4] sm:$0xf]
      %v3822 = vld [vmem:[%s11 + $0xf8] sm:$0xf]
      %v3823 = vld [vmem:[%s11 + $0xfc] sm:$0xf]
      %v3824 = vld [vmem:[%s12] sm:$0x1]
      %v3889 = vunpack.c.l.b16 %v3760
      %v3890 = vunpack.c.l.b16 %v3761
      %v3891 = vunpack.c.l.b16 %v3762
      %v3892 = vunpack.c.l.b16 %v3763
      %v3893 = vunpack.c.l.b16 %v3764
      %v3894 = vunpack.c.l.b16 %v3765
      %v3895 = vunpack.c.l.b16 %v3766
      %v3896 = vunpack.c.l.b16 %v3767
      %v3897 = vunpack.c.l.b16 %v3768
      %v3898 = vunpack.c.l.b16 %v3769
      %v3899 = vunpack.c.l.b16 %v3770
      %v3900 = vunpack.c.l.b16 %v3771
      %v3901 = vunpack.c.l.b16 %v3772
      %v3902 = vunpack.c.l.b16 %v3773
      %v3903 = vunpack.c.l.b16 %v3774
      %v3904 = vunpack.c.l.b16 %v3775
      %v3905 = vunpack.c.l.b16 %v3776
      %v3906 = vunpack.c.l.b16 %v3777
      %v3907 = vunpack.c.l.b16 %v3778
      %v3908 = vunpack.c.l.b16 %v3779
      %v3909 = vunpack.c.l.b16 %v3780
      %v3910 = vunpack.c.l.b16 %v3781
      %v3911 = vunpack.c.l.b16 %v3782
      %v3912 = vunpack.c.l.b16 %v3783
      %v3913 = vunpack.c.l.b16 %v3784
      %v3914 = vunpack.c.l.b16 %v3785
      %v3915 = vunpack.c.l.b16 %v3786
      %v3916 = vunpack.c.l.b16 %v3787
      %v3917 = vunpack.c.l.b16 %v3788
      %v3918 = vunpack.c.l.b16 %v3789
      %v3919 = vunpack.c.l.b16 %v3790
      %v3920 = vunpack.c.l.b16 %v3791
      %v3921 = vunpack.c.l.b16 %v3792
      %v3922 = vunpack.c.l.b16 %v3793
      %v3923 = vunpack.c.l.b16 %v3794
      %v3924 = vunpack.c.l.b16 %v3795
      %v3925 = vunpack.c.l.b16 %v3796
      %v3926 = vunpack.c.l.b16 %v3797
      %v3927 = vunpack.c.l.b16 %v3798
      %v3928 = vunpack.c.l.b16 %v3799
      %v3929 = vunpack.c.l.b16 %v3800
      %v3930 = vunpack.c.l.b16 %v3801
      %v3931 = vunpack.c.l.b16 %v3802
      %v3932 = vunpack.c.l.b16 %v3803
      %v3933 = vunpack.c.l.b16 %v3804
      %v3934 = vunpack.c.l.b16 %v3805
      %v3935 = vunpack.c.l.b16 %v3806
      %v3936 = vunpack.c.l.b16 %v3807
      %v3937 = vunpack.c.l.b16 %v3808
      %v3938 = vunpack.c.l.b16 %v3809
      %v3939 = vunpack.c.l.b16 %v3810
      %v3940 = vunpack.c.l.b16 %v3811
      %v3941 = vunpack.c.l.b16 %v3812
      %v3942 = vunpack.c.l.b16 %v3813
      %v3943 = vunpack.c.l.b16 %v3814
      %v3944 = vunpack.c.l.b16 %v3815
      %v3945 = vunpack.c.l.b16 %v3816
      %v3946 = vunpack.c.l.b16 %v3817
      %v3947 = vunpack.c.l.b16 %v3818
      %v3948 = vunpack.c.l.b16 %v3819
      %v3949 = vunpack.c.l.b16 %v3820
      %v3950 = vunpack.c.l.b16 %v3821
      %v3951 = vunpack.c.l.b16 %v3822
      %v3952 = vunpack.c.l.b16 %v3823
      %v3953 = vpack.c.b16 %v3890, %v3889
      %v3954 = vpack.c.b16 %v3892, %v3891
      %v3955 = vpack.c.b16 %v3894, %v3893
      %v3956 = vpack.c.b16 %v3896, %v3895
      %v3957 = vpack.c.b16 %v3898, %v3897
      %v3958 = vpack.c.b16 %v3900, %v3899
      %v3959 = vpack.c.b16 %v3902, %v3901
      %v3960 = vpack.c.b16 %v3904, %v3903
      %v3961 = vpack.c.b16 %v3906, %v3905
      %v3962 = vpack.c.b16 %v3908, %v3907
      %v3963 = vpack.c.b16 %v3910, %v3909
      %v3964 = vpack.c.b16 %v3912, %v3911
      %v3965 = vpack.c.b16 %v3914, %v3913
      %v3966 = vpack.c.b16 %v3916, %v3915
      %v3967 = vpack.c.b16 %v3918, %v3917
      %v3968 = vpack.c.b16 %v3920, %v3919
      %v3969 = vpack.c.b16 %v3922, %v3921
      %v3970 = vpack.c.b16 %v3924, %v3923
      %v3971 = vpack.c.b16 %v3926, %v3925
      %v3972 = vpack.c.b16 %v3928, %v3927
      %v3973 = vpack.c.b16 %v3930, %v3929
      %v3974 = vpack.c.b16 %v3932, %v3931
      %v3975 = vpack.c.b16 %v3934, %v3933
      %v3976 = vpack.c.b16 %v3936, %v3935
      %v3977 = vpack.c.b16 %v3938, %v3937
      %v3978 = vpack.c.b16 %v3940, %v3939
      %v3979 = vpack.c.b16 %v3942, %v3941
      %v3980 = vpack.c.b16 %v3944, %v3943
      %v3981 = vpack.c.b16 %v3946, %v3945
      %v3982 = vpack.c.b16 %v3948, %v3947
      %v3983 = vpack.c.b16 %v3950, %v3949
      %v3984 = vpack.c.b16 %v3952, %v3951
      %4017 = vmatprep.subr.bf16.mxu0 0
      %4018 = vmatpush1.bf16.msra.mxu0 %v3953
      %4019 = vmatprep.subr.bf16.mxu0 0
      %4020 = vmatpush1.bf16.msra.mxu0 %v3954
      %4021 = vmatprep.subr.bf16.mxu0 0
      %4022 = vmatpush1.bf16.msra.mxu0 %v3955
      %4023 = vmatprep.subr.bf16.mxu0 0
      %4024 = vmatpush1.bf16.msra.mxu0 %v3956
      %4025 = vmatprep.subr.bf16.mxu0 0
      %4026 = vmatpush1.bf16.msra.mxu0 %v3957
      %4027 = vmatprep.subr.bf16.mxu0 0
      %4028 = vmatpush1.bf16.msra.mxu0 %v3958
      %4029 = vmatprep.subr.bf16.mxu0 0
      %4030 = vmatpush1.bf16.msra.mxu0 %v3959
      %4031 = vmatprep.subr.bf16.mxu0 0
      %4032 = vmatpush1.bf16.msra.mxu0 %v3960
      %4033 = vmatprep.subr.bf16.mxu0 0
      %4034 = vmatpush1.bf16.msra.mxu0 %v3961
      %4035 = vmatprep.subr.bf16.mxu0 0
      %4036 = vmatpush1.bf16.msra.mxu0 %v3962
      %4037 = vmatprep.subr.bf16.mxu0 0
      %4038 = vmatpush1.bf16.msra.mxu0 %v3963
      %4039 = vmatprep.subr.bf16.mxu0 0
      %4040 = vmatpush1.bf16.msra.mxu0 %v3964
      %4041 = vmatprep.subr.bf16.mxu0 0
      %4042 = vmatpush1.bf16.msra.mxu0 %v3965
      %4043 = vmatprep.subr.bf16.mxu0 0
      %4044 = vmatpush1.bf16.msra.mxu0 %v3966
      %4045 = vmatprep.subr.bf16.mxu0 0
      %4046 = vmatpush1.bf16.msra.mxu0 %v3967
      %4047 = vmatprep.subr.bf16.mxu0 0
      %4048 = vmatpush1.bf16.msra.mxu0 %v3968
      %4049 = vmatprep.mubr.bf16.mxu0 %v3757
      %4050 = vmatmul.mubr.bf16.gmra.mrb[0].mxu0 %v3756
      %v4051 = vpop.f32.mrb[0].mxu0
      %v4052 = vadd.f32 %v3824, %v4051
      %v4053 = vpop.f32.mrb[0].mxu0
      %v4054 = vpop.f32.mrb[0].mxu0
      %v4055 = vpop.f32.mrb[0].mxu0
      %4056 = vdwg.mxu0
      %4057 = vmatprep.subr.bf16.mxu0 0
      %4058 = vmatpush1.bf16.msra.mxu0 %v3969
      %4059 = vmatprep.subr.bf16.mxu0 0
      %4060 = vmatpush1.bf16.msra.mxu0 %v3970
      %4061 = vmatprep.subr.bf16.mxu0 0
      %4062 = vmatpush1.bf16.msra.mxu0 %v3971
      %4063 = vmatprep.subr.bf16.mxu0 0
      %4064 = vmatpush1.bf16.msra.mxu0 %v3972
      %4065 = vmatprep.subr.bf16.mxu0 0
      %4066 = vmatpush1.bf16.msra.mxu0 %v3973
      %4067 = vmatprep.subr.bf16.mxu0 0
      %4068 = vmatpush1.bf16.msra.mxu0 %v3974
      %4069 = vmatprep.subr.bf16.mxu0 0
      %4070 = vmatpush1.bf16.msra.mxu0 %v3975
      %4071 = vmatprep.subr.bf16.mxu0 0
      %4072 = vmatpush1.bf16.msra.mxu0 %v3976
      %4073 = vmatprep.subr.bf16.mxu0 0
      %4074 = vmatpush1.bf16.msra.mxu0 %v3977
      %4075 = vmatprep.subr.bf16.mxu0 0
      %4076 = vmatpush1.bf16.msra.mxu0 %v3978
      %4077 = vmatprep.subr.bf16.mxu0 0
      %4078 = vmatpush1.bf16.msra.mxu0 %v3979
      %4079 = vmatprep.subr.bf16.mxu0 0
      %4080 = vmatpush1.bf16.msra.mxu0 %v3980
      %4081 = vmatprep.subr.bf16.mxu0 0
      %4082 = vmatpush1.bf16.msra.mxu0 %v3981
      %4083 = vmatprep.subr.bf16.mxu0 0
      %4084 = vmatpush1.bf16.msra.mxu0 %v3982
      %4085 = vmatprep.subr.bf16.mxu0 0
      %4086 = vmatpush1.bf16.msra.mxu0 %v3983
      %4087 = vmatprep.subr.bf16.mxu0 0
      %4088 = vmatpush1.bf16.msra.mxu0 %v3984
      %4089 = vmatprep.mubr.bf16.mxu0 %v3759
      %4090 = vmatmul.mubr.bf16.gmra.mrb[0].mxu0 %v3758
      %v4091 = vpop.f32.mrb[0].mxu0
      %v4092 = vadd.f32 %v4052, %v4091
      %v4093 = vpop.f32.mrb[0].mxu0
      %v4094 = vpop.f32.mrb[0].mxu0
      %v4095 = vpop.f32.mrb[0].mxu0
      %4096 = vdwg.mxu0
      %4097 = vst [vmem:[%s436] sm:$0x1] %v4092
      %p4098 = scmp.lt.s32.totalorder %s24, 1
      %s4099 = scalar_select %p4098, %s24, 1
      %s4100 = scalar_lea.vmem %s13, %s4099
      // Predicated region
      $region73: #{encoder_forward.1} parent=71 // pred_check
        %p4101 = pneg %p320
      $region74: #{encoder_forward.1} parent=71 // pred_check_branch
        %4103 = sbr.rel (%p4101) target = $region76
      $region75: #{encoder_forward.1} parent=71 // pred_region
        _
      $region76: #{encoder_forward.1} parent=71 // pred_fallthru
        _
    $region72: #{encoder_forward.1} parent=5 // pred_fallthru
      _
    %p4104 = scmp.le.s32.totalorder 2, %s19
    // Predicated region
    $region77: #{encoder_forward.1} parent=5 // pred_check
      %p4105 = pneg %p4104
    $region78: #{encoder_forward.1} parent=5 // pred_check_branch
      %4107 = sbr.rel (%p4105) target = $region80
    $region79: #{encoder_forward.1} parent=5 // pred_region
      %s4108 = ssub.s32 %s19, 2
      // Predicated region
      $region81: #{encoder_forward.1} parent=79 // pred_check
        %p4109 = pneg %p326
      $region82: #{encoder_forward.1} parent=79 // pred_check_branch
        %4111 = sbr.rel (%p4109) target = $region84
      $region83: #{encoder_forward.1} parent=79 // pred_region
        %p4112 = scmp.lt.s32.totalorder %s25, 1
        %s4113 = scalar_select %p4112, %s25, 1
        %s4114 = scalar_lea.vmem %s13, %s4113
      $region84: #{encoder_forward.1} parent=79 // pred_fallthru
        _
    $region80: #{encoder_forward.1} parent=5 // pred_fallthru
      _
  $region6: #{encoder_forward.1} parent=0 // loop_footer
    %s23 = sadd.s32 1, %s19
  $region7: #{encoder_forward.1} parent=0 // loop_footer_branch
    %18 = sbr.rel target = $region3
  $region8: #{encoder_forward.1} parent=0 // loop_exit
    _

</llo_original>
